<compile_context>
chip_gen: v6e
topology: v6e:2x2x1
jax: 0.10.0
libtpu: 0.0.40
codegen_flags: <defaults>
</compile_context>

<pallas_src>
import functools

import numpy as np
import jax
import jax.numpy as jnp
from jax.experimental import pallas as pl
from jax.experimental.pallas import tpu as pltpu

NEG_INF = -1e30
LANE = 128


def _round_up(x, m):
    return (x + m - 1) // m * m


def _tpu_generation():
    """Best-effort TPU generation from device_kind; 0 (conservative) if unknown."""
    try:
        kind = jax.devices()[0].device_kind.lower()
    except Exception:
        return 0
    for g in (7, 6, 5, 4, 3, 2):
        if (f"v{g}" in kind) or kind.startswith(f"tpu{g}") or (f"tpu {g}" in kind):
            return g
    return 0


def _is_modern_tpu():
    # v6e / v7x: 256-wide MXU, bf16 VPU+EUP.  v5e and older (or unknown): not.
    return _tpu_generation() >= 6


# ---------------------------------------------------------------------------
# Fused kernel: all GAT layers + add-pool + BatchNorm1d(eval) + Linear.
# ---------------------------------------------------------------------------
def _gat_encoder_kernel(
        bias_ref,     # [TILE_M, N_pad] bf16   additive edge mask row tile (0 / -1e30)
        x0_ref,       # [N_pad, H_pad]  bf16   padded input features (resident, read once)
        w_ref,        # [L, H_pad, H_pad] bf16 all layer weights (resident)
        a_src_ref,    # [L, 1, H_pad]   f32    per-layer source attention vector
        a_dst_ref,    # [L, 1, H_pad]   f32    per-layer target attention vector
        b_ref,        # [L, 1, H_pad]   f32    per-layer bias
        assign_ref,   # [G_pad, TILE_M] f32    one-hot graph assignment row tile
        bn_ref,       # [4, H_pad]      f32    gamma / beta / running_mean / running_var
        wfc_ref,      # [H_pad, LAT_pad] f32
        bfc_ref,      # [1, LAT_pad]    f32
        out_ref,      # [G_pad, LAT_pad] f32
        h_buf,        # VMEM [2, N_pad, H_pad] bf16  h = x @ W (cur / next layer)
        s_col,        # VMEM [N_pad, 1] f32    next layer per-source scores (column form)
        s_row,        # VMEM [1, N_pad] f32    current layer per-source scores (row form)
        pooled,       # VMEM [G_pad, H_pad] f32 add-pool accumulator
        *, sm_dtype):
    l = pl.program_id(0)
    m = pl.program_id(1)
    n_layers = pl.num_programs(0)
    m_tiles = pl.num_programs(1)
    tile_m = bias_ref.shape[0]
    cur = l % 2
    nxt = (l + 1) % 2
    f32 = jnp.float32

    # ---- once (first grid step): bootstrap h_0 = x0 @ W_0 and its scores ----
    @pl.when(jnp.logical_and(l == 0, m == 0))
    def _():
        h0 = jnp.dot(x0_ref[...], w_ref[0, :, :], preferred_element_type=f32)
        h0_16 = h0.astype(jnp.bfloat16)
        h_buf[0, :, :] = h0_16
        s0 = jnp.sum(h0_16.astype(f32) * a_src_ref[0, :, :],
                     axis=-1, keepdims=True)                       # [N_pad, 1]
        s_row[...] = jnp.transpose(s0)                             # [1, N_pad]
        pooled[...] = jnp.zeros_like(pooled)

    # ---- once per layer (l > 0): rotate fold-forward scores column -> row ---
    @pl.when(jnp.logical_and(m == 0, l > 0))
    def _():
        s_row[...] = jnp.transpose(s_col[...])

    # ---- row-tile attention: masked softmax + aggregation + bias + ELU ------
    row = pl.multiple_of(m * tile_m, tile_m)
    h_all16 = h_buf[cur, :, :]                                     # [N_pad, H_pad] bf16
    h_tile = h_buf[cur, pl.ds(row, tile_m), :].astype(f32)         # [tile_m, H_pad]
    dst = jnp.sum(h_tile * a_dst_ref[l, :, :], axis=-1, keepdims=True)
    e = (dst + s_row[...]).astype(sm_dtype)                        # [tile_m, N_pad]
    e = jnp.where(e >= 0, e, 0.2 * e)                              # LeakyReLU(0.2)
    e = e + bias_ref[...].astype(sm_dtype)                         # additive edge mask
    e = jnp.exp(e - jnp.max(e, axis=-1, keepdims=True))            # masked -> exactly 0
    inv = pl.reciprocal(jnp.sum(e.astype(f32), axis=-1, keepdims=True), approx=True)
    alpha16 = (e * inv).astype(jnp.bfloat16)                       # early bf16 cast
    agg = jnp.dot(alpha16, h_all16, preferred_element_type=f32)    # [tile_m, H_pad]
    y = agg + b_ref[l, :, :]
    y = jnp.where(y > 0, y, jnp.exp(jnp.minimum(y, 0.0)) - 1.0)    # ELU (no inf transient)

    # ---- fold forward: next layer's h rows and per-source scores ------------
    @pl.when(l < n_layers - 1)
    def _():
        y16 = y.astype(jnp.bfloat16)
        h_next = jnp.dot(y16, w_ref[l + 1, :, :], preferred_element_type=f32)
        h_next16 = h_next.astype(jnp.bfloat16)
        h_buf[nxt, pl.ds(row, tile_m), :] = h_next16
        s_next = jnp.sum(h_next16.astype(f32) * a_src_ref[l + 1, :, :],
                         axis=-1, keepdims=True)                   # [tile_m, 1]
        s_col[pl.ds(row, tile_m), :] = s_next

    # ---- last layer: accumulate global_add_pool; finalize with BN + FC ------
    @pl.when(l == n_layers - 1)
    def _():
        pooled[...] = pooled[...] + jnp.dot(assign_ref[...], y,
                                            preferred_element_type=f32)

    @pl.when(jnp.logical_and(l == n_layers - 1, m == m_tiles - 1))
    def _():
        bnv = bn_ref[...]
        inv_std = jax.lax.rsqrt(bnv[3:4, :] + 1e-5)
        z = (pooled[...] - bnv[2:3, :]) * inv_std * bnv[0:1, :] + bnv[1:2, :]
        out_ref[...] = (jnp.dot(z, wfc_ref[...], preferred_element_type=f32)
                        + bfc_ref[...]).astype(out_ref.dtype)


# ---------------------------------------------------------------------------
# Host wrapper: padding to lane-dense shapes, parameter staging, pallas_call.
# ---------------------------------------------------------------------------
def gat_encoder_forward(x, adj, assign, params):
    """x: [N, Fin] f32; adj[target, source]: 0/1 with self-loops;
    assign: [G, N] one-hot graph assignment. Returns [G, latent_dim]."""
    N, fin = x.shape
    G = assign.shape[0]
    n_layers = len(params["convs"])
    hidden = params["convs"][0][0].shape[1]
    latent = params["fc_w"].shape[1]

    gen = _tpu_generation()
    modern = gen >= 6
    tile_target = 256 if modern else 128        # full MXU fill per generation
    tile_m = max(LANE, min(tile_target, _round_up(N, LANE)))
    sm_dtype = jnp.bfloat16 if modern else jnp.float32

    H_pad = _round_up(max(hidden, fin), LANE)
    LAT_pad = _round_up(latent, LANE)
    N_pad = _round_up(N, tile_m)
    G_pad = _round_up(G, 8)
    m_tiles = N_pad // tile_m

    # Additive attention-bias mask in bf16 (0 on edges/self-loops, -1e30 off).
    # Padded nodes get a self-loop so their softmax rows stay well defined;
    # they are excluded from pooling by zero assign columns.
    bias = np.full((N_pad, N_pad), NEG_INF, np.float32)
    bias[:N, :N] = np.where(np.asarray(adj) > 0, 0.0, NEG_INF)
    pad_idx = np.arange(N, N_pad)
    bias[pad_idx, pad_idx] = 0.0
    bias = jnp.asarray(bias, jnp.bfloat16)

    x0 = np.zeros((N_pad, H_pad), np.float32)
    x0[:N, :fin] = np.asarray(x)
    x0 = jnp.asarray(x0, jnp.bfloat16)          # host pre-cast (MXU consumes bf16)

    assign_p = np.zeros((G_pad, N_pad), np.float32)
    assign_p[:G, :N] = np.asarray(assign)
    assign_p = jnp.asarray(assign_p)

    # Stacked, zero-padded per-layer parameters (padded channels stay exactly 0).
    w_stack = np.zeros((n_layers, H_pad, H_pad), np.float32)
    a_src_stack = np.zeros((n_layers, 1, H_pad), np.float32)
    a_dst_stack = np.zeros((n_layers, 1, H_pad), np.float32)
    b_stack = np.zeros((n_layers, 1, H_pad), np.float32)
    for li, (w, a_s, a_d, b) in enumerate(params["convs"]):
        f_in, f_out = w.shape
        w_stack[li, :f_in, :f_out] = np.asarray(w)
        a_src_stack[li, 0, :f_out] = np.asarray(a_s).reshape(-1)
        a_dst_stack[li, 0, :f_out] = np.asarray(a_d).reshape(-1)
        b_stack[li, 0, :f_out] = np.asarray(b).reshape(-1)
    w_stack = jnp.asarray(w_stack, jnp.bfloat16)  # host pre-cast
    a_src_stack = jnp.asarray(a_src_stack)
    a_dst_stack = jnp.asarray(a_dst_stack)
    b_stack = jnp.asarray(b_stack)

    bn = np.zeros((4, H_pad), np.float32)
    bn[3, :] = 1.0                               # padded running-var
    bn[0, :hidden] = np.asarray(params["bn_gamma"]).reshape(-1)
    bn[1, :hidden] = np.asarray(params["bn_beta"]).reshape(-1)
    bn[2, :hidden] = np.asarray(params["bn_rm"]).reshape(-1)
    bn[3, :hidden] = np.asarray(params["bn_rv"]).reshape(-1)
    bn = jnp.asarray(bn)

    wfc = np.zeros((H_pad, LAT_pad), np.float32)
    wfc[:hidden, :latent] = np.asarray(params["fc_w"])
    bfc = np.zeros((1, LAT_pad), np.float32)
    bfc[0, :latent] = np.asarray(params["fc_b"]).reshape(-1)
    wfc = jnp.asarray(wfc)
    bfc = jnp.asarray(bfc)

    resident2 = lambda l, m: (0, 0)
    resident3 = lambda l, m: (0, 0, 0)

    in_specs = [
        pl.BlockSpec((tile_m, N_pad), lambda l, m: (m, 0)),     # bias mask row tile
        pl.BlockSpec((N_pad, H_pad), resident2),                # x0 (read once at l=0,m=0)
        pl.BlockSpec((n_layers, H_pad, H_pad), resident3),      # W stack (resident)
        pl.BlockSpec((n_layers, 1, H_pad), resident3),          # a_src stack
        pl.BlockSpec((n_layers, 1, H_pad), resident3),          # a_dst stack
        pl.BlockSpec((n_layers, 1, H_pad), resident3),          # per-layer bias stack
        pl.BlockSpec((G_pad, tile_m), lambda l, m: (0, m)),     # assign row tile
        pl.BlockSpec((4, H_pad), resident2),                    # BN params
        pl.BlockSpec((H_pad, LAT_pad), resident2),              # fc weight
        pl.BlockSpec((1, LAT_pad), resident2),                  # fc bias
    ]
    scratch = [
        pltpu.VMEM((2, N_pad, H_pad), jnp.bfloat16),            # h ping-pong
        pltpu.VMEM((N_pad, 1), jnp.float32),                    # next-layer source scores
        pltpu.VMEM((1, N_pad), jnp.float32),                    # current-layer source scores
        pltpu.VMEM((G_pad, H_pad), jnp.float32),                # pooled accumulator
    ]

    # Explicit scoped-VMEM budget: resident blocks + double-buffered tiles + scratch.
    est = (2 * tile_m * N_pad * 2                               # bias tiles (x2 buffers)
           + 2 * N_pad * H_pad * 2                              # x0
           + 2 * n_layers * H_pad * H_pad * 2                   # W stack
           + 2 * 3 * n_layers * 8 * H_pad * 4                   # a_src/a_dst/b (sublane pad)
           + 2 * G_pad * tile_m * 4                             # assign tiles
           + 2 * (8 * H_pad + H_pad * LAT_pad + 8 * LAT_pad) * 4
           + 2 * G_pad * LAT_pad * 4                            # output block
           + 2 * N_pad * H_pad * 2                              # h_buf scratch
           + N_pad * LANE * 4 + 8 * N_pad * 4                   # s_col / s_row (padded)
           + G_pad * H_pad * 4)                                 # pooled
    vmem_cap = (48 << 20) if gen >= 7 else (96 << 20)           # v7x has 64 MiB physical
    vmem_limit = int(min(vmem_cap, max(32 << 20, est + (16 << 20))))

    kernel = functools.partial(_gat_encoder_kernel, sm_dtype=sm_dtype)
    out = pl.pallas_call(
        kernel,
        out_shape=jax.ShapeDtypeStruct((G_pad, LAT_pad), jnp.float32),
        grid=(n_layers, m_tiles),
        in_specs=in_specs,
        out_specs=pl.BlockSpec((G_pad, LAT_pad), resident2),
        scratch_shapes=scratch,
        compiler_params=pltpu.CompilerParams(
            dimension_semantics=("arbitrary", "arbitrary"),
            vmem_limit_bytes=vmem_limit),
    )(bias, x0, w_stack, a_src_stack, a_dst_stack, b_stack, assign_p,
      bn, wfc, bfc)
    return out[:G, :latent]


# ---------------------------------------------------------------------------
# Pure-JAX reference (mirrors the kernel's bf16 MXU casts and, on v6e/v7x,
# its bf16 softmax arithmetic) plus parameter init.
# ---------------------------------------------------------------------------
def reference_forward(x, adj, assign, params, sm_dtype=jnp.float32):
    mask = adj > 0
    xb = x.astype(jnp.bfloat16)
    y = None
    for (w, a_src, a_dst, b) in params["convs"]:
        h = jnp.dot(xb, w.astype(jnp.bfloat16), preferred_element_type=jnp.float32)
        h16 = h.astype(jnp.bfloat16)
        hf = h16.astype(jnp.float32)
        src = jnp.sum(hf * a_src, axis=-1, keepdims=True)
        dst = jnp.sum(hf * a_dst, axis=-1, keepdims=True)
        e = (dst + jnp.transpose(src)).astype(sm_dtype)
        e = jnp.where(e >= 0, e, 0.2 * e)
        e = jnp.where(mask, e, jnp.asarray(NEG_INF, sm_dtype))
        p = jnp.exp(e - jnp.max(e, axis=-1, keepdims=True))
        denom = jnp.sum(p.astype(jnp.float32), axis=-1, keepdims=True)
        alpha16 = (p / denom).astype(jnp.bfloat16)
        agg = jnp.dot(alpha16, h16, preferred_element_type=jnp.float32)
        y = agg + b
        y = jnp.where(y > 0, y, jnp.exp(jnp.minimum(y, 0.0)) - 1.0)
        xb = y.astype(jnp.bfloat16)
    pooled = jnp.dot(assign, y, preferred_element_type=jnp.float32)
    inv = jax.lax.rsqrt(params["bn_rv"] + 1e-5)
    z = (pooled - params["bn_rm"]) * inv * params["bn_gamma"] + params["bn_beta"]
    return jnp.dot(z, params["fc_w"], preferred_element_type=jnp.float32) + params["fc_b"]


def init_params(key, input_dim, hidden_dim, latent_dim, n_layers):
    convs = []
    dims = [input_dim] + [hidden_dim] * n_layers
    for l in range(n_layers):
        key, k1, k2, k3, k4 = jax.random.split(key, 5)
        f_in = dims[l]
        w = jax.random.normal(k1, (f_in, hidden_dim), jnp.float32) / np.sqrt(f_in)
        a_src = 0.1 * jax.random.normal(k2, (1, hidden_dim), jnp.float32)
        a_dst = 0.1 * jax.random.normal(k3, (1, hidden_dim), jnp.float32)
        b = 0.1 * jax.random.normal(k4, (1, hidden_dim), jnp.float32)
        convs.append((w, a_src, a_dst, b))
    key, k1, k2, k3, k4, k5, k6 = jax.random.split(key, 7)
    return dict(
        convs=convs,
        bn_gamma=1.0 + 0.1 * jax.random.normal(k1, (1, hidden_dim), jnp.float32),
        bn_beta=0.1 * jax.random.normal(k2, (1, hidden_dim), jnp.float32),
        bn_rm=0.1 * jax.random.normal(k3, (1, hidden_dim), jnp.float32),
        bn_rv=1.0 + 0.1 * jnp.abs(jax.random.normal(k4, (1, hidden_dim), jnp.float32)),
        fc_w=jax.random.normal(k5, (hidden_dim, latent_dim), jnp.float32) / np.sqrt(hidden_dim),
        fc_b=0.1 * jax.random.normal(k6, (1, latent_dim), jnp.float32),
    )


if __name__ == "__main__":
    input_dim, hidden_dim, latent_dim, n_layers = 8, 32, 16, 2
    G, nodes_per_graph = 2, 96
    N = G * nodes_per_graph

    # Dense adjacency adj[target, source] from an undirected ring per graph,
    # plus self-loops (PyG GATConv add_self_loops=True).
    adj_np = np.zeros((N, N), np.float32)
    for g in range(G):
        base = g * nodes_per_graph
        for i in range(nodes_per_graph):
            s = base + i
            t = base + (i + 1) % nodes_per_graph
            adj_np[t, s] = 1.0
            adj_np[s, t] = 1.0
    np.fill_diagonal(adj_np, 1.0)
    adj = jnp.asarray(adj_np)

    # One-hot graph assignment (data.batch densified): assign[g, n].
    assign_np = np.zeros((G, N), np.float32)
    for g in range(G):
        assign_np[g, g * nodes_per_graph:(g + 1) * nodes_per_graph] = 1.0
    assign = jnp.asarray(assign_np)

    key = jax.random.PRNGKey(0)
    key, kx, kp = jax.random.split(key, 3)
    x = jax.random.normal(kx, (N, input_dim), jnp.float32)
    params = init_params(kp, input_dim, hidden_dim, latent_dim, n_layers)

    out = gat_encoder_forward(x, adj, assign, params)
    out = jax.block_until_ready(out)

    sm_dtype = jnp.bfloat16 if _is_modern_tpu() else jnp.float32
    ref = jax.block_until_ready(reference_forward(x, adj, assign, params, sm_dtype=sm_dtype))

    assert out.shape == (G, latent_dim)
    assert bool(jnp.all(jnp.isfinite(out)))
    max_err = float(jnp.max(jnp.abs(out - ref)))
    scale = float(jnp.max(jnp.abs(ref))) + 1e-6
    assert max_err / scale < 4e-2, f"mismatch: max_err={max_err}, scale={scale}"
    print("KERNEL_OK")
</pallas_src>

<mosaic_0001>
module attributes {stable_mosaic.version = 11 : i64} {
  func.func @_gat_encoder_kernel(%arg0: i32, %arg1: i32, %arg2: memref<128x256xbf16, #tpu.memory_space<vmem>>, %arg3: memref<256x128xbf16, #tpu.memory_space<vmem>>, %arg4: memref<2x128x128xbf16, #tpu.memory_space<vmem>>, %arg5: memref<2x1x128xf32, #tpu.memory_space<vmem>>, %arg6: memref<2x1x128xf32, #tpu.memory_space<vmem>>, %arg7: memref<2x1x128xf32, #tpu.memory_space<vmem>>, %arg8: memref<8x128xf32, #tpu.memory_space<vmem>>, %arg9: memref<4x128xf32, #tpu.memory_space<vmem>>, %arg10: memref<128x128xf32, #tpu.memory_space<vmem>>, %arg11: memref<1x128xf32, #tpu.memory_space<vmem>>, %arg12: memref<8x128xf32, #tpu.memory_space<vmem>>, %arg13: memref<2x256x128xbf16, #tpu.memory_space<vmem>>, %arg14: memref<256x1xf32, #tpu.memory_space<vmem>>, %arg15: memref<1x256xf32, #tpu.memory_space<vmem>>, %arg16: memref<8x128xf32, #tpu.memory_space<vmem>>) attributes {dimension_semantics = [#tpu.dimension_semantics<arbitrary>, #tpu.dimension_semantics<arbitrary>], iteration_bounds = array<i64: 2, 2>, scalar_prefetch = 0 : i64, scratch_operands = 4 : i64, tpu.core_type = #tpu.core_type<tc>, window_params = [{transform_indices = @transform_0, window_bounds = array<i64: 128, 256>}, {pipeline_mode = #tpu.pipeline_mode<synchronous>, transform_indices = @transform_1, window_bounds = array<i64: 256, 128>}, {pipeline_mode = #tpu.pipeline_mode<synchronous>, transform_indices = @transform_2, window_bounds = array<i64: 2, 128, 128>}, {pipeline_mode = #tpu.pipeline_mode<synchronous>, transform_indices = @transform_3, window_bounds = array<i64: 2, 1, 128>}, {pipeline_mode = #tpu.pipeline_mode<synchronous>, transform_indices = @transform_4, window_bounds = array<i64: 2, 1, 128>}, {pipeline_mode = #tpu.pipeline_mode<synchronous>, transform_indices = @transform_5, window_bounds = array<i64: 2, 1, 128>}, {transform_indices = @transform_6, window_bounds = array<i64: 8, 128>}, {pipeline_mode = #tpu.pipeline_mode<synchronous>, transform_indices = @transform_7, window_bounds = array<i64: 4, 128>}, {pipeline_mode = #tpu.pipeline_mode<synchronous>, transform_indices = @transform_8, window_bounds = array<i64: 128, 128>}, {pipeline_mode = #tpu.pipeline_mode<synchronous>, transform_indices = @transform_9, window_bounds = array<i64: 1, 128>}, {pipeline_mode = #tpu.pipeline_mode<synchronous>, transform_indices = @transform_10, window_bounds = array<i64: 8, 128>}]} {
    %c2_i32 = arith.constant 2 : i32
    %c0_i32 = arith.constant 0 : i32
    %0 = arith.cmpi eq, %c2_i32, %c0_i32 : i32
    %c1_i32 = arith.constant 1 : i32
    %1 = arith.select %0, %c1_i32, %c2_i32 : i32
    %2 = arith.remsi %arg0, %1 : i32
    %c0_i32_0 = arith.constant 0 : i32
    %3 = arith.cmpi ne, %2, %c0_i32_0 : i32
    %c0_i32_1 = arith.constant 0 : i32
    %4 = arith.cmpi slt, %2, %c0_i32_1 : i32
    %c0_i32_2 = arith.constant 0 : i32
    %5 = arith.cmpi slt, %1, %c0_i32_2 : i32
    %6 = arith.xori %4, %5 : i1
    %7 = arith.andi %6, %3 : i1
    %8 = arith.addi %2, %1 : i32
    %9 = arith.select %7, %8, %2 : i32
    %c1_i32_3 = arith.constant 1 : i32
    %10 = arith.addi %arg0, %c1_i32_3 : i32
    %c2_i32_4 = arith.constant 2 : i32
    %c0_i32_5 = arith.constant 0 : i32
    %11 = arith.cmpi eq, %c2_i32_4, %c0_i32_5 : i32
    %c1_i32_6 = arith.constant 1 : i32
    %12 = arith.select %11, %c1_i32_6, %c2_i32_4 : i32
    %13 = arith.remsi %10, %12 : i32
    %c0_i32_7 = arith.constant 0 : i32
    %14 = arith.cmpi ne, %13, %c0_i32_7 : i32
    %c0_i32_8 = arith.constant 0 : i32
    %15 = arith.cmpi slt, %13, %c0_i32_8 : i32
    %c0_i32_9 = arith.constant 0 : i32
    %16 = arith.cmpi slt, %12, %c0_i32_9 : i32
    %17 = arith.xori %15, %16 : i1
    %18 = arith.andi %17, %14 : i1
    %19 = arith.addi %13, %12 : i32
    %20 = arith.select %18, %19, %13 : i32
    %c0_i32_10 = arith.constant 0 : i32
    %21 = arith.cmpi eq, %arg0, %c0_i32_10 : i32
    %c0_i32_11 = arith.constant 0 : i32
    %22 = arith.cmpi eq, %arg1, %c0_i32_11 : i32
    %23 = arith.andi %21, %22 : i1
    %24 = arith.extui %23 : i1 to i32
    %c0_i32_12 = arith.constant 0 : i32
    %25 = arith.cmpi ne, %24, %c0_i32_12 : i32
    scf.if %25 {
      %c0_41 = arith.constant 0 : index
      %c0_42 = arith.constant 0 : index
      %96 = vector.load %arg3[%c0_41, %c0_42] : memref<256x128xbf16, #tpu.memory_space<vmem>>, vector<256x128xbf16>
      %c0_43 = arith.constant 0 : index
      %c0_44 = arith.constant 0 : index
      %c0_45 = arith.constant 0 : index
      %97 = vector.load %arg4[%c0_43, %c0_44, %c0_45] : memref<2x128x128xbf16, #tpu.memory_space<vmem>>, vector<1x128x128xbf16>
      %98 = vector.shape_cast %97 : vector<1x128x128xbf16> to vector<128x128xbf16>
      %cst_46 = arith.constant dense<0.000000e+00> : vector<256x128xf32>
      %99 = tpu.matmul %96, %98, %cst_46 {dimension_numbers = #tpu.dot_dimension_numbers<[1], [0], [0], [1], [0, 0, 1, 1], [], []>} : vector<256x128xbf16>, vector<128x128xbf16>, vector<256x128xf32> -> vector<256x128xf32>
      %100 = arith.truncf %99 : vector<256x128xf32> to vector<256x128xbf16>
      %c0_47 = arith.constant 0 : index
      %c0_48 = arith.constant 0 : index
      %c0_49 = arith.constant 0 : index
      %101 = vector.load %arg13[%c0_47, %c0_48, %c0_49] : memref<2x256x128xbf16, #tpu.memory_space<vmem>>, vector<1x256x128xbf16>
      %102 = vector.shape_cast %101 : vector<1x256x128xbf16> to vector<256x128xbf16>
      %103 = vector.shape_cast %100 : vector<256x128xbf16> to vector<1x256x128xbf16>
      tpu.vector_store %arg13[%c0_47, %c0_48, %c0_49], %103 {strides = array<i32>} : memref<2x256x128xbf16, #tpu.memory_space<vmem>>, vector<1x256x128xbf16>,
      %104 = arith.extf %100 : vector<256x128xbf16> to vector<256x128xf32>
      %c0_50 = arith.constant 0 : index
      %c0_51 = arith.constant 0 : index
      %c0_52 = arith.constant 0 : index
      %105 = vector.load %arg5[%c0_50, %c0_51, %c0_52] : memref<2x1x128xf32, #tpu.memory_space<vmem>>, vector<1x1x128xf32>
      %106 = vector.shape_cast %105 : vector<1x1x128xf32> to vector<1x128xf32>
      %107 = vector.broadcast %106 : vector<1x128xf32> to vector<256x128xf32>
      %108 = arith.mulf %104, %107 : vector<256x128xf32>
      %cst_53 = arith.constant dense<0.000000e+00> : vector<256xf32>
      %109 = vector.multi_reduction <add>, %108, %cst_53 [1] : vector<256x128xf32> to vector<256xf32>
      %110 = vector.shape_cast %109 : vector<256xf32> to vector<256x1xf32>
      %111 = tpu.transpose %110, [1, 0] : vector<256x1xf32> -> vector<1x256xf32>
      %c0_54 = arith.constant 0 : index
      %c0_55 = arith.constant 0 : index
      %112 = vector.load %arg15[%c0_54, %c0_55] : memref<1x256xf32, #tpu.memory_space<vmem>>, vector<1x256xf32>
      tpu.vector_store %arg15[%c0_54, %c0_55], %111 {strides = array<i32>} : memref<1x256xf32, #tpu.memory_space<vmem>>, vector<1x256xf32>,
      %cst_56 = arith.constant 0.000000e+00 : f32
      %113 = vector.broadcast %cst_56 : f32 to vector<8x128xf32>
      %c0_57 = arith.constant 0 : index
      %c0_58 = arith.constant 0 : index
      %114 = vector.load %arg16[%c0_57, %c0_58] : memref<8x128xf32, #tpu.memory_space<vmem>>, vector<8x128xf32>
      tpu.vector_store %arg16[%c0_57, %c0_58], %113 {strides = array<i32>} : memref<8x128xf32, #tpu.memory_space<vmem>>, vector<8x128xf32>,
    } else {
    }
    %c0_i32_13 = arith.constant 0 : i32
    %26 = arith.cmpi eq, %arg1, %c0_i32_13 : i32
    %c0_i32_14 = arith.constant 0 : i32
    %27 = arith.cmpi sgt, %arg0, %c0_i32_14 : i32
    %28 = arith.andi %26, %27 : i1
    %29 = arith.extui %28 : i1 to i32
    %c0_i32_15 = arith.constant 0 : i32
    %30 = arith.cmpi ne, %29, %c0_i32_15 : i32
    scf.if %30 {
      %c0_41 = arith.constant 0 : index
      %c0_42 = arith.constant 0 : index
      %96 = vector.load %arg14[%c0_41, %c0_42] : memref<256x1xf32, #tpu.memory_space<vmem>>, vector<256x1xf32>
      %97 = tpu.transpose %96, [1, 0] : vector<256x1xf32> -> vector<1x256xf32>
      %c0_43 = arith.constant 0 : index
      %c0_44 = arith.constant 0 : index
      %98 = vector.load %arg15[%c0_43, %c0_44] : memref<1x256xf32, #tpu.memory_space<vmem>>, vector<1x256xf32>
      tpu.vector_store %arg15[%c0_43, %c0_44], %97 {strides = array<i32>} : memref<1x256xf32, #tpu.memory_space<vmem>>, vector<1x256xf32>,
    } else {
    }
    %c128_i32 = arith.constant 128 : i32
    %31 = arith.muli %arg1, %c128_i32 : i32
    %32 = tpu.assume_multiple %31, 128 : i32
    %33 = arith.index_cast %9 : i32 to index
    %c0 = arith.constant 0 : index
    %c0_16 = arith.constant 0 : index
    %34 = vector.load %arg13[%33, %c0, %c0_16] : memref<2x256x128xbf16, #tpu.memory_space<vmem>>, vector<1x256x128xbf16>
    %35 = vector.shape_cast %34 : vector<1x256x128xbf16> to vector<256x128xbf16>
    %36 = arith.index_cast %9 : i32 to index
    %37 = arith.index_cast %32 : i32 to index
    %c0_17 = arith.constant 0 : index
    %38 = vector.load %arg13[%36, %37, %c0_17] : memref<2x256x128xbf16, #tpu.memory_space<vmem>>, vector<1x128x128xbf16>
    %39 = vector.shape_cast %38 : vector<1x128x128xbf16> to vector<128x128xbf16>
    %40 = arith.extf %39 : vector<128x128xbf16> to vector<128x128xf32>
    %41 = arith.index_cast %arg0 : i32 to index
    %c0_18 = arith.constant 0 : index
    %c0_19 = arith.constant 0 : index
    %42 = vector.load %arg6[%41, %c0_18, %c0_19] : memref<2x1x128xf32, #tpu.memory_space<vmem>>, vector<1x1x128xf32>
    %43 = vector.shape_cast %42 : vector<1x1x128xf32> to vector<1x128xf32>
    %44 = vector.broadcast %43 : vector<1x128xf32> to vector<128x128xf32>
    %45 = arith.mulf %40, %44 : vector<128x128xf32>
    %cst = arith.constant dense<0.000000e+00> : vector<128xf32>
    %46 = vector.multi_reduction <add>, %45, %cst [1] : vector<128x128xf32> to vector<128xf32>
    %47 = vector.shape_cast %46 : vector<128xf32> to vector<128x1xf32>
    %c0_20 = arith.constant 0 : index
    %c0_21 = arith.constant 0 : index
    %48 = vector.load %arg15[%c0_20, %c0_21] : memref<1x256xf32, #tpu.memory_space<vmem>>, vector<1x256xf32>
    %49 = vector.broadcast %47 : vector<128x1xf32> to vector<128x256xf32>
    %50 = vector.broadcast %48 : vector<1x256xf32> to vector<128x256xf32>
    %51 = arith.addf %49, %50 : vector<128x256xf32>
    %cst_22 = arith.constant 0.000000e+00 : f32
    %52 = vector.broadcast %cst_22 : f32 to vector<128x256xf32>
    %53 = arith.cmpf oge, %51, %52 : vector<128x256xf32>
    %cst_23 = arith.constant 2.000000e-01 : f32
    %54 = vector.broadcast %cst_23 : f32 to vector<128x256xf32>
    %55 = arith.mulf %54, %51 : vector<128x256xf32>
    %56 = arith.select %53, %51, %55 : vector<128x256xi1>, vector<128x256xf32>
    %c0_24 = arith.constant 0 : index
    %c0_25 = arith.constant 0 : index
    %57 = vector.load %arg2[%c0_24, %c0_25] : memref<128x256xbf16, #tpu.memory_space<vmem>>, vector<128x256xbf16>
    %58 = arith.extf %57 : vector<128x256xbf16> to vector<128x256xf32>
    %59 = arith.addf %56, %58 : vector<128x256xf32>
    %cst_26 = arith.constant dense<0xFF800000> : vector<128xf32>
    %60 = vector.multi_reduction <maximumf>, %59, %cst_26 [1] : vector<128x256xf32> to vector<128xf32>
    %61 = vector.shape_cast %60 : vector<128xf32> to vector<128x1xf32>
    %62 = vector.broadcast %61 : vector<128x1xf32> to vector<128x256xf32>
    %63 = arith.subf %59, %62 : vector<128x256xf32>
    %64 = math.exp %63 : vector<128x256xf32>
    %cst_27 = arith.constant dense<0.000000e+00> : vector<128xf32>
    %65 = vector.multi_reduction <add>, %64, %cst_27 [1] : vector<128x256xf32> to vector<128xf32>
    %66 = vector.shape_cast %65 : vector<128xf32> to vector<128x1xf32>
    %67 = tpu.reciprocal %66 {approx = true} : vector<128x1xf32> -> vector<128x1xf32>
    %68 = vector.broadcast %67 : vector<128x1xf32> to vector<128x256xf32>
    %69 = arith.mulf %64, %68 : vector<128x256xf32>
    %70 = arith.truncf %69 : vector<128x256xf32> to vector<128x256xbf16>
    %cst_28 = arith.constant dense<0.000000e+00> : vector<128x128xf32>
    %71 = tpu.matmul %70, %35, %cst_28 {dimension_numbers = #tpu.dot_dimension_numbers<[1], [0], [0], [1], [0, 0, 1, 1], [], []>} : vector<128x256xbf16>, vector<256x128xbf16>, vector<128x128xf32> -> vector<128x128xf32>
    %72 = arith.index_cast %arg0 : i32 to index
    %c0_29 = arith.constant 0 : index
    %c0_30 = arith.constant 0 : index
    %73 = vector.load %arg7[%72, %c0_29, %c0_30] : memref<2x1x128xf32, #tpu.memory_space<vmem>>, vector<1x1x128xf32>
    %74 = vector.shape_cast %73 : vector<1x1x128xf32> to vector<1x128xf32>
    %75 = vector.broadcast %74 : vector<1x128xf32> to vector<128x128xf32>
    %76 = arith.addf %71, %75 : vector<128x128xf32>
    %cst_31 = arith.constant 0.000000e+00 : f32
    %77 = vector.broadcast %cst_31 : f32 to vector<128x128xf32>
    %78 = arith.cmpf ogt, %76, %77 : vector<128x128xf32>
    %cst_32 = arith.constant 0.000000e+00 : f32
    %79 = vector.broadcast %cst_32 : f32 to vector<128x128xf32>
    %80 = arith.minimumf %76, %79 : vector<128x128xf32>
    %81 = math.exp %80 : vector<128x128xf32>
    %cst_33 = arith.constant 1.000000e+00 : f32
    %82 = vector.broadcast %cst_33 : f32 to vector<128x128xf32>
    %83 = arith.subf %81, %82 : vector<128x128xf32>
    %84 = arith.select %78, %76, %83 : vector<128x128xi1>, vector<128x128xf32>
    %c1_i32_34 = arith.constant 1 : i32
    %85 = arith.cmpi slt, %arg0, %c1_i32_34 : i32
    %86 = arith.extui %85 : i1 to i32
    %c0_i32_35 = arith.constant 0 : i32
    %87 = arith.cmpi ne, %86, %c0_i32_35 : i32
    scf.if %87 {
      %96 = arith.truncf %84 : vector<128x128xf32> to vector<128x128xbf16>
      %c1_i32_41 = arith.constant 1 : i32
      %97 = arith.addi %arg0, %c1_i32_41 : i32
      %98 = arith.index_cast %97 : i32 to index
      %c0_42 = arith.constant 0 : index
      %c0_43 = arith.constant 0 : index
      %99 = vector.load %arg4[%98, %c0_42, %c0_43] : memref<2x128x128xbf16, #tpu.memory_space<vmem>>, vector<1x128x128xbf16>
      %100 = vector.shape_cast %99 : vector<1x128x128xbf16> to vector<128x128xbf16>
      %cst_44 = arith.constant dense<0.000000e+00> : vector<128x128xf32>
      %101 = tpu.matmul %96, %100, %cst_44 {dimension_numbers = #tpu.dot_dimension_numbers<[1], [0], [0], [1], [0, 0, 1, 1], [], []>} : vector<128x128xbf16>, vector<128x128xbf16>, vector<128x128xf32> -> vector<128x128xf32>
      %102 = arith.truncf %101 : vector<128x128xf32> to vector<128x128xbf16>
      %103 = arith.index_cast %20 : i32 to index
      %104 = arith.index_cast %32 : i32 to index
      %c0_45 = arith.constant 0 : index
      %105 = vector.load %arg13[%103, %104, %c0_45] : memref<2x256x128xbf16, #tpu.memory_space<vmem>>, vector<1x128x128xbf16>
      %106 = vector.shape_cast %105 : vector<1x128x128xbf16> to vector<128x128xbf16>
      %107 = vector.shape_cast %102 : vector<128x128xbf16> to vector<1x128x128xbf16>
      tpu.vector_store %arg13[%103, %104, %c0_45], %107 {strides = array<i32>} : memref<2x256x128xbf16, #tpu.memory_space<vmem>>, vector<1x128x128xbf16>,
      %108 = arith.extf %102 : vector<128x128xbf16> to vector<128x128xf32>
      %c1_i32_46 = arith.constant 1 : i32
      %109 = arith.addi %arg0, %c1_i32_46 : i32
      %110 = arith.index_cast %109 : i32 to index
      %c0_47 = arith.constant 0 : index
      %c0_48 = arith.constant 0 : index
      %111 = vector.load %arg5[%110, %c0_47, %c0_48] : memref<2x1x128xf32, #tpu.memory_space<vmem>>, vector<1x1x128xf32>
      %112 = vector.shape_cast %111 : vector<1x1x128xf32> to vector<1x128xf32>
      %113 = vector.broadcast %112 : vector<1x128xf32> to vector<128x128xf32>
      %114 = arith.mulf %108, %113 : vector<128x128xf32>
      %cst_49 = arith.constant dense<0.000000e+00> : vector<128xf32>
      %115 = vector.multi_reduction <add>, %114, %cst_49 [1] : vector<128x128xf32> to vector<128xf32>
      %116 = vector.shape_cast %115 : vector<128xf32> to vector<128x1xf32>
      %117 = arith.index_cast %32 : i32 to index
      %c0_50 = arith.constant 0 : index
      %118 = vector.load %arg14[%117, %c0_50] : memref<256x1xf32, #tpu.memory_space<vmem>>, vector<128x1xf32>
      tpu.vector_store %arg14[%117, %c0_50], %116 {strides = array<i32>} : memref<256x1xf32, #tpu.memory_space<vmem>>, vector<128x1xf32>,
    } else {
    }
    %c1_i32_36 = arith.constant 1 : i32
    %88 = arith.cmpi eq, %arg0, %c1_i32_36 : i32
    %89 = arith.extui %88 : i1 to i32
    %c0_i32_37 = arith.constant 0 : i32
    %90 = arith.cmpi ne, %89, %c0_i32_37 : i32
    scf.if %90 {
      %c0_41 = arith.constant 0 : index
      %c0_42 = arith.constant 0 : index
      %96 = vector.load %arg16[%c0_41, %c0_42] : memref<8x128xf32, #tpu.memory_space<vmem>>, vector<8x128xf32>
      %c0_43 = arith.constant 0 : index
      %c0_44 = arith.constant 0 : index
      %97 = vector.load %arg8[%c0_43, %c0_44] : memref<8x128xf32, #tpu.memory_space<vmem>>, vector<8x128xf32>
      %cst_45 = arith.constant dense<0.000000e+00> : vector<8x128xf32>
      %98 = tpu.matmul %97, %84, %cst_45 {dimension_numbers = #tpu.dot_dimension_numbers<[1], [0], [0], [1], [0, 0, 1, 1], [], []>} : vector<8x128xf32>, vector<128x128xf32>, vector<8x128xf32> -> vector<8x128xf32>
      %99 = arith.addf %96, %98 : vector<8x128xf32>
      %c0_46 = arith.constant 0 : index
      %c0_47 = arith.constant 0 : index
      %100 = vector.load %arg16[%c0_46, %c0_47] : memref<8x128xf32, #tpu.memory_space<vmem>>, vector<8x128xf32>
      tpu.vector_store %arg16[%c0_46, %c0_47], %99 {strides = array<i32>} : memref<8x128xf32, #tpu.memory_space<vmem>>, vector<8x128xf32>,
    } else {
    }
    %c1_i32_38 = arith.constant 1 : i32
    %91 = arith.cmpi eq, %arg0, %c1_i32_38 : i32
    %c1_i32_39 = arith.constant 1 : i32
    %92 = arith.cmpi eq, %arg1, %c1_i32_39 : i32
    %93 = arith.andi %91, %92 : i1
    %94 = arith.extui %93 : i1 to i32
    %c0_i32_40 = arith.constant 0 : i32
    %95 = arith.cmpi ne, %94, %c0_i32_40 : i32
    scf.if %95 {
      %c0_41 = arith.constant 0 : index
      %c0_42 = arith.constant 0 : index
      %96 = vector.load %arg9[%c0_41, %c0_42] : memref<4x128xf32, #tpu.memory_space<vmem>>, vector<4x128xf32>
      %97 = vector.extract_strided_slice %96 {offsets = [3, 0], sizes = [1, 128], strides = [1, 1]} : vector<4x128xf32> to vector<1x128xf32>
      %cst_43 = arith.constant 9.99999974E-6 : f32
      %98 = vector.broadcast %cst_43 : f32 to vector<1x128xf32>
      %99 = arith.addf %97, %98 : vector<1x128xf32>
      %100 = math.rsqrt %99 : vector<1x128xf32>
      %c0_44 = arith.constant 0 : index
      %c0_45 = arith.constant 0 : index
      %101 = vector.load %arg16[%c0_44, %c0_45] : memref<8x128xf32, #tpu.memory_space<vmem>>, vector<8x128xf32>
      %102 = vector.extract_strided_slice %96 {offsets = [2, 0], sizes = [1, 128], strides = [1, 1]} : vector<4x128xf32> to vector<1x128xf32>
      %103 = vector.broadcast %102 : vector<1x128xf32> to vector<8x128xf32>
      %104 = arith.subf %101, %103 : vector<8x128xf32>
      %105 = vector.broadcast %100 : vector<1x128xf32> to vector<8x128xf32>
      %106 = arith.mulf %104, %105 : vector<8x128xf32>
      %107 = vector.extract_strided_slice %96 {offsets = [0, 0], sizes = [1, 128], strides = [1, 1]} : vector<4x128xf32> to vector<1x128xf32>
      %108 = vector.broadcast %107 : vector<1x128xf32> to vector<8x128xf32>
      %109 = arith.mulf %106, %108 : vector<8x128xf32>
      %110 = vector.extract_strided_slice %96 {offsets = [1, 0], sizes = [1, 128], strides = [1, 1]} : vector<4x128xf32> to vector<1x128xf32>
      %111 = vector.broadcast %110 : vector<1x128xf32> to vector<8x128xf32>
      %112 = arith.addf %109, %111 : vector<8x128xf32>
      %c0_46 = arith.constant 0 : index
      %c0_47 = arith.constant 0 : index
      %113 = vector.load %arg10[%c0_46, %c0_47] : memref<128x128xf32, #tpu.memory_space<vmem>>, vector<128x128xf32>
      %cst_48 = arith.constant dense<0.000000e+00> : vector<8x128xf32>
      %114 = tpu.matmul %112, %113, %cst_48 {dimension_numbers = #tpu.dot_dimension_numbers<[1], [0], [0], [1], [0, 0, 1, 1], [], []>} : vector<8x128xf32>, vector<128x128xf32>, vector<8x128xf32> -> vector<8x128xf32>
      %c0_49 = arith.constant 0 : index
      %c0_50 = arith.constant 0 : index
      %115 = vector.load %arg11[%c0_49, %c0_50] : memref<1x128xf32, #tpu.memory_space<vmem>>, vector<1x128xf32>
      %116 = vector.broadcast %115 : vector<1x128xf32> to vector<8x128xf32>
      %117 = arith.addf %114, %116 : vector<8x128xf32>
      %c0_51 = arith.constant 0 : index
      %c0_52 = arith.constant 0 : index
      %118 = vector.load %arg12[%c0_51, %c0_52] : memref<8x128xf32, #tpu.memory_space<vmem>>, vector<8x128xf32>
      tpu.vector_store %arg12[%c0_51, %c0_52], %117 {strides = array<i32>} : memref<8x128xf32, #tpu.memory_space<vmem>>, vector<8x128xf32>,
    } else {
    }
    return
  }
  func.func @transform_0(%arg0: i32, %arg1: i32) -> (i32, i32) {
    %c0_i32 = arith.constant 0 : i32
    %c0_i32_0 = arith.constant 0 : i32
    return %arg1, %c0_i32 : i32, i32
  }
  func.func @transform_1(%arg0: i32, %arg1: i32) -> (i32, i32) {
    %c0_i32 = arith.constant 0 : i32
    %c0_i32_0 = arith.constant 0 : i32
    %c0_i32_1 = arith.constant 0 : i32
    return %c0_i32, %c0_i32_0 : i32, i32
  }
  func.func @transform_2(%arg0: i32, %arg1: i32) -> (i32, i32, i32) {
    %c0_i32 = arith.constant 0 : i32
    %c0_i32_0 = arith.constant 0 : i32
    %c0_i32_1 = arith.constant 0 : i32
    %c0_i32_2 = arith.constant 0 : i32
    return %c0_i32, %c0_i32_0, %c0_i32_1 : i32, i32, i32
  }
  func.func @transform_3(%arg0: i32, %arg1: i32) -> (i32, i32, i32) {
    %c0_i32 = arith.constant 0 : i32
    %c0_i32_0 = arith.constant 0 : i32
    %c0_i32_1 = arith.constant 0 : i32
    %c0_i32_2 = arith.constant 0 : i32
    return %c0_i32, %c0_i32_0, %c0_i32_1 : i32, i32, i32
  }
  func.func @transform_4(%arg0: i32, %arg1: i32) -> (i32, i32, i32) {
    %c0_i32 = arith.constant 0 : i32
    %c0_i32_0 = arith.constant 0 : i32
    %c0_i32_1 = arith.constant 0 : i32
    %c0_i32_2 = arith.constant 0 : i32
    return %c0_i32, %c0_i32_0, %c0_i32_1 : i32, i32, i32
  }
  func.func @transform_5(%arg0: i32, %arg1: i32) -> (i32, i32, i32) {
    %c0_i32 = arith.constant 0 : i32
    %c0_i32_0 = arith.constant 0 : i32
    %c0_i32_1 = arith.constant 0 : i32
    %c0_i32_2 = arith.constant 0 : i32
    return %c0_i32, %c0_i32_0, %c0_i32_1 : i32, i32, i32
  }
  func.func @transform_6(%arg0: i32, %arg1: i32) -> (i32, i32) {
    %c0_i32 = arith.constant 0 : i32
    %c0_i32_0 = arith.constant 0 : i32
    return %c0_i32, %arg1 : i32, i32
  }
  func.func @transform_7(%arg0: i32, %arg1: i32) -> (i32, i32) {
    %c0_i32 = arith.constant 0 : i32
    %c0_i32_0 = arith.constant 0 : i32
    %c0_i32_1 = arith.constant 0 : i32
    return %c0_i32, %c0_i32_0 : i32, i32
  }
  func.func @transform_8(%arg0: i32, %arg1: i32) -> (i32, i32) {
    %c0_i32 = arith.constant 0 : i32
    %c0_i32_0 = arith.constant 0 : i32
    %c0_i32_1 = arith.constant 0 : i32
    return %c0_i32, %c0_i32_0 : i32, i32
  }
  func.func @transform_9(%arg0: i32, %arg1: i32) -> (i32, i32) {
    %c0_i32 = arith.constant 0 : i32
    %c0_i32_0 = arith.constant 0 : i32
    %c0_i32_1 = arith.constant 0 : i32
    return %c0_i32, %c0_i32_0 : i32, i32
  }
  func.func @transform_10(%arg0: i32, %arg1: i32) -> (i32, i32) {
    %c0_i32 = arith.constant 0 : i32
    %c0_i32_0 = arith.constant 0 : i32
    %c0_i32_1 = arith.constant 0 : i32
    return %c0_i32, %c0_i32_0 : i32, i32
  }
}

</mosaic_0001>

<llo_original>
// kernel: tpu_custom_call.1
$region0: #{tpu_custom_call.1}
  #allocation0 [shape = 'u32[]', space=smem, size = 0x4, offset = 0x4, fixed_abs, tag = 'smem constant byte address 0x4 - core index']
  #allocation1 [shape = 'u32[144,128]{1,0:T(1,128)}', space=vmem, size = 0x12000, scoped, tag = 'internal scratch']
  #allocation2 [shape = 'bf16[2,256,128]{2,1,0:T(8,128)(2,1)}', space=vmem, size = 0x20000, scoped, tag = 'scratch operand']
  #allocation3 [shape = 'f32[256,1]{1,0:T(8,128)}', space=vmem, size = 0x20000, scoped, tag = 'scratch operand']
  #allocation4 [shape = 'f32[1,256]{1,0:T(1,128)}', space=vmem, size = 0x400, scoped, tag = 'scratch operand']
  #allocation5 [shape = 'f32[8,128]{1,0:T(8,128)}', space=vmem, size = 0x1000, scoped, tag = 'scratch operand']
  %s0 = inlined_call_operand.hbm [shape: bf16[256,256], index: 0, kind: input, shape index: {}]
  %s1 = inlined_call_operand.hbm [shape: bf16[256,128], index: 1, kind: input, shape index: {}]
  %s2 = inlined_call_operand.hbm [shape: bf16[2,128,128], index: 2, kind: input, shape index: {}]
  %s3 = inlined_call_operand.vmem [shape: f32[2,1,128], index: 3, kind: input, shape index: {}]
  %s4 = inlined_call_operand.hbm [shape: f32[2,1,128], index: 4, kind: input, shape index: {}]
  %s5 = inlined_call_operand.vmem [shape: f32[2,1,128], index: 5, kind: input, shape index: {}]
  %s6 = inlined_call_operand.hbm [shape: f32[8,256], index: 6, kind: input, shape index: {}]
  %s7 = inlined_call_operand.vmem [shape: f32[4,128], index: 7, kind: input, shape index: {}]
  %s8 = inlined_call_operand.hbm [shape: f32[128,128], index: 8, kind: input, shape index: {}]
  %s9 = inlined_call_operand.vmem [shape: f32[1,128], index: 9, kind: input, shape index: {}]
  %s10 = inlined_call_operand.hbm [shape: f32[8,128], index: 10, kind: output, shape index: {}]
  %s11 = sld [smem:[#allocation0]]
  $region117: #{tpu_custom_call.1} parent=0
    _
  %s13 = ssub.s32 1, %s11
  %s14 = scalar_select 0, %s13, %s11
  $region1: #{tpu_custom_call.1} parent=0
    #allocation6 [shape = 'u8[131072]{0}', space=vmem, size = 0x20000, scoped, tag = 'input window, operand 0']
    #allocation7 [shape = 's32[2]{0}', space=sflag, size = 0x8, scoped, tag = 'scoped memory for tpu_custom_call.1']
    #allocation8 [shape = 's32[2]{0}', space=sflag, size = 0x8, scoped, tag = 'scoped memory for tpu_custom_call.1']
    #allocation9 [shape = 'u8[65536]{0}', space=vmem, size = 0x10000, scoped, tag = 'input window, operand 1, single buffered']
    #allocation10 [shape = 's32[1]{0}', space=sflag, size = 0x4, scoped, tag = 'scoped memory for tpu_custom_call.1']
    #allocation11 [shape = 'u8[65536]{0}', space=vmem, size = 0x10000, scoped, tag = 'input window, operand 2, single buffered']
    #allocation12 [shape = 'u8[1024]{0}', space=vmem, size = 0x400, scoped, tag = 'input window, operand 4, single buffered']
    #allocation13 [shape = 's32[1]{0}', space=sflag, size = 0x4, scoped, tag = 'scoped memory for tpu_custom_call.1']
    #allocation14 [shape = 'u8[8192]{0}', space=vmem, size = 0x2000, scoped, tag = 'input window, operand 6']
    #allocation15 [shape = 'u8[65536]{0}', space=vmem, size = 0x10000, scoped, tag = 'input window, operand 8, single buffered']
    #allocation16 [shape = 'u8[4096]{0}', space=vmem, size = 0x1000, scoped, tag = 'output window, operand 0, single buffered']
    %15 = vsyncpa [#allocation7], 0
    %s16 = scalar_lea.sflag [#allocation7], 1
    %17 = vsyncpa %s16, 0
    %18 = vsyncpa [#allocation10], 0
    %19 = vsyncpa [#allocation13], 0
    %20 = vsyncpa [#allocation8], 0
    loop: start=0, step=1, limit=6
    $region2: #{tpu_custom_call.1} parent=1 // loop_pre_header
      _
    $region3: #{tpu_custom_call.1} parent=1 // loop_header
      %s22 = sphi 0, %s26
      %p23 = scmp.ge.s32.totalorder %s22, 6
      %s29 = sphi 0, %s41
      %s30 = sphi 0, %s37
      %s31 = sphi 0, %s29
      %s32 = sphi 0, %s30
      %s33 = sphi 0, %s31
      %s34 = sphi 0, %s32
      %s44 = sphi 0, %s46
      %s47 = sphi 0, %s44
      %s48 = sphi 0, %s47
      %s64 = sphi 0, %s48
      %s68 = sphi 0, %s68
      %s70 = sphi 0, %s68
      %s71 = sphi 0, %s70
      %s85 = sphi 0, %s71
      %s89 = sphi 0, %s89
      %s91 = sphi 0, %s89
      %s92 = sphi 0, %s91
      %s106 = sphi 0, %s92
      %s110 = sphi 0, %s110
      %s112 = sphi 0, %s110
      %s113 = sphi 0, %s112
      %s127 = sphi 0, %s113
      %s131 = sphi 0, %s131
      %s133 = sphi 0, %s131
      %s134 = sphi 0, %s133
      %s148 = sphi 0, %s134
      %s152 = sphi 0, %s152
      %s154 = sphi 0, %s152
      %s155 = sphi 0, %s154
      %s169 = sphi 0, %s155
      %s175 = sphi 0, %s177
      %s178 = sphi 0, %s175
      %s179 = sphi 0, %s178
      %s195 = sphi 0, %s179
      %s199 = sphi 0, %s199
      %s201 = sphi 0, %s199
      %s202 = sphi 0, %s201
      %s216 = sphi 0, %s202
      %s220 = sphi 0, %s220
      %s222 = sphi 0, %s220
      %s223 = sphi 0, %s222
      %s237 = sphi 0, %s223
      %s241 = sphi 0, %s241
      %s243 = sphi 0, %s241
      %s244 = sphi 0, %s243
      %s258 = sphi 0, %s244
      %s262 = sphi 0, %s262
      %s264 = sphi 0, %s262
      %s265 = sphi 0, %s264
      %s279 = sphi 0, %s265
    $region4: #{tpu_custom_call.1} parent=1 // loop_header_branch
      %25 = sbr.rel (%p23) target = $region8
    $region5: #{tpu_custom_call.1} parent=1 // loop_body
      %s27 = ssub.s32 %s22, 1
      %s28 = ssub.s32 %s22, 2
      %s35 = sadd.s32 1, %s30
      %p36 = scmp.ge.s32.totalorder %s35, 2
      %s37 = scalar_select %p36, 0, %s35
      %s38 = sadd.s32 1, %s29
      %s39 = scalar_select %p36, %s38, %s29
      %p40 = scmp.ge.s32.totalorder %s39, 2
      %s41 = scalar_select %p40, 0, %s39
      %s42 = ssub.s32 %s30, %s37
      %p43 = scmp.eq.s32.totalorder %s42, 0
      %s45 = sadd.s32 %s44, 1
      %s46 = scalar_select %p43, %s44, %s45
      %p49 = pneg %p43
      %p50 = scmp.eq.s32.totalorder %s22, 3
      %p51 = por %p49, %p50
      %p52 = scmp.ne.s32.totalorder %s44, %s47
      %p53 = scmp.eq.s32.totalorder %s22, 0
      %p54 = por %p52, %p53
      %p55 = scmp.ne.s32.totalorder %s44, %s47
      %p56 = scmp.eq.s32.totalorder %s27, 3
      %p57 = por %p55, %p56
      %p58 = scmp.ne.s32.totalorder %s47, %s48
      %p59 = scmp.eq.s32.totalorder %s27, 0
      %p60 = por %p58, %p59
      %p61 = scmp.ne.s32.totalorder %s47, %s48
      %p62 = scmp.eq.s32.totalorder %s28, 3
      %p63 = por %p61, %p62
      %p65 = scmp.ne.s32.totalorder %s48, %s64
      %p66 = scmp.eq.s32.totalorder %s28, 0
      %p67 = por %p65, %p66
      %s69 = sadd.s32 %s68, 1
      %p72 = scmp.eq.s32.totalorder %s22, 3
      %p73 = scmp.ne.s32.totalorder %s68, %s70
      %p74 = scmp.eq.s32.totalorder %s22, 0
      %p75 = por %p73, %p74
      %p76 = scmp.ne.s32.totalorder %s68, %s70
      %p77 = scmp.eq.s32.totalorder %s27, 3
      %p78 = por %p76, %p77
      %p79 = scmp.ne.s32.totalorder %s70, %s71
      %p80 = scmp.eq.s32.totalorder %s27, 0
      %p81 = por %p79, %p80
      %p82 = scmp.ne.s32.totalorder %s70, %s71
      %p83 = scmp.eq.s32.totalorder %s28, 3
      %p84 = por %p82, %p83
      %p86 = scmp.ne.s32.totalorder %s71, %s85
      %p87 = scmp.eq.s32.totalorder %s28, 0
      %p88 = por %p86, %p87
      %s90 = sadd.s32 %s89, 1
      %p93 = scmp.eq.s32.totalorder %s22, 3
      %p94 = scmp.ne.s32.totalorder %s89, %s91
      %p95 = scmp.eq.s32.totalorder %s22, 0
      %p96 = por %p94, %p95
      %p97 = scmp.ne.s32.totalorder %s89, %s91
      %p98 = scmp.eq.s32.totalorder %s27, 3
      %p99 = por %p97, %p98
      %p100 = scmp.ne.s32.totalorder %s91, %s92
      %p101 = scmp.eq.s32.totalorder %s27, 0
      %p102 = por %p100, %p101
      %p103 = scmp.ne.s32.totalorder %s91, %s92
      %p104 = scmp.eq.s32.totalorder %s28, 3
      %p105 = por %p103, %p104
      %p107 = scmp.ne.s32.totalorder %s92, %s106
      %p108 = scmp.eq.s32.totalorder %s28, 0
      %p109 = por %p107, %p108
      %s111 = sadd.s32 %s110, 1
      %p114 = scmp.eq.s32.totalorder %s22, 3
      %p115 = scmp.ne.s32.totalorder %s110, %s112
      %p116 = scmp.eq.s32.totalorder %s22, 0
      %p117 = por %p115, %p116
      %p118 = scmp.ne.s32.totalorder %s110, %s112
      %p119 = scmp.eq.s32.totalorder %s27, 3
      %p120 = por %p118, %p119
      %p121 = scmp.ne.s32.totalorder %s112, %s113
      %p122 = scmp.eq.s32.totalorder %s27, 0
      %p123 = por %p121, %p122
      %p124 = scmp.ne.s32.totalorder %s112, %s113
      %p125 = scmp.eq.s32.totalorder %s28, 3
      %p126 = por %p124, %p125
      %p128 = scmp.ne.s32.totalorder %s113, %s127
      %p129 = scmp.eq.s32.totalorder %s28, 0
      %p130 = por %p128, %p129
      %s132 = sadd.s32 %s131, 1
      %p135 = scmp.eq.s32.totalorder %s22, 3
      %p136 = scmp.ne.s32.totalorder %s131, %s133
      %p137 = scmp.eq.s32.totalorder %s22, 0
      %p138 = por %p136, %p137
      %p139 = scmp.ne.s32.totalorder %s131, %s133
      %p140 = scmp.eq.s32.totalorder %s27, 3
      %p141 = por %p139, %p140
      %p142 = scmp.ne.s32.totalorder %s133, %s134
      %p143 = scmp.eq.s32.totalorder %s27, 0
      %p144 = por %p142, %p143
      %p145 = scmp.ne.s32.totalorder %s133, %s134
      %p146 = scmp.eq.s32.totalorder %s28, 3
      %p147 = por %p145, %p146
      %p149 = scmp.ne.s32.totalorder %s134, %s148
      %p150 = scmp.eq.s32.totalorder %s28, 0
      %p151 = por %p149, %p150
      %s153 = sadd.s32 %s152, 1
      %p156 = scmp.eq.s32.totalorder %s22, 3
      %p157 = scmp.ne.s32.totalorder %s152, %s154
      %p158 = scmp.eq.s32.totalorder %s22, 0
      %p159 = por %p157, %p158
      %p160 = scmp.ne.s32.totalorder %s152, %s154
      %p161 = scmp.eq.s32.totalorder %s27, 3
      %p162 = por %p160, %p161
      %p163 = scmp.ne.s32.totalorder %s154, %s155
      %p164 = scmp.eq.s32.totalorder %s27, 0
      %p165 = por %p163, %p164
      %p166 = scmp.ne.s32.totalorder %s154, %s155
      %p167 = scmp.eq.s32.totalorder %s28, 3
      %p168 = por %p166, %p167
      %p170 = scmp.ne.s32.totalorder %s155, %s169
      %p171 = scmp.eq.s32.totalorder %s28, 0
      %p172 = por %p170, %p171
      %s173 = ssub.s32 %s30, %s37
      %p174 = scmp.eq.s32.totalorder %s173, 0
      %s176 = sadd.s32 %s175, 1
      %s177 = scalar_select %p174, %s175, %s176
      %p180 = pneg %p174
      %p181 = scmp.eq.s32.totalorder %s22, 3
      %p182 = por %p180, %p181
      %p183 = scmp.ne.s32.totalorder %s175, %s178
      %p184 = scmp.eq.s32.totalorder %s22, 0
      %p185 = por %p183, %p184
      %p186 = scmp.ne.s32.totalorder %s175, %s178
      %p187 = scmp.eq.s32.totalorder %s27, 3
      %p188 = por %p186, %p187
      %p189 = scmp.ne.s32.totalorder %s178, %s179
      %p190 = scmp.eq.s32.totalorder %s27, 0
      %p191 = por %p189, %p190
      %p192 = scmp.ne.s32.totalorder %s178, %s179
      %p193 = scmp.eq.s32.totalorder %s28, 3
      %p194 = por %p192, %p193
      %p196 = scmp.ne.s32.totalorder %s179, %s195
      %p197 = scmp.eq.s32.totalorder %s28, 0
      %p198 = por %p196, %p197
      %s200 = sadd.s32 %s199, 1
      %p203 = scmp.eq.s32.totalorder %s22, 3
      %p204 = scmp.ne.s32.totalorder %s199, %s201
      %p205 = scmp.eq.s32.totalorder %s22, 0
      %p206 = por %p204, %p205
      %p207 = scmp.ne.s32.totalorder %s199, %s201
      %p208 = scmp.eq.s32.totalorder %s27, 3
      %p209 = por %p207, %p208
      %p210 = scmp.ne.s32.totalorder %s201, %s202
      %p211 = scmp.eq.s32.totalorder %s27, 0
      %p212 = por %p210, %p211
      %p213 = scmp.ne.s32.totalorder %s201, %s202
      %p214 = scmp.eq.s32.totalorder %s28, 3
      %p215 = por %p213, %p214
      %p217 = scmp.ne.s32.totalorder %s202, %s216
      %p218 = scmp.eq.s32.totalorder %s28, 0
      %p219 = por %p217, %p218
      %s221 = sadd.s32 %s220, 1
      %p224 = scmp.eq.s32.totalorder %s22, 3
      %p225 = scmp.ne.s32.totalorder %s220, %s222
      %p226 = scmp.eq.s32.totalorder %s22, 0
      %p227 = por %p225, %p226
      %p228 = scmp.ne.s32.totalorder %s220, %s222
      %p229 = scmp.eq.s32.totalorder %s27, 3
      %p230 = por %p228, %p229
      %p231 = scmp.ne.s32.totalorder %s222, %s223
      %p232 = scmp.eq.s32.totalorder %s27, 0
      %p233 = por %p231, %p232
      %p234 = scmp.ne.s32.totalorder %s222, %s223
      %p235 = scmp.eq.s32.totalorder %s28, 3
      %p236 = por %p234, %p235
      %p238 = scmp.ne.s32.totalorder %s223, %s237
      %p239 = scmp.eq.s32.totalorder %s28, 0
      %p240 = por %p238, %p239
      %s242 = sadd.s32 %s241, 1
      %p245 = scmp.eq.s32.totalorder %s22, 3
      %p246 = scmp.ne.s32.totalorder %s241, %s243
      %p247 = scmp.eq.s32.totalorder %s22, 0
      %p248 = por %p246, %p247
      %p249 = scmp.ne.s32.totalorder %s241, %s243
      %p250 = scmp.eq.s32.totalorder %s27, 3
      %p251 = por %p249, %p250
      %p252 = scmp.ne.s32.totalorder %s243, %s244
      %p253 = scmp.eq.s32.totalorder %s27, 0
      %p254 = por %p252, %p253
      %p255 = scmp.ne.s32.totalorder %s243, %s244
      %p256 = scmp.eq.s32.totalorder %s28, 3
      %p257 = por %p255, %p256
      %p259 = scmp.ne.s32.totalorder %s244, %s258
      %p260 = scmp.eq.s32.totalorder %s28, 0
      %p261 = por %p259, %p260
      %s263 = sadd.s32 %s262, 1
      %p266 = scmp.eq.s32.totalorder %s22, 3
      %p267 = scmp.ne.s32.totalorder %s262, %s264
      %p268 = scmp.eq.s32.totalorder %s22, 0
      %p269 = por %p267, %p268
      %p270 = scmp.ne.s32.totalorder %s262, %s264
      %p271 = scmp.eq.s32.totalorder %s27, 3
      %p272 = por %p270, %p271
      %p273 = scmp.ne.s32.totalorder %s264, %s265
      %p274 = scmp.eq.s32.totalorder %s27, 0
      %p275 = por %p273, %p274
      %p276 = scmp.ne.s32.totalorder %s264, %s265
      %p277 = scmp.eq.s32.totalorder %s28, 3
      %p278 = por %p276, %p277
      %p280 = scmp.ne.s32.totalorder %s265, %s279
      %p281 = scmp.eq.s32.totalorder %s28, 0
      %p282 = por %p280, %p281
      %p283 = scmp.le.s32.totalorder 1, %s22
      %p284 = scmp.lt.s32.totalorder %s22, 5
      %p285 = pnand %p283, %p284
      %p286 = pneg %p285
      // Predicated region
      $region9: #{tpu_custom_call.1} parent=5 // pred_check
        _
      $region10: #{tpu_custom_call.1} parent=5 // pred_check_branch
        %288 = sbr.rel (%p285) target = $region12
      $region11: #{tpu_custom_call.1} parent=5 // pred_region
        %s289 = ssub.s32 %s22, 1
        // Predicated region
        $region13: #{tpu_custom_call.1} parent=11 // pred_check
          %p290 = pneg %p81
        $region14: #{tpu_custom_call.1} parent=11 // pred_check_branch
          %292 = sbr.rel (%p290) target = $region16
        $region15: #{tpu_custom_call.1} parent=11 // pred_region
          %s294 = ssub.s32 2048, 2048
          %295 = vsyncadd [#allocation10], %s294
          %s296 = sshll.u32 [#allocation9], 4
          %s297 = int_to_ptr.vmem [resolvable:$true] %s296
          %302 = dma.hbm_to_vmem [thread:$0]  %s1, 2048, %s297, [#allocation10], 64, 64, 4
        $region16: #{tpu_custom_call.1} parent=11 // pred_fallthru
          _
        // Predicated region
        $region17: #{tpu_custom_call.1} parent=11 // pred_check
          %p303 = pneg %p102
        $region18: #{tpu_custom_call.1} parent=11 // pred_check_branch
          %305 = sbr.rel (%p303) target = $region20
        $region19: #{tpu_custom_call.1} parent=11 // pred_region
          %s307 = ssub.s32 2048, 2048
          %308 = vsyncadd [#allocation10], %s307
          %s309 = sshll.u32 [#allocation11], 4
          %s310 = int_to_ptr.vmem [resolvable:$true] %s309
          %315 = dma.hbm_to_vmem [thread:$0]  %s2, 2048, %s310, [#allocation10], 64, 64, 4
        $region20: #{tpu_custom_call.1} parent=11 // pred_fallthru
          _
        // Predicated region
        $region21: #{tpu_custom_call.1} parent=11 // pred_check
          %p316 = pneg %p123
        $region22: #{tpu_custom_call.1} parent=11 // pred_check_branch
          %318 = sbr.rel (%p316) target = $region24
        $region23: #{tpu_custom_call.1} parent=11 // pred_region
          _
        $region24: #{tpu_custom_call.1} parent=11 // pred_fallthru
          _
        // Predicated region
        $region25: #{tpu_custom_call.1} parent=11 // pred_check
          %p319 = pneg %p144
        $region26: #{tpu_custom_call.1} parent=11 // pred_check_branch
          %321 = sbr.rel (%p319) target = $region28
        $region27: #{tpu_custom_call.1} parent=11 // pred_region
          %s323 = ssub.s32 32, 32
          %324 = vsyncadd [#allocation13], %s323
          %s325 = sshll.u32 [#allocation12], 4
          %s326 = int_to_ptr.vmem [resolvable:$true] %s325
          %331 = dma.hbm_to_vmem [thread:$0]  %s4, 32, %s326, [#allocation13], 16, 16, 1
        $region28: #{tpu_custom_call.1} parent=11 // pred_fallthru
          _
        // Predicated region
        $region29: #{tpu_custom_call.1} parent=11 // pred_check
          %p332 = pneg %p165
        $region30: #{tpu_custom_call.1} parent=11 // pred_check_branch
          %334 = sbr.rel (%p332) target = $region32
        $region31: #{tpu_custom_call.1} parent=11 // pred_region
          _
        $region32: #{tpu_custom_call.1} parent=11 // pred_fallthru
          _
        // Predicated region
        $region33: #{tpu_custom_call.1} parent=11 // pred_check
          %p335 = pneg %p212
        $region34: #{tpu_custom_call.1} parent=11 // pred_check_branch
          %337 = sbr.rel (%p335) target = $region36
        $region35: #{tpu_custom_call.1} parent=11 // pred_region
          _
        $region36: #{tpu_custom_call.1} parent=11 // pred_fallthru
          _
        // Predicated region
        $region37: #{tpu_custom_call.1} parent=11 // pred_check
          %p338 = pneg %p233
        $region38: #{tpu_custom_call.1} parent=11 // pred_check_branch
          %340 = sbr.rel (%p338) target = $region40
        $region39: #{tpu_custom_call.1} parent=11 // pred_region
          %s342 = ssub.s32 2048, 2048
          %343 = vsyncadd [#allocation10], %s342
          %s344 = sshll.u32 [#allocation15], 4
          %s345 = int_to_ptr.vmem [resolvable:$true] %s344
          %350 = dma.hbm_to_vmem [thread:$0]  %s8, 2048, %s345, [#allocation10], 128, 128, 8
        $region40: #{tpu_custom_call.1} parent=11 // pred_fallthru
          _
        // Predicated region
        $region41: #{tpu_custom_call.1} parent=11 // pred_check
          %p351 = pneg %p254
        $region42: #{tpu_custom_call.1} parent=11 // pred_check_branch
          %353 = sbr.rel (%p351) target = $region44
        $region43: #{tpu_custom_call.1} parent=11 // pred_region
          _
        $region44: #{tpu_custom_call.1} parent=11 // pred_fallthru
          _
      $region12: #{tpu_custom_call.1} parent=5 // pred_fallthru
        _
      %p354 = scmp.lt.s32.totalorder %s22, 4
      // Predicated region
      $region45: #{tpu_custom_call.1} parent=5 // pred_check
        %p355 = pneg %p354
      $region46: #{tpu_custom_call.1} parent=5 // pred_check_branch
        %357 = sbr.rel (%p355) target = $region48
      $region47: #{tpu_custom_call.1} parent=5 // pred_region
        // Predicated region
        $region49: #{tpu_custom_call.1} parent=47 // pred_check
          %p358 = pneg %p54
        $region50: #{tpu_custom_call.1} parent=47 // pred_check_branch
          %360 = sbr.rel (%p358) target = $region52
        $region51: #{tpu_custom_call.1} parent=47 // pred_region
          %s361 = sand.u32 %s22, 1
          %s362 = scalar_lea.sflag [#allocation7], %s361
          %s363 = sand.u32 %s44, 1
          %s364 = smul.addr %s363, 128
          %s365 = scalar_lea.vmem [#allocation6], %s364
          %s366 = smul.u32 16, %s30
          %s368 = ssub.s32 2048, 2048
          %369 = vsyncadd %s362, %s368
          %s370 = smul.addr %s366, 2
          %s371 = smul.addr %s370, 64
          %s372 = scalar_lea.hbm %s0, %s371
          %s373 = sshll.u32 %s365, 4
          %s374 = int_to_ptr.vmem [resolvable:$true] %s373
          %379 = dma.hbm_to_vmem [thread:$0]  %s372, 2048, %s374, %s362, 128, 128, 8
        $region52: #{tpu_custom_call.1} parent=47 // pred_fallthru
          _
        // Predicated region
        $region53: #{tpu_custom_call.1} parent=47 // pred_check
          %p380 = pneg %p185
        $region54: #{tpu_custom_call.1} parent=47 // pred_check_branch
          %382 = sbr.rel (%p380) target = $region56
        $region55: #{tpu_custom_call.1} parent=47 // pred_region
          %s383 = sand.u32 %s22, 1
          %s384 = scalar_lea.sflag [#allocation7], %s383
          %s385 = sand.u32 %s175, 1
          %s386 = smul.addr %s385, 8
          %s387 = scalar_lea.vmem [#allocation14], %s386
          %s389 = ssub.s32 128, 128
          %390 = vsyncadd %s384, %s389
          %s391 = smul.addr %s30, 128
          %s392 = scalar_lea.hbm %s6, %s391
          %s394 = sshll.u32 %s387, 4
          %s395 = int_to_ptr.vmem [resolvable:$true] %s394
          %397 = dma.hbm_to_vmem [thread:$0]  %s392, 128, %s395, %s384
        $region56: #{tpu_custom_call.1} parent=47 // pred_fallthru
          _
      $region48: #{tpu_custom_call.1} parent=5 // pred_fallthru
        _
      %p398 = scmp.le.s32.totalorder 1, %s22
      %p399 = scmp.lt.s32.totalorder %s22, 5
      %p400 = pnand %p398, %p399
      %p401 = pneg %p400
      // Predicated region
      $region57: #{tpu_custom_call.1} parent=5 // pred_check
        _
      $region58: #{tpu_custom_call.1} parent=5 // pred_check_branch
        %403 = sbr.rel (%p400) target = $region60
      $region59: #{tpu_custom_call.1} parent=5 // pred_region
        %s404 = ssub.s32 %s22, 1
        %s405 = sand.u32 %s27, 1
        %s406 = scalar_lea.sflag [#allocation7], %s405
        %s407 = sand.u32 %s47, 1
        %s408 = smul.addr %s407, 128
        %s409 = scalar_lea.vmem [#allocation6], %s408
        // Predicated region
        $region61: #{tpu_custom_call.1} parent=59 // pred_check
          %p410 = pneg %p60
        $region62: #{tpu_custom_call.1} parent=59 // pred_check_branch
          %412 = sbr.rel (%p410) target = $region64
        $region63: #{tpu_custom_call.1} parent=59 // pred_region
          %413 = dma.done %s406, 2048
        $region64: #{tpu_custom_call.1} parent=59 // pred_fallthru
          _
        // Predicated region
        $region65: #{tpu_custom_call.1} parent=59 // pred_check
          %p414 = pneg %p81
        $region66: #{tpu_custom_call.1} parent=59 // pred_check_branch
          %416 = sbr.rel (%p414) target = $region68
        $region67: #{tpu_custom_call.1} parent=59 // pred_region
          %417 = dma.done [#allocation10], 2048
        $region68: #{tpu_custom_call.1} parent=59 // pred_fallthru
          _
        // Predicated region
        $region69: #{tpu_custom_call.1} parent=59 // pred_check
          %p418 = pneg %p102
        $region70: #{tpu_custom_call.1} parent=59 // pred_check_branch
          %420 = sbr.rel (%p418) target = $region72
        $region71: #{tpu_custom_call.1} parent=59 // pred_region
          %421 = dma.done [#allocation10], 2048
        $region72: #{tpu_custom_call.1} parent=59 // pred_fallthru
          _
        // Predicated region
        $region73: #{tpu_custom_call.1} parent=59 // pred_check
          %p422 = pneg %p144
        $region74: #{tpu_custom_call.1} parent=59 // pred_check_branch
          %424 = sbr.rel (%p422) target = $region76
        $region75: #{tpu_custom_call.1} parent=59 // pred_region
          %425 = dma.done [#allocation13], 32
        $region76: #{tpu_custom_call.1} parent=59 // pred_fallthru
          _
        %s426 = sand.u32 %s27, 1
        %s427 = scalar_lea.sflag [#allocation7], %s426
        %s428 = sand.u32 %s178, 1
        %s429 = smul.addr %s428, 8
        %s430 = scalar_lea.vmem [#allocation14], %s429
        // Predicated region
        $region77: #{tpu_custom_call.1} parent=59 // pred_check
          %p431 = pneg %p191
        $region78: #{tpu_custom_call.1} parent=59 // pred_check_branch
          %433 = sbr.rel (%p431) target = $region80
        $region79: #{tpu_custom_call.1} parent=59 // pred_region
          %434 = dma.done %s427, 128
        $region80: #{tpu_custom_call.1} parent=59 // pred_fallthru
          _
        // Predicated region
        $region81: #{tpu_custom_call.1} parent=59 // pred_check
          %p435 = pneg %p233
        $region82: #{tpu_custom_call.1} parent=59 // pred_check_branch
          %437 = sbr.rel (%p435) target = $region84
        $region83: #{tpu_custom_call.1} parent=59 // pred_region
          %438 = dma.done [#allocation10], 2048
        $region84: #{tpu_custom_call.1} parent=59 // pred_fallthru
          _
        %s439 = sand.u32 %s27, 1
        %s440 = scalar_lea.sflag [#allocation7], %s439
        %s441 = sand.u32 %s47, 1
        %s442 = smul.addr %s441, 128
        %s443 = scalar_lea.vmem [#allocation6], %s442
        %p444 = pneg %p60
        %p445 = pneg %p57
        %p446 = pneg %p81
        %p447 = pneg %p78
        %p448 = pneg %p102
        %p449 = pneg %p99
        %p450 = pneg %p123
        %p451 = pneg %p120
        %p452 = pneg %p144
        %p453 = pneg %p141
        %p454 = pneg %p165
        %p455 = pneg %p162
        %s456 = sand.u32 %s27, 1
        %s457 = scalar_lea.sflag [#allocation7], %s456
        %s458 = sand.u32 %s178, 1
        %s459 = smul.addr %s458, 8
        %s460 = scalar_lea.vmem [#allocation14], %s459
        %p461 = pneg %p191
        %p462 = pneg %p188
        %p463 = pneg %p212
        %p464 = pneg %p209
        %p465 = pneg %p233
        %p466 = pneg %p230
        %p467 = pneg %p254
        %p468 = pneg %p251
        %p469 = pneg %p275
        %p470 = pneg %p272
        %s471 = smul.u32 16, %s32
        %p473 = scmp.lt.s32.totalorder %s31, 0
        %s474 = ssub.s32 0, %s31
        %s475 = scalar_select %p473, %s474, %s31
        %s476 = sand.u32 %s475, 1
        %s477 = ssub.s32 0, %s476
        %s478 = scalar_select %p473, %s477, %s476
        %p479 = scmp.ne.s32.totalorder %s478, 0
        %p480 = scmp.lt.s32.totalorder %s478, 0
        %p481 = pnand %p480, %p479
        %p482 = pneg %p481
        %s483 = sadd.s32 %s478, 2
        %s484 = scalar_select %p482, %s483, %s478
        %s485 = sadd.s32 %s31, 1
        %p486 = scmp.lt.s32.totalorder %s485, 0
        %s487 = ssub.s32 0, %s485
        %s488 = scalar_select %p486, %s487, %s485
        %s489 = sand.u32 %s488, 1
        %s490 = ssub.s32 0, %s489
        %s491 = scalar_select %p486, %s490, %s489
        %p492 = scmp.ne.s32.totalorder %s491, 0
        %p493 = scmp.lt.s32.totalorder %s491, 0
        %p494 = pnand %p493, %p492
        %p495 = pneg %p494
        %s496 = sadd.s32 %s491, 2
        %s497 = scalar_select %p495, %s496, %s491
        %p498 = scmp.eq.s32.totalorder %s31, 0
        %p499 = scmp.eq.s32.totalorder %s32, 0
        %p500 = pnand %p498, %p499
        %p501 = pneg %p500
        // Predicated region
        $region85: #{tpu_custom_call.1} parent=59 // pred_check
          _
        $region86: #{tpu_custom_call.1} parent=59 // pred_check_branch
          %503 = sbr.rel (%p500) target = $region88
        $region87: #{tpu_custom_call.1} parent=59 // pred_region
          %v504 = vld [vmem:[#allocation9] sm:$0xf]
          %v505 = vld [vmem:[#allocation9 + $0x4] sm:$0xf]
          %v506 = vld [vmem:[#allocation9 + $0x8] sm:$0xf]
          %v507 = vld [vmem:[#allocation9 + $0xc] sm:$0xf]
          %v508 = vld [vmem:[#allocation9 + $0x10] sm:$0xf]
          %v509 = vld [vmem:[#allocation9 + $0x14] sm:$0xf]
          %v510 = vld [vmem:[#allocation9 + $0x18] sm:$0xf]
          %v511 = vld [vmem:[#allocation9 + $0x1c] sm:$0xf]
          %v512 = vld [vmem:[#allocation9 + $0x20] sm:$0xf]
          %v513 = vld [vmem:[#allocation9 + $0x24] sm:$0xf]
          %v514 = vld [vmem:[#allocation9 + $0x28] sm:$0xf]
          %v515 = vld [vmem:[#allocation9 + $0x2c] sm:$0xf]
          %v516 = vld [vmem:[#allocation9 + $0x30] sm:$0xf]
          %v517 = vld [vmem:[#allocation9 + $0x34] sm:$0xf]
          %v518 = vld [vmem:[#allocation9 + $0x38] sm:$0xf]
          %v519 = vld [vmem:[#allocation9 + $0x3c] sm:$0xf]
          %v520 = vld [vmem:[#allocation9 + $0x40] sm:$0xf]
          %v521 = vld [vmem:[#allocation9 + $0x44] sm:$0xf]
          %v522 = vld [vmem:[#allocation9 + $0x48] sm:$0xf]
          %v523 = vld [vmem:[#allocation9 + $0x4c] sm:$0xf]
          %v524 = vld [vmem:[#allocation9 + $0x50] sm:$0xf]
          %v525 = vld [vmem:[#allocation9 + $0x54] sm:$0xf]
          %v526 = vld [vmem:[#allocation9 + $0x58] sm:$0xf]
          %v527 = vld [vmem:[#allocation9 + $0x5c] sm:$0xf]
          %v528 = vld [vmem:[#allocation9 + $0x60] sm:$0xf]
          %v529 = vld [vmem:[#allocation9 + $0x64] sm:$0xf]
          %v530 = vld [vmem:[#allocation9 + $0x68] sm:$0xf]
          %v531 = vld [vmem:[#allocation9 + $0x6c] sm:$0xf]
          %v532 = vld [vmem:[#allocation9 + $0x70] sm:$0xf]
          %v533 = vld [vmem:[#allocation9 + $0x74] sm:$0xf]
          %v534 = vld [vmem:[#allocation9 + $0x78] sm:$0xf]
          %v535 = vld [vmem:[#allocation9 + $0x7c] sm:$0xf]
          %v536 = vld [vmem:[#allocation11] sm:$0xf]
          %v537 = vld [vmem:[#allocation11 + $0x4] sm:$0xf]
          %v538 = vld [vmem:[#allocation11 + $0x8] sm:$0xf]
          %v539 = vld [vmem:[#allocation11 + $0xc] sm:$0xf]
          %v540 = vld [vmem:[#allocation11 + $0x10] sm:$0xf]
          %v541 = vld [vmem:[#allocation11 + $0x14] sm:$0xf]
          %v542 = vld [vmem:[#allocation11 + $0x18] sm:$0xf]
          %v543 = vld [vmem:[#allocation11 + $0x1c] sm:$0xf]
          %v544 = vld [vmem:[#allocation11 + $0x20] sm:$0xf]
          %v545 = vld [vmem:[#allocation11 + $0x24] sm:$0xf]
          %v546 = vld [vmem:[#allocation11 + $0x28] sm:$0xf]
          %v547 = vld [vmem:[#allocation11 + $0x2c] sm:$0xf]
          %v548 = vld [vmem:[#allocation11 + $0x30] sm:$0xf]
          %v549 = vld [vmem:[#allocation11 + $0x34] sm:$0xf]
          %v550 = vld [vmem:[#allocation11 + $0x38] sm:$0xf]
          %v551 = vld [vmem:[#allocation11 + $0x3c] sm:$0xf]
          %v584 = vunpack.c.l.b16 %v504
          %v585 = vunpack.c.l.b16 %v505
          %v586 = vunpack.c.l.b16 %v506
          %v587 = vunpack.c.l.b16 %v507
          %v588 = vunpack.c.l.b16 %v508
          %v589 = vunpack.c.l.b16 %v509
          %v590 = vunpack.c.l.b16 %v510
          %v591 = vunpack.c.l.b16 %v511
          %v592 = vunpack.c.l.b16 %v512
          %v593 = vunpack.c.l.b16 %v513
          %v594 = vunpack.c.l.b16 %v514
          %v595 = vunpack.c.l.b16 %v515
          %v596 = vunpack.c.l.b16 %v516
          %v597 = vunpack.c.l.b16 %v517
          %v598 = vunpack.c.l.b16 %v518
          %v599 = vunpack.c.l.b16 %v519
          %v600 = vunpack.c.l.b16 %v520
          %v601 = vunpack.c.l.b16 %v521
          %v602 = vunpack.c.l.b16 %v522
          %v603 = vunpack.c.l.b16 %v523
          %v604 = vunpack.c.l.b16 %v524
          %v605 = vunpack.c.l.b16 %v525
          %v606 = vunpack.c.l.b16 %v526
          %v607 = vunpack.c.l.b16 %v527
          %v608 = vunpack.c.l.b16 %v528
          %v609 = vunpack.c.l.b16 %v529
          %v610 = vunpack.c.l.b16 %v530
          %v611 = vunpack.c.l.b16 %v531
          %v612 = vunpack.c.l.b16 %v532
          %v613 = vunpack.c.l.b16 %v533
          %v614 = vunpack.c.l.b16 %v534
          %v615 = vunpack.c.l.b16 %v535
          %v616 = vpack.c.b16 %v585, %v584
          %v617 = vpack.c.b16 %v587, %v586
          %v618 = vpack.c.b16 %v589, %v588
          %v619 = vpack.c.b16 %v591, %v590
          %v620 = vpack.c.b16 %v593, %v592
          %v621 = vpack.c.b16 %v595, %v594
          %v622 = vpack.c.b16 %v597, %v596
          %v623 = vpack.c.b16 %v599, %v598
          %v624 = vpack.c.b16 %v601, %v600
          %v625 = vpack.c.b16 %v603, %v602
          %v626 = vpack.c.b16 %v605, %v604
          %v627 = vpack.c.b16 %v607, %v606
          %v628 = vpack.c.b16 %v609, %v608
          %v629 = vpack.c.b16 %v611, %v610
          %v630 = vpack.c.b16 %v613, %v612
          %v631 = vpack.c.b16 %v615, %v614
          %v664 = vunpack.c.l.b16 %v536
          %v665 = vunpack.c.l.b16 %v537
          %v666 = vunpack.c.l.b16 %v538
          %v667 = vunpack.c.l.b16 %v539
          %v668 = vunpack.c.l.b16 %v540
          %v669 = vunpack.c.l.b16 %v541
          %v670 = vunpack.c.l.b16 %v542
          %v671 = vunpack.c.l.b16 %v543
          %v672 = vunpack.c.l.b16 %v544
          %v673 = vunpack.c.l.b16 %v545
          %v674 = vunpack.c.l.b16 %v546
          %v675 = vunpack.c.l.b16 %v547
          %v676 = vunpack.c.l.b16 %v548
          %v677 = vunpack.c.l.b16 %v549
          %v678 = vunpack.c.l.b16 %v550
          %v679 = vunpack.c.l.b16 %v551
          %v680 = vpack.c.b16 %v665, %v664
          %v681 = vpack.c.b16 %v667, %v666
          %v682 = vpack.c.b16 %v669, %v668
          %v683 = vpack.c.b16 %v671, %v670
          %v684 = vpack.c.b16 %v673, %v672
          %v685 = vpack.c.b16 %v675, %v674
          %v686 = vpack.c.b16 %v677, %v676
          %v687 = vpack.c.b16 %v679, %v678
          %696 = vmatprep.subr.bf16.mxu0 0
          %697 = vmatpush1.bf16.msra.mxu0 %v687
          %698 = vmatprep.subr.bf16.mxu0 0
          %699 = vmatpush1.bf16.msra.mxu0 %v686
          %700 = vmatprep.subr.bf16.mxu0 0
          %701 = vmatpush1.bf16.msra.mxu0 %v685
          %702 = vmatprep.subr.bf16.mxu0 0
          %703 = vmatpush1.bf16.msra.mxu0 %v684
          %704 = vmatprep.subr.bf16.mxu0 0
          %705 = vmatpush1.bf16.msra.mxu0 %v683
          %706 = vmatprep.subr.bf16.mxu0 0
          %707 = vmatpush1.bf16.msra.mxu0 %v682
          %708 = vmatprep.subr.bf16.mxu0 0
          %709 = vmatpush1.bf16.msra.mxu0 %v681
          %710 = vmatprep.subr.bf16.mxu0 0
          %711 = vmatpush1.bf16.msra.mxu0 %v680
          %712 = vmatprep.subr.bf16.mxu0 0
          %713 = vmatpush2.bf16.msra.mxu0 0
          %714 = vmatprep.subr.bf16.mxu0 0
          %715 = vmatpush2.bf16.msra.mxu0 0
          %716 = vmatprep.subr.bf16.mxu0 0
          %717 = vmatpush2.bf16.msra.mxu0 0
          %718 = vmatprep.subr.bf16.mxu0 0
          %719 = vmatpush2.bf16.msra.mxu0 0
          %720 = vmatprep.subr.bf16.mxu0 0
          %721 = vmatpush2.bf16.msra.mxu0 0
          %722 = vmatprep.subr.bf16.mxu0 0
          %723 = vmatpush2.bf16.msra.mxu0 0
          %724 = vmatprep.subr.bf16.mxu0 0
          %725 = vmatpush2.bf16.msra.mxu0 0
          %726 = vmatprep.subr.bf16.mxu0 0
          %727 = vmatpush2.bf16.msra.mxu0 0
          %728 = vmatprep.mubr.bf16.mxu0 0
          %729 = vmatmul.mubr.bf16.gmra.mxu0 %v616
          %v730 = vpop.f32.mrf.mxu0
          %v731 = vadd.f32 0.0, %v730
          %v732 = vpop.f32.mrf.mxu0
          %v733 = vpop.f32.mrf.mxu0
          %v734 = vadd.f32 0.0, %v733
          %v735 = vpop.f32.mrf.mxu0
          %736 = vmatprep.mubr.bf16.mxu0 0
          %737 = vmatmul.mubr.bf16.gmra.mxu0 %v617
          %v738 = vpop.f32.mrf.mxu0
          %v739 = vadd.f32 0.0, %v738
          %v740 = vpop.f32.mrf.mxu0
          %v741 = vpop.f32.mrf.mxu0
          %v742 = vadd.f32 0.0, %v741
          %v743 = vpop.f32.mrf.mxu0
          %744 = vmatprep.mubr.bf16.mxu0 0
          %745 = vmatmul.mubr.bf16.gmra.mxu0 %v618
          %v746 = vpop.f32.mrf.mxu0
          %v747 = vadd.f32 0.0, %v746
          %v748 = vpop.f32.mrf.mxu0
          %v749 = vpop.f32.mrf.mxu0
          %v750 = vadd.f32 0.0, %v749
          %v751 = vpop.f32.mrf.mxu0
          %752 = vmatprep.mubr.bf16.mxu0 0
          %753 = vmatmul.mubr.bf16.gmra.mxu0 %v619
          %v754 = vpop.f32.mrf.mxu0
          %v755 = vadd.f32 0.0, %v754
          %v756 = vpop.f32.mrf.mxu0
          %v757 = vpop.f32.mrf.mxu0
          %v758 = vadd.f32 0.0, %v757
          %v759 = vpop.f32.mrf.mxu0
          %760 = vmatprep.mubr.bf16.mxu0 0
          %761 = vmatmul.mubr.bf16.gmra.mxu0 %v620
          %v762 = vpop.f32.mrf.mxu0
          %v763 = vadd.f32 0.0, %v762
          %v764 = vpop.f32.mrf.mxu0
          %v765 = vpop.f32.mrf.mxu0
          %v766 = vadd.f32 0.0, %v765
          %v767 = vpop.f32.mrf.mxu0
          %768 = vmatprep.mubr.bf16.mxu0 0
          %769 = vmatmul.mubr.bf16.gmra.mxu0 %v621
          %v770 = vpop.f32.mrf.mxu0
          %v771 = vadd.f32 0.0, %v770
          %v772 = vpop.f32.mrf.mxu0
          %v773 = vpop.f32.mrf.mxu0
          %v774 = vadd.f32 0.0, %v773
          %v775 = vpop.f32.mrf.mxu0
          %776 = vmatprep.mubr.bf16.mxu0 0
          %777 = vmatmul.mubr.bf16.gmra.mxu0 %v622
          %v778 = vpop.f32.mrf.mxu0
          %v779 = vadd.f32 0.0, %v778
          %v780 = vpop.f32.mrf.mxu0
          %v781 = vpop.f32.mrf.mxu0
          %v782 = vadd.f32 0.0, %v781
          %v783 = vpop.f32.mrf.mxu0
          %784 = vmatprep.mubr.bf16.mxu0 0
          %785 = vmatmul.mubr.bf16.gmra.mxu0 %v623
          %v786 = vpop.f32.mrf.mxu0
          %v787 = vadd.f32 0.0, %v786
          %v788 = vpop.f32.mrf.mxu0
          %v789 = vpop.f32.mrf.mxu0
          %v790 = vadd.f32 0.0, %v789
          %v791 = vpop.f32.mrf.mxu0
          %792 = vmatprep.mubr.bf16.mxu0 0
          %793 = vmatmul.mubr.bf16.gmra.mxu0 %v624
          %v794 = vpop.f32.mrf.mxu0
          %v795 = vadd.f32 0.0, %v794
          %v796 = vpop.f32.mrf.mxu0
          %v797 = vpop.f32.mrf.mxu0
          %v798 = vadd.f32 0.0, %v797
          %v799 = vpop.f32.mrf.mxu0
          %800 = vmatprep.mubr.bf16.mxu0 0
          %801 = vmatmul.mubr.bf16.gmra.mxu0 %v625
          %v802 = vpop.f32.mrf.mxu0
          %v803 = vadd.f32 0.0, %v802
          %v804 = vpop.f32.mrf.mxu0
          %v805 = vpop.f32.mrf.mxu0
          %v806 = vadd.f32 0.0, %v805
          %v807 = vpop.f32.mrf.mxu0
          %808 = vmatprep.mubr.bf16.mxu0 0
          %809 = vmatmul.mubr.bf16.gmra.mxu0 %v626
          %v810 = vpop.f32.mrf.mxu0
          %v811 = vadd.f32 0.0, %v810
          %v812 = vpop.f32.mrf.mxu0
          %v813 = vpop.f32.mrf.mxu0
          %v814 = vadd.f32 0.0, %v813
          %v815 = vpop.f32.mrf.mxu0
          %816 = vmatprep.mubr.bf16.mxu0 0
          %817 = vmatmul.mubr.bf16.gmra.mxu0 %v627
          %v818 = vpop.f32.mrf.mxu0
          %v819 = vadd.f32 0.0, %v818
          %v820 = vpop.f32.mrf.mxu0
          %v821 = vpop.f32.mrf.mxu0
          %v822 = vadd.f32 0.0, %v821
          %v823 = vpop.f32.mrf.mxu0
          %824 = vmatprep.mubr.bf16.mxu0 0
          %825 = vmatmul.mubr.bf16.gmra.mxu0 %v628
          %v826 = vpop.f32.mrf.mxu0
          %v827 = vadd.f32 0.0, %v826
          %v828 = vpop.f32.mrf.mxu0
          %v829 = vpop.f32.mrf.mxu0
          %v830 = vadd.f32 0.0, %v829
          %v831 = vpop.f32.mrf.mxu0
          %832 = vmatprep.mubr.bf16.mxu0 0
          %833 = vmatmul.mubr.bf16.gmra.mxu0 %v629
          %v834 = vpop.f32.mrf.mxu0
          %v835 = vadd.f32 0.0, %v834
          %v836 = vpop.f32.mrf.mxu0
          %v837 = vpop.f32.mrf.mxu0
          %v838 = vadd.f32 0.0, %v837
          %v839 = vpop.f32.mrf.mxu0
          %840 = vmatprep.mubr.bf16.mxu0 0
          %841 = vmatmul.mubr.bf16.gmra.mxu0 %v630
          %v842 = vpop.f32.mrf.mxu0
          %v843 = vadd.f32 0.0, %v842
          %v844 = vpop.f32.mrf.mxu0
          %v845 = vpop.f32.mrf.mxu0
          %v846 = vadd.f32 0.0, %v845
          %v847 = vpop.f32.mrf.mxu0
          %848 = vmatprep.mubr.bf16.mxu0 0
          %849 = vmatmul.mubr.bf16.gmra.mxu0 %v631
          %v850 = vpop.f32.mrf.mxu0
          %v851 = vadd.f32 0.0, %v850
          %v852 = vpop.f32.mrf.mxu0
          %v853 = vpop.f32.mrf.mxu0
          %v854 = vadd.f32 0.0, %v853
          %v855 = vpop.f32.mrf.mxu0
          %856 = vdwg.mxu0
          %v857 = vpack.c.bf16 %v734, %v731
          %v858 = vpack.c.bf16 %v742, %v739
          %v859 = vpack.c.bf16 %v750, %v747
          %v860 = vpack.c.bf16 %v758, %v755
          %v861 = vpack.c.bf16 %v766, %v763
          %v862 = vpack.c.bf16 %v774, %v771
          %v863 = vpack.c.bf16 %v782, %v779
          %v864 = vpack.c.bf16 %v790, %v787
          %v865 = vpack.c.bf16 %v798, %v795
          %v866 = vpack.c.bf16 %v806, %v803
          %v867 = vpack.c.bf16 %v814, %v811
          %v868 = vpack.c.bf16 %v822, %v819
          %v869 = vpack.c.bf16 %v830, %v827
          %v870 = vpack.c.bf16 %v838, %v835
          %v871 = vpack.c.bf16 %v846, %v843
          %v872 = vpack.c.bf16 %v854, %v851
          %v889 = vunpack.c.l.b16 %v857
          %v890 = vunpack.c.h.b16 %v857
          %v891 = vunpack.c.l.b16 %v858
          %v892 = vunpack.c.h.b16 %v858
          %v893 = vunpack.c.l.b16 %v859
          %v894 = vunpack.c.h.b16 %v859
          %v895 = vunpack.c.l.b16 %v860
          %v896 = vunpack.c.h.b16 %v860
          %v897 = vunpack.c.l.b16 %v861
          %v898 = vunpack.c.h.b16 %v861
          %v899 = vunpack.c.l.b16 %v862
          %v900 = vunpack.c.h.b16 %v862
          %v901 = vunpack.c.l.b16 %v863
          %v902 = vunpack.c.h.b16 %v863
          %v903 = vunpack.c.l.b16 %v864
          %v904 = vunpack.c.h.b16 %v864
          %v905 = vunpack.c.l.b16 %v865
          %v906 = vunpack.c.h.b16 %v865
          %v907 = vunpack.c.l.b16 %v866
          %v908 = vunpack.c.h.b16 %v866
          %v909 = vunpack.c.l.b16 %v867
          %v910 = vunpack.c.h.b16 %v867
          %v911 = vunpack.c.l.b16 %v868
          %v912 = vunpack.c.h.b16 %v868
          %v913 = vunpack.c.l.b16 %v869
          %v914 = vunpack.c.h.b16 %v869
          %v915 = vunpack.c.l.b16 %v870
          %v916 = vunpack.c.h.b16 %v870
          %v917 = vunpack.c.l.b16 %v871
          %v918 = vunpack.c.h.b16 %v871
          %v919 = vunpack.c.l.b16 %v872
          %v920 = vunpack.c.h.b16 %v872
          %v921 = vpack.c.b16 %v889, %v889
          %v922 = vpack.c.b16 %v890, %v890
          %v923 = vpack.c.b16 %v891, %v891
          %v924 = vpack.c.b16 %v892, %v892
          %v925 = vpack.c.b16 %v893, %v893
          %v926 = vpack.c.b16 %v894, %v894
          %v927 = vpack.c.b16 %v895, %v895
          %v928 = vpack.c.b16 %v896, %v896
          %v929 = vpack.c.b16 %v897, %v897
          %v930 = vpack.c.b16 %v898, %v898
          %v931 = vpack.c.b16 %v899, %v899
          %v932 = vpack.c.b16 %v900, %v900
          %v933 = vpack.c.b16 %v901, %v901
          %v934 = vpack.c.b16 %v902, %v902
          %v935 = vpack.c.b16 %v903, %v903
          %v936 = vpack.c.b16 %v904, %v904
          %v937 = vpack.c.b16 %v905, %v905
          %v938 = vpack.c.b16 %v906, %v906
          %v939 = vpack.c.b16 %v907, %v907
          %v940 = vpack.c.b16 %v908, %v908
          %v941 = vpack.c.b16 %v909, %v909
          %v942 = vpack.c.b16 %v910, %v910
          %v943 = vpack.c.b16 %v911, %v911
          %v944 = vpack.c.b16 %v912, %v912
          %v945 = vpack.c.b16 %v913, %v913
          %v946 = vpack.c.b16 %v914, %v914
          %v947 = vpack.c.b16 %v915, %v915
          %v948 = vpack.c.b16 %v916, %v916
          %v949 = vpack.c.b16 %v917, %v917
          %v950 = vpack.c.b16 %v918, %v918
          %v951 = vpack.c.b16 %v919, %v919
          %v952 = vpack.c.b16 %v920, %v920
          %985 = vst [vmem:[#allocation2] sm:$0xf] %v921
          %986 = vst [vmem:[#allocation2 + $0x4] sm:$0xf] %v922
          %987 = vst [vmem:[#allocation2 + $0x8] sm:$0xf] %v923
          %988 = vst [vmem:[#allocation2 + $0xc] sm:$0xf] %v924
          %989 = vst [vmem:[#allocation2 + $0x10] sm:$0xf] %v925
          %990 = vst [vmem:[#allocation2 + $0x14] sm:$0xf] %v926
          %991 = vst [vmem:[#allocation2 + $0x18] sm:$0xf] %v927
          %992 = vst [vmem:[#allocation2 + $0x1c] sm:$0xf] %v928
          %993 = vst [vmem:[#allocation2 + $0x20] sm:$0xf] %v929
          %994 = vst [vmem:[#allocation2 + $0x24] sm:$0xf] %v930
          %995 = vst [vmem:[#allocation2 + $0x28] sm:$0xf] %v931
          %996 = vst [vmem:[#allocation2 + $0x2c] sm:$0xf] %v932
          %997 = vst [vmem:[#allocation2 + $0x30] sm:$0xf] %v933
          %998 = vst [vmem:[#allocation2 + $0x34] sm:$0xf] %v934
          %999 = vst [vmem:[#allocation2 + $0x38] sm:$0xf] %v935
          %1000 = vst [vmem:[#allocation2 + $0x3c] sm:$0xf] %v936
          %1001 = vst [vmem:[#allocation2 + $0x40] sm:$0xf] %v937
          %1002 = vst [vmem:[#allocation2 + $0x44] sm:$0xf] %v938
          %1003 = vst [vmem:[#allocation2 + $0x48] sm:$0xf] %v939
          %1004 = vst [vmem:[#allocation2 + $0x4c] sm:$0xf] %v940
          %1005 = vst [vmem:[#allocation2 + $0x50] sm:$0xf] %v941
          %1006 = vst [vmem:[#allocation2 + $0x54] sm:$0xf] %v942
          %1007 = vst [vmem:[#allocation2 + $0x58] sm:$0xf] %v943
          %1008 = vst [vmem:[#allocation2 + $0x5c] sm:$0xf] %v944
          %1009 = vst [vmem:[#allocation2 + $0x60] sm:$0xf] %v945
          %1010 = vst [vmem:[#allocation2 + $0x64] sm:$0xf] %v946
          %1011 = vst [vmem:[#allocation2 + $0x68] sm:$0xf] %v947
          %1012 = vst [vmem:[#allocation2 + $0x6c] sm:$0xf] %v948
          %1013 = vst [vmem:[#allocation2 + $0x70] sm:$0xf] %v949
          %1014 = vst [vmem:[#allocation2 + $0x74] sm:$0xf] %v950
          %1015 = vst [vmem:[#allocation2 + $0x78] sm:$0xf] %v951
          %1016 = vst [vmem:[#allocation2 + $0x7c] sm:$0xf] %v952
          %v1017 = vunpack.c.l.bf16 %v857
          %v1018 = vunpack.c.h.bf16 %v857
          %v1019 = vunpack.c.l.bf16 %v858
          %v1020 = vunpack.c.h.bf16 %v858
          %v1021 = vunpack.c.l.bf16 %v859
          %v1022 = vunpack.c.h.bf16 %v859
          %v1023 = vunpack.c.l.bf16 %v860
          %v1024 = vunpack.c.h.bf16 %v860
          %v1025 = vunpack.c.l.bf16 %v861
          %v1026 = vunpack.c.h.bf16 %v861
          %v1027 = vunpack.c.l.bf16 %v862
          %v1028 = vunpack.c.h.bf16 %v862
          %v1029 = vunpack.c.l.bf16 %v863
          %v1030 = vunpack.c.h.bf16 %v863
          %v1031 = vunpack.c.l.bf16 %v864
          %v1032 = vunpack.c.h.bf16 %v864
          %v1033 = vunpack.c.l.bf16 %v865
          %v1034 = vunpack.c.h.bf16 %v865
          %v1035 = vunpack.c.l.bf16 %v866
          %v1036 = vunpack.c.h.bf16 %v866
          %v1037 = vunpack.c.l.bf16 %v867
          %v1038 = vunpack.c.h.bf16 %v867
          %v1039 = vunpack.c.l.bf16 %v868
          %v1040 = vunpack.c.h.bf16 %v868
          %v1041 = vunpack.c.l.bf16 %v869
          %v1042 = vunpack.c.h.bf16 %v869
          %v1043 = vunpack.c.l.bf16 %v870
          %v1044 = vunpack.c.h.bf16 %v870
          %v1045 = vunpack.c.l.bf16 %v871
          %v1046 = vunpack.c.h.bf16 %v871
          %v1047 = vunpack.c.l.bf16 %v872
          %v1048 = vunpack.c.h.bf16 %v872
          %v1049 = vld [vmem:[%s3] sm:$0x1]
          %v1051 = vlaneseq
          %v1052 = vshrl.u32 %v1051, 7
          %v1053 = vsub.s32 0, %v1052
          %v1054 = vrot.slane %v1049, %v1053
          %v1056 = vmul.f32 %v1017, %v1054
          %v1057 = vmul.f32 %v1018, %v1054
          %v1058 = vmul.f32 %v1019, %v1054
          %v1059 = vmul.f32 %v1020, %v1054
          %v1060 = vmul.f32 %v1021, %v1054
          %v1061 = vmul.f32 %v1022, %v1054
          %v1062 = vmul.f32 %v1023, %v1054
          %v1063 = vmul.f32 %v1024, %v1054
          %v1064 = vmul.f32 %v1025, %v1054
          %v1065 = vmul.f32 %v1026, %v1054
          %v1066 = vmul.f32 %v1027, %v1054
          %v1067 = vmul.f32 %v1028, %v1054
          %v1068 = vmul.f32 %v1029, %v1054
          %v1069 = vmul.f32 %v1030, %v1054
          %v1070 = vmul.f32 %v1031, %v1054
          %v1071 = vmul.f32 %v1032, %v1054
          %v1072 = vmul.f32 %v1033, %v1054
          %v1073 = vmul.f32 %v1034, %v1054
          %v1074 = vmul.f32 %v1035, %v1054
          %v1075 = vmul.f32 %v1036, %v1054
          %v1076 = vmul.f32 %v1037, %v1054
          %v1077 = vmul.f32 %v1038, %v1054
          %v1078 = vmul.f32 %v1039, %v1054
          %v1079 = vmul.f32 %v1040, %v1054
          %v1080 = vmul.f32 %v1041, %v1054
          %v1081 = vmul.f32 %v1042, %v1054
          %v1082 = vmul.f32 %v1043, %v1054
          %v1083 = vmul.f32 %v1044, %v1054
          %v1084 = vmul.f32 %v1045, %v1054
          %v1085 = vmul.f32 %v1046, %v1054
          %v1086 = vmul.f32 %v1047, %v1054
          %v1087 = vmul.f32 %v1048, %v1054
          %1088 = vadd.xlane.f32.xlu0 %v1056
          %v1089 = vpop.xlane.xlu0 %1088
          %1090 = vadd.xlane.f32.xlu0 %v1057
          %v1091 = vpop.xlane.xlu0 %1090
          %1092 = vadd.xlane.f32.xlu0 %v1058
          %v1093 = vpop.xlane.xlu0 %1092
          %1094 = vadd.xlane.f32.xlu0 %v1059
          %v1095 = vpop.xlane.xlu0 %1094
          %1096 = vadd.xlane.f32.xlu0 %v1060
          %v1097 = vpop.xlane.xlu0 %1096
          %1098 = vadd.xlane.f32.xlu0 %v1061
          %v1099 = vpop.xlane.xlu0 %1098
          %1100 = vadd.xlane.f32.xlu0 %v1062
          %v1101 = vpop.xlane.xlu0 %1100
          %1102 = vadd.xlane.f32.xlu0 %v1063
          %v1103 = vpop.xlane.xlu0 %1102
          %1104 = vadd.xlane.f32.xlu0 %v1064
          %v1105 = vpop.xlane.xlu0 %1104
          %1106 = vadd.xlane.f32.xlu0 %v1065
          %v1107 = vpop.xlane.xlu0 %1106
          %1108 = vadd.xlane.f32.xlu0 %v1066
          %v1109 = vpop.xlane.xlu0 %1108
          %1110 = vadd.xlane.f32.xlu0 %v1067
          %v1111 = vpop.xlane.xlu0 %1110
          %1112 = vadd.xlane.f32.xlu0 %v1068
          %v1113 = vpop.xlane.xlu0 %1112
          %1114 = vadd.xlane.f32.xlu0 %v1069
          %v1115 = vpop.xlane.xlu0 %1114
          %1116 = vadd.xlane.f32.xlu0 %v1070
          %v1117 = vpop.xlane.xlu0 %1116
          %1118 = vadd.xlane.f32.xlu0 %v1071
          %v1119 = vpop.xlane.xlu0 %1118
          %1120 = vadd.xlane.f32.xlu0 %v1072
          %v1121 = vpop.xlane.xlu0 %1120
          %1122 = vadd.xlane.f32.xlu0 %v1073
          %v1123 = vpop.xlane.xlu0 %1122
          %1124 = vadd.xlane.f32.xlu0 %v1074
          %v1125 = vpop.xlane.xlu0 %1124
          %1126 = vadd.xlane.f32.xlu0 %v1075
          %v1127 = vpop.xlane.xlu0 %1126
          %1128 = vadd.xlane.f32.xlu0 %v1076
          %v1129 = vpop.xlane.xlu0 %1128
          %1130 = vadd.xlane.f32.xlu0 %v1077
          %v1131 = vpop.xlane.xlu0 %1130
          %1132 = vadd.xlane.f32.xlu0 %v1078
          %v1133 = vpop.xlane.xlu0 %1132
          %1134 = vadd.xlane.f32.xlu0 %v1079
          %v1135 = vpop.xlane.xlu0 %1134
          %1136 = vadd.xlane.f32.xlu0 %v1080
          %v1137 = vpop.xlane.xlu0 %1136
          %1138 = vadd.xlane.f32.xlu0 %v1081
          %v1139 = vpop.xlane.xlu0 %1138
          %1140 = vadd.xlane.f32.xlu0 %v1082
          %v1141 = vpop.xlane.xlu0 %1140
          %1142 = vadd.xlane.f32.xlu0 %v1083
          %v1143 = vpop.xlane.xlu0 %1142
          %1144 = vadd.xlane.f32.xlu0 %v1084
          %v1145 = vpop.xlane.xlu0 %1144
          %1146 = vadd.xlane.f32.xlu0 %v1085
          %v1147 = vpop.xlane.xlu0 %1146
          %1148 = vadd.xlane.f32.xlu0 %v1086
          %v1149 = vpop.xlane.xlu0 %1148
          %1150 = vadd.xlane.f32.xlu0 %v1087
          %v1151 = vpop.xlane.xlu0 %1150
          %1152 = vxpose.xlu0.b32.start [1/16] %v1089, 128
          %1153 = vxpose.xlu0.b32.cont [2/16] %v1091, 128
          %1154 = vxpose.xlu0.b32.cont [3/16] %v1093, 128
          %1155 = vxpose.xlu0.b32.cont [4/16] %v1095, 128
          %1156 = vxpose.xlu0.b32.cont [5/16] %v1097, 128
          %1157 = vxpose.xlu0.b32.cont [6/16] %v1099, 128
          %1158 = vxpose.xlu0.b32.cont [7/16] %v1101, 128
          %1159 = vxpose.xlu0.b32.cont [8/16] %v1103, 128
          %1160 = vxpose.xlu0.b32.cont [9/16] %v1105, 128
          %1161 = vxpose.xlu0.b32.cont [10/16] %v1107, 128
          %1162 = vxpose.xlu0.b32.cont [11/16] %v1109, 128
          %1163 = vxpose.xlu0.b32.cont [12/16] %v1111, 128
          %1164 = vxpose.xlu0.b32.cont [13/16] %v1113, 128
          %1165 = vxpose.xlu0.b32.cont [14/16] %v1115, 128
          %1166 = vxpose.xlu0.b32.cont [15/16] %v1117, 128
          %1167 = vxpose.xlu0.b32.end [16/16] %v1119, 128
          %v1168 = vpop.trf.xlu0
          %v1169 = vpop.trf.xlu0
          %v1170 = vpop.trf.xlu0
          %v1171 = vpop.trf.xlu0
          %v1172 = vpop.trf.xlu0
          %v1173 = vpop.trf.xlu0
          %v1174 = vpop.trf.xlu0
          %v1175 = vpop.trf.xlu0
          %v1176 = vpop.trf.xlu0
          %v1177 = vpop.trf.xlu0
          %v1178 = vpop.trf.xlu0
          %v1179 = vpop.trf.xlu0
          %v1180 = vpop.trf.xlu0
          %v1181 = vpop.trf.xlu0
          %v1182 = vpop.trf.xlu0
          %v1183 = vpop.trf.xlu0
          %1184 = vxpose.xlu0.b32.start [1/16] %v1121, 128
          %1185 = vxpose.xlu0.b32.cont [2/16] %v1123, 128
          %1186 = vxpose.xlu0.b32.cont [3/16] %v1125, 128
          %1187 = vxpose.xlu0.b32.cont [4/16] %v1127, 128
          %1188 = vxpose.xlu0.b32.cont [5/16] %v1129, 128
          %1189 = vxpose.xlu0.b32.cont [6/16] %v1131, 128
          %1190 = vxpose.xlu0.b32.cont [7/16] %v1133, 128
          %1191 = vxpose.xlu0.b32.cont [8/16] %v1135, 128
          %1192 = vxpose.xlu0.b32.cont [9/16] %v1137, 128
          %1193 = vxpose.xlu0.b32.cont [10/16] %v1139, 128
          %1194 = vxpose.xlu0.b32.cont [11/16] %v1141, 128
          %1195 = vxpose.xlu0.b32.cont [12/16] %v1143, 128
          %1196 = vxpose.xlu0.b32.cont [13/16] %v1145, 128
          %1197 = vxpose.xlu0.b32.cont [14/16] %v1147, 128
          %1198 = vxpose.xlu0.b32.cont [15/16] %v1149, 128
          %1199 = vxpose.xlu0.b32.end [16/16] %v1151, 128
          %v1200 = vpop.trf.xlu0
          %v1201 = vpop.trf.xlu0
          %v1202 = vpop.trf.xlu0
          %v1203 = vpop.trf.xlu0
          %v1204 = vpop.trf.xlu0
          %v1205 = vpop.trf.xlu0
          %v1206 = vpop.trf.xlu0
          %v1207 = vpop.trf.xlu0
          %v1208 = vpop.trf.xlu0
          %v1209 = vpop.trf.xlu0
          %v1210 = vpop.trf.xlu0
          %v1211 = vpop.trf.xlu0
          %v1212 = vpop.trf.xlu0
          %v1213 = vpop.trf.xlu0
          %v1214 = vpop.trf.xlu0
          %v1215 = vpop.trf.xlu0
          %v1218 = vcombine.low %v1168, %v1200
          %v1220 = vunpack.c.l.s4 1966171168
          %v1221 = vunpack.c.0.s8 %v1220
          %v1222 = vlaneseq
          %v1223 = vshrl.u32 %v1222, 7
          %v1224 = vsub.s32 %v1221, %v1223
          %v1225 = vrot.slane %v1218, %v1224
          %v1227 = vunpack.c.l.s4 1966171168
          %v1228 = vunpack.c.0.s8 %v1227
          %v1229 = vlaneseq
          %v1230 = vshrl.u32 %v1229, 7
          %v1231 = vsub.s32 %v1228, %v1230
          %v1232 = vrot.slane %v1225, %v1231
          %v1234 = vlaneseq
          %vm1235 = vcmp.ge.s32.totalorder %v1234, 0
          %vm1236 = vcmp.lt.s32.totalorder %v1234, 256
          %vm1237 = vmand %vm1235, %vm1236
          %1238 = vst.msk [vmem:[#allocation4] sm:$0x3] %vm1237, %v1232
          %1239 = vst [vmem:[#allocation5] sm:$0xff] 0.0
        $region88: #{tpu_custom_call.1} parent=59 // pred_fallthru
          _
        %p1240 = scmp.gt.s32.totalorder %s31, 0
        %p1241 = pnand %p499, %p1240
        %p1242 = pneg %p1241
        // Predicated region
        $region89: #{tpu_custom_call.1} parent=59 // pred_check
          _
        $region90: #{tpu_custom_call.1} parent=59 // pred_check_branch
          %1244 = sbr.rel (%p1241) target = $region92
        $region91: #{tpu_custom_call.1} parent=59 // pred_region
          %v1245 = vld [vmem:[#allocation3] sm:$0xff]
          %v1246 = vld [vmem:[#allocation3 + $0x8] sm:$0xff]
          %v1247 = vld [vmem:[#allocation3 + $0x10] sm:$0xff]
          %v1248 = vld [vmem:[#allocation3 + $0x18] sm:$0xff]
          %v1249 = vld [vmem:[#allocation3 + $0x20] sm:$0xff]
          %v1250 = vld [vmem:[#allocation3 + $0x28] sm:$0xff]
          %v1251 = vld [vmem:[#allocation3 + $0x30] sm:$0xff]
          %v1252 = vld [vmem:[#allocation3 + $0x38] sm:$0xff]
          %v1253 = vld [vmem:[#allocation3 + $0x40] sm:$0xff]
          %v1254 = vld [vmem:[#allocation3 + $0x48] sm:$0xff]
          %v1255 = vld [vmem:[#allocation3 + $0x50] sm:$0xff]
          %v1256 = vld [vmem:[#allocation3 + $0x58] sm:$0xff]
          %v1257 = vld [vmem:[#allocation3 + $0x60] sm:$0xff]
          %v1258 = vld [vmem:[#allocation3 + $0x68] sm:$0xff]
          %v1259 = vld [vmem:[#allocation3 + $0x70] sm:$0xff]
          %v1260 = vld [vmem:[#allocation3 + $0x78] sm:$0xff]
          %v1261 = vld [vmem:[#allocation3 + $0x80] sm:$0xff]
          %v1262 = vld [vmem:[#allocation3 + $0x88] sm:$0xff]
          %v1263 = vld [vmem:[#allocation3 + $0x90] sm:$0xff]
          %v1264 = vld [vmem:[#allocation3 + $0x98] sm:$0xff]
          %v1265 = vld [vmem:[#allocation3 + $0xa0] sm:$0xff]
          %v1266 = vld [vmem:[#allocation3 + $0xa8] sm:$0xff]
          %v1267 = vld [vmem:[#allocation3 + $0xb0] sm:$0xff]
          %v1268 = vld [vmem:[#allocation3 + $0xb8] sm:$0xff]
          %v1269 = vld [vmem:[#allocation3 + $0xc0] sm:$0xff]
          %v1270 = vld [vmem:[#allocation3 + $0xc8] sm:$0xff]
          %v1271 = vld [vmem:[#allocation3 + $0xd0] sm:$0xff]
          %v1272 = vld [vmem:[#allocation3 + $0xd8] sm:$0xff]
          %v1273 = vld [vmem:[#allocation3 + $0xe0] sm:$0xff]
          %v1274 = vld [vmem:[#allocation3 + $0xe8] sm:$0xff]
          %v1275 = vld [vmem:[#allocation3 + $0xf0] sm:$0xff]
          %v1276 = vld [vmem:[#allocation3 + $0xf8] sm:$0xff]
          %1277 = vxpose.xlu0.b32.start [1/16] %v1245, 128
          %1278 = vxpose.xlu0.b32.cont [2/16] %v1246, 128
          %1279 = vxpose.xlu0.b32.cont [3/16] %v1247, 128
          %1280 = vxpose.xlu0.b32.cont [4/16] %v1248, 128
          %1281 = vxpose.xlu0.b32.cont [5/16] %v1249, 128
          %1282 = vxpose.xlu0.b32.cont [6/16] %v1250, 128
          %1283 = vxpose.xlu0.b32.cont [7/16] %v1251, 128
          %1284 = vxpose.xlu0.b32.cont [8/16] %v1252, 128
          %1285 = vxpose.xlu0.b32.cont [9/16] %v1253, 128
          %1286 = vxpose.xlu0.b32.cont [10/16] %v1254, 128
          %1287 = vxpose.xlu0.b32.cont [11/16] %v1255, 128
          %1288 = vxpose.xlu0.b32.cont [12/16] %v1256, 128
          %1289 = vxpose.xlu0.b32.cont [13/16] %v1257, 128
          %1290 = vxpose.xlu0.b32.cont [14/16] %v1258, 128
          %1291 = vxpose.xlu0.b32.cont [15/16] %v1259, 128
          %1292 = vxpose.xlu0.b32.end [16/16] %v1260, 128
          %v1293 = vpop.trf.xlu0
          %v1294 = vpop.trf.xlu0
          %v1295 = vpop.trf.xlu0
          %v1296 = vpop.trf.xlu0
          %v1297 = vpop.trf.xlu0
          %v1298 = vpop.trf.xlu0
          %v1299 = vpop.trf.xlu0
          %v1300 = vpop.trf.xlu0
          %v1301 = vpop.trf.xlu0
          %v1302 = vpop.trf.xlu0
          %v1303 = vpop.trf.xlu0
          %v1304 = vpop.trf.xlu0
          %v1305 = vpop.trf.xlu0
          %v1306 = vpop.trf.xlu0
          %v1307 = vpop.trf.xlu0
          %v1308 = vpop.trf.xlu0
          %1309 = vxpose.xlu0.b32.start [1/16] %v1261, 128
          %1310 = vxpose.xlu0.b32.cont [2/16] %v1262, 128
          %1311 = vxpose.xlu0.b32.cont [3/16] %v1263, 128
          %1312 = vxpose.xlu0.b32.cont [4/16] %v1264, 128
          %1313 = vxpose.xlu0.b32.cont [5/16] %v1265, 128
          %1314 = vxpose.xlu0.b32.cont [6/16] %v1266, 128
          %1315 = vxpose.xlu0.b32.cont [7/16] %v1267, 128
          %1316 = vxpose.xlu0.b32.cont [8/16] %v1268, 128
          %1317 = vxpose.xlu0.b32.cont [9/16] %v1269, 128
          %1318 = vxpose.xlu0.b32.cont [10/16] %v1270, 128
          %1319 = vxpose.xlu0.b32.cont [11/16] %v1271, 128
          %1320 = vxpose.xlu0.b32.cont [12/16] %v1272, 128
          %1321 = vxpose.xlu0.b32.cont [13/16] %v1273, 128
          %1322 = vxpose.xlu0.b32.cont [14/16] %v1274, 128
          %1323 = vxpose.xlu0.b32.cont [15/16] %v1275, 128
          %1324 = vxpose.xlu0.b32.end [16/16] %v1276, 128
          %v1325 = vpop.trf.xlu0
          %v1326 = vpop.trf.xlu0
          %v1327 = vpop.trf.xlu0
          %v1328 = vpop.trf.xlu0
          %v1329 = vpop.trf.xlu0
          %v1330 = vpop.trf.xlu0
          %v1331 = vpop.trf.xlu0
          %v1332 = vpop.trf.xlu0
          %v1333 = vpop.trf.xlu0
          %v1334 = vpop.trf.xlu0
          %v1335 = vpop.trf.xlu0
          %v1336 = vpop.trf.xlu0
          %v1337 = vpop.trf.xlu0
          %v1338 = vpop.trf.xlu0
          %v1339 = vpop.trf.xlu0
          %v1340 = vpop.trf.xlu0
          %v1343 = vcombine.low %v1293, %v1325
          %v1345 = vunpack.c.l.s4 1966171168
          %v1346 = vunpack.c.0.s8 %v1345
          %v1347 = vlaneseq
          %v1348 = vshrl.u32 %v1347, 7
          %v1349 = vsub.s32 %v1346, %v1348
          %v1350 = vrot.slane %v1343, %v1349
          %v1352 = vunpack.c.l.s4 1966171168
          %v1353 = vunpack.c.0.s8 %v1352
          %v1354 = vlaneseq
          %v1355 = vshrl.u32 %v1354, 7
          %v1356 = vsub.s32 %v1353, %v1355
          %v1357 = vrot.slane %v1350, %v1356
          %v1359 = vlaneseq
          %vm1360 = vcmp.ge.s32.totalorder %v1359, 0
          %vm1361 = vcmp.lt.s32.totalorder %v1359, 256
          %vm1362 = vmand %vm1360, %vm1361
          %1363 = vst.msk [vmem:[#allocation4] sm:$0x3] %vm1362, %v1357
        $region92: #{tpu_custom_call.1} parent=59 // pred_fallthru
          _
        %s1364 = smul.u32 %s32, 128
        %s1365 = smul.u32 %s484, 32
        %s1366 = smul.addr %s1365, 4
        %s1367 = scalar_lea.vmem [#allocation2], %s1366
        %v1368 = vld [vmem:[%s1367] sm:$0xf]
        %v1369 = vld [vmem:[%s1367 + $0x4] sm:$0xf]
        %v1370 = vld [vmem:[%s1367 + $0x8] sm:$0xf]
        %v1371 = vld [vmem:[%s1367 + $0xc] sm:$0xf]
        %v1372 = vld [vmem:[%s1367 + $0x10] sm:$0xf]
        %v1373 = vld [vmem:[%s1367 + $0x14] sm:$0xf]
        %v1374 = vld [vmem:[%s1367 + $0x18] sm:$0xf]
        %v1375 = vld [vmem:[%s1367 + $0x1c] sm:$0xf]
        %v1376 = vld [vmem:[%s1367 + $0x20] sm:$0xf]
        %v1377 = vld [vmem:[%s1367 + $0x24] sm:$0xf]
        %v1378 = vld [vmem:[%s1367 + $0x28] sm:$0xf]
        %v1379 = vld [vmem:[%s1367 + $0x2c] sm:$0xf]
        %v1380 = vld [vmem:[%s1367 + $0x30] sm:$0xf]
        %v1381 = vld [vmem:[%s1367 + $0x34] sm:$0xf]
        %v1382 = vld [vmem:[%s1367 + $0x38] sm:$0xf]
        %v1383 = vld [vmem:[%s1367 + $0x3c] sm:$0xf]
        %v1384 = vld [vmem:[%s1367 + $0x40] sm:$0xf]
        %v1385 = vld [vmem:[%s1367 + $0x44] sm:$0xf]
        %v1386 = vld [vmem:[%s1367 + $0x48] sm:$0xf]
        %v1387 = vld [vmem:[%s1367 + $0x4c] sm:$0xf]
        %v1388 = vld [vmem:[%s1367 + $0x50] sm:$0xf]
        %v1389 = vld [vmem:[%s1367 + $0x54] sm:$0xf]
        %v1390 = vld [vmem:[%s1367 + $0x58] sm:$0xf]
        %v1391 = vld [vmem:[%s1367 + $0x5c] sm:$0xf]
        %v1392 = vld [vmem:[%s1367 + $0x60] sm:$0xf]
        %v1393 = vld [vmem:[%s1367 + $0x64] sm:$0xf]
        %v1394 = vld [vmem:[%s1367 + $0x68] sm:$0xf]
        %v1395 = vld [vmem:[%s1367 + $0x6c] sm:$0xf]
        %v1396 = vld [vmem:[%s1367 + $0x70] sm:$0xf]
        %v1397 = vld [vmem:[%s1367 + $0x74] sm:$0xf]
        %v1398 = vld [vmem:[%s1367 + $0x78] sm:$0xf]
        %v1399 = vld [vmem:[%s1367 + $0x7c] sm:$0xf]
        %s1400 = sshra.s32 %s1364, 3
        %s1401 = sand.u32 %s1364, 7
        %s1402 = sadd.s32 %s1400, %s1365
        %s1403 = smul.addr %s1402, 4
        %s1404 = scalar_lea.vmem [#allocation2], %s1403
        %v1405 = vld [vmem:[%s1404] sm:$0xf]
        %v1406 = vld [vmem:[%s1404 + $0x4] sm:$0xf]
        %v1407 = vld [vmem:[%s1404 + $0x8] sm:$0xf]
        %v1408 = vld [vmem:[%s1404 + $0xc] sm:$0xf]
        %v1409 = vld [vmem:[%s1404 + $0x10] sm:$0xf]
        %v1410 = vld [vmem:[%s1404 + $0x14] sm:$0xf]
        %v1411 = vld [vmem:[%s1404 + $0x18] sm:$0xf]
        %v1412 = vld [vmem:[%s1404 + $0x1c] sm:$0xf]
        %v1413 = vld [vmem:[%s1404 + $0x20] sm:$0xf]
        %v1414 = vld [vmem:[%s1404 + $0x24] sm:$0xf]
        %v1415 = vld [vmem:[%s1404 + $0x28] sm:$0xf]
        %v1416 = vld [vmem:[%s1404 + $0x2c] sm:$0xf]
        %v1417 = vld [vmem:[%s1404 + $0x30] sm:$0xf]
        %v1418 = vld [vmem:[%s1404 + $0x34] sm:$0xf]
        %v1419 = vld [vmem:[%s1404 + $0x38] sm:$0xf]
        %v1420 = vld [vmem:[%s1404 + $0x3c] sm:$0xf]
        %v1421 = vunpack.c.l.bf16 %v1405
        %v1422 = vunpack.c.l.bf16 %v1406
        %v1423 = vunpack.c.l.bf16 %v1407
        %v1424 = vunpack.c.l.bf16 %v1408
        %v1425 = vunpack.c.l.bf16 %v1409
        %v1426 = vunpack.c.l.bf16 %v1410
        %v1427 = vunpack.c.l.bf16 %v1411
        %v1428 = vunpack.c.l.bf16 %v1412
        %v1429 = vunpack.c.l.bf16 %v1413
        %v1430 = vunpack.c.l.bf16 %v1414
        %v1431 = vunpack.c.l.bf16 %v1415
        %v1432 = vunpack.c.l.bf16 %v1416
        %v1433 = vunpack.c.l.bf16 %v1417
        %v1434 = vunpack.c.l.bf16 %v1418
        %v1435 = vunpack.c.l.bf16 %v1419
        %v1436 = vunpack.c.l.bf16 %v1420
        %s1437 = scalar_lea.vmem [#allocation12], %s31
        %v1438 = vld [vmem:[%s1437] sm:$0x1]
        %v1440 = vlaneseq
        %v1441 = vshrl.u32 %v1440, 7
        %v1442 = vsub.s32 0, %v1441
        %v1443 = vrot.slane %v1438, %v1442
        %v1445 = vmul.f32 %v1421, %v1443
        %v1446 = vmul.f32 %v1422, %v1443
        %v1447 = vmul.f32 %v1423, %v1443
        %v1448 = vmul.f32 %v1424, %v1443
        %v1449 = vmul.f32 %v1425, %v1443
        %v1450 = vmul.f32 %v1426, %v1443
        %v1451 = vmul.f32 %v1427, %v1443
        %v1452 = vmul.f32 %v1428, %v1443
        %v1453 = vmul.f32 %v1429, %v1443
        %v1454 = vmul.f32 %v1430, %v1443
        %v1455 = vmul.f32 %v1431, %v1443
        %v1456 = vmul.f32 %v1432, %v1443
        %v1457 = vmul.f32 %v1433, %v1443
        %v1458 = vmul.f32 %v1434, %v1443
        %v1459 = vmul.f32 %v1435, %v1443
        %v1460 = vmul.f32 %v1436, %v1443
        %1461 = vadd.xlane.f32.xlu0 %v1445
        %v1462 = vpop.xlane.xlu0 %1461
        %1463 = vadd.xlane.f32.xlu0 %v1446
        %v1464 = vpop.xlane.xlu0 %1463
        %1465 = vadd.xlane.f32.xlu0 %v1447
        %v1466 = vpop.xlane.xlu0 %1465
        %1467 = vadd.xlane.f32.xlu0 %v1448
        %v1468 = vpop.xlane.xlu0 %1467
        %1469 = vadd.xlane.f32.xlu0 %v1449
        %v1470 = vpop.xlane.xlu0 %1469
        %1471 = vadd.xlane.f32.xlu0 %v1450
        %v1472 = vpop.xlane.xlu0 %1471
        %1473 = vadd.xlane.f32.xlu0 %v1451
        %v1474 = vpop.xlane.xlu0 %1473
        %1475 = vadd.xlane.f32.xlu0 %v1452
        %v1476 = vpop.xlane.xlu0 %1475
        %1477 = vadd.xlane.f32.xlu0 %v1453
        %v1478 = vpop.xlane.xlu0 %1477
        %1479 = vadd.xlane.f32.xlu0 %v1454
        %v1480 = vpop.xlane.xlu0 %1479
        %1481 = vadd.xlane.f32.xlu0 %v1455
        %v1482 = vpop.xlane.xlu0 %1481
        %1483 = vadd.xlane.f32.xlu0 %v1456
        %v1484 = vpop.xlane.xlu0 %1483
        %1485 = vadd.xlane.f32.xlu0 %v1457
        %v1486 = vpop.xlane.xlu0 %1485
        %1487 = vadd.xlane.f32.xlu0 %v1458
        %v1488 = vpop.xlane.xlu0 %1487
        %1489 = vadd.xlane.f32.xlu0 %v1459
        %v1490 = vpop.xlane.xlu0 %1489
        %1491 = vadd.xlane.f32.xlu0 %v1460
        %v1492 = vpop.xlane.xlu0 %1491
        %v1493 = vld [vmem:[#allocation4] sm:$0x3]
        %v1495 = vlaneseq
        %v1496 = vshrl.u32 %v1495, 7
        %v1497 = vsub.s32 0, %v1496
        %v1498 = vrot.slane %v1493, %v1497
        %v1499 = vlaneseq
        %v1500 = vshrl.u32 %v1499, 7
        %v1501 = vsub.s32 1, %v1500
        %v1502 = vrot.slane %v1493, %v1501
        %v1505 = vadd.f32 %v1462, %v1498
        %v1506 = vadd.f32 %v1462, %v1502
        %v1507 = vadd.f32 %v1464, %v1498
        %v1508 = vadd.f32 %v1464, %v1502
        %v1509 = vadd.f32 %v1466, %v1498
        %v1510 = vadd.f32 %v1466, %v1502
        %v1511 = vadd.f32 %v1468, %v1498
        %v1512 = vadd.f32 %v1468, %v1502
        %v1513 = vadd.f32 %v1470, %v1498
        %v1514 = vadd.f32 %v1470, %v1502
        %v1515 = vadd.f32 %v1472, %v1498
        %v1516 = vadd.f32 %v1472, %v1502
        %v1517 = vadd.f32 %v1474, %v1498
        %v1518 = vadd.f32 %v1474, %v1502
        %v1519 = vadd.f32 %v1476, %v1498
        %v1520 = vadd.f32 %v1476, %v1502
        %v1521 = vadd.f32 %v1478, %v1498
        %v1522 = vadd.f32 %v1478, %v1502
        %v1523 = vadd.f32 %v1480, %v1498
        %v1524 = vadd.f32 %v1480, %v1502
        %v1525 = vadd.f32 %v1482, %v1498
        %v1526 = vadd.f32 %v1482, %v1502
        %v1527 = vadd.f32 %v1484, %v1498
        %v1528 = vadd.f32 %v1484, %v1502
        %v1529 = vadd.f32 %v1486, %v1498
        %v1530 = vadd.f32 %v1486, %v1502
        %v1531 = vadd.f32 %v1488, %v1498
        %v1532 = vadd.f32 %v1488, %v1502
        %v1533 = vadd.f32 %v1490, %v1498
        %v1534 = vadd.f32 %v1490, %v1502
        %v1535 = vadd.f32 %v1492, %v1498
        %v1536 = vadd.f32 %v1492, %v1502
        %vm1537 = vcmp.ge.f32.partialorder %v1505, 0.0
        %vm1538 = vcmp.ge.f32.partialorder %v1506, 0.0
        %vm1539 = vcmp.ge.f32.partialorder %v1507, 0.0
        %vm1540 = vcmp.ge.f32.partialorder %v1508, 0.0
        %vm1541 = vcmp.ge.f32.partialorder %v1509, 0.0
        %vm1542 = vcmp.ge.f32.partialorder %v1510, 0.0
        %vm1543 = vcmp.ge.f32.partialorder %v1511, 0.0
        %vm1544 = vcmp.ge.f32.partialorder %v1512, 0.0
        %vm1545 = vcmp.ge.f32.partialorder %v1513, 0.0
        %vm1546 = vcmp.ge.f32.partialorder %v1514, 0.0
        %vm1547 = vcmp.ge.f32.partialorder %v1515, 0.0
        %vm1548 = vcmp.ge.f32.partialorder %v1516, 0.0
        %vm1549 = vcmp.ge.f32.partialorder %v1517, 0.0
        %vm1550 = vcmp.ge.f32.partialorder %v1518, 0.0
        %vm1551 = vcmp.ge.f32.partialorder %v1519, 0.0
        %vm1552 = vcmp.ge.f32.partialorder %v1520, 0.0
        %vm1553 = vcmp.ge.f32.partialorder %v1521, 0.0
        %vm1554 = vcmp.ge.f32.partialorder %v1522, 0.0
        %vm1555 = vcmp.ge.f32.partialorder %v1523, 0.0
        %vm1556 = vcmp.ge.f32.partialorder %v1524, 0.0
        %vm1557 = vcmp.ge.f32.partialorder %v1525, 0.0
        %vm1558 = vcmp.ge.f32.partialorder %v1526, 0.0
        %vm1559 = vcmp.ge.f32.partialorder %v1527, 0.0
        %vm1560 = vcmp.ge.f32.partialorder %v1528, 0.0
        %vm1561 = vcmp.ge.f32.partialorder %v1529, 0.0
        %vm1562 = vcmp.ge.f32.partialorder %v1530, 0.0
        %vm1563 = vcmp.ge.f32.partialorder %v1531, 0.0
        %vm1564 = vcmp.ge.f32.partialorder %v1532, 0.0
        %vm1565 = vcmp.ge.f32.partialorder %v1533, 0.0
        %vm1566 = vcmp.ge.f32.partialorder %v1534, 0.0
        %vm1567 = vcmp.ge.f32.partialorder %v1535, 0.0
        %vm1568 = vcmp.ge.f32.partialorder %v1536, 0.0
        %v1569 = vmul.f32 %v1505, 0.2
        %v1570 = vmul.f32 %v1506, 0.2
        %v1571 = vmul.f32 %v1507, 0.2
        %v1572 = vmul.f32 %v1508, 0.2
        %v1573 = vmul.f32 %v1509, 0.2
        %v1574 = vmul.f32 %v1510, 0.2
        %v1575 = vmul.f32 %v1511, 0.2
        %v1576 = vmul.f32 %v1512, 0.2
        %v1577 = vmul.f32 %v1513, 0.2
        %v1578 = vmul.f32 %v1514, 0.2
        %v1579 = vmul.f32 %v1515, 0.2
        %v1580 = vmul.f32 %v1516, 0.2
        %v1581 = vmul.f32 %v1517, 0.2
        %v1582 = vmul.f32 %v1518, 0.2
        %v1583 = vmul.f32 %v1519, 0.2
        %v1584 = vmul.f32 %v1520, 0.2
        %v1585 = vmul.f32 %v1521, 0.2
        %v1586 = vmul.f32 %v1522, 0.2
        %v1587 = vmul.f32 %v1523, 0.2
        %v1588 = vmul.f32 %v1524, 0.2
        %v1589 = vmul.f32 %v1525, 0.2
        %v1590 = vmul.f32 %v1526, 0.2
        %v1591 = vmul.f32 %v1527, 0.2
        %v1592 = vmul.f32 %v1528, 0.2
        %v1593 = vmul.f32 %v1529, 0.2
        %v1594 = vmul.f32 %v1530, 0.2
        %v1595 = vmul.f32 %v1531, 0.2
        %v1596 = vmul.f32 %v1532, 0.2
        %v1597 = vmul.f32 %v1533, 0.2
        %v1598 = vmul.f32 %v1534, 0.2
        %v1599 = vmul.f32 %v1535, 0.2
        %v1600 = vmul.f32 %v1536, 0.2
        %v1601 = vsel %vm1537, %v1505, %v1569
        %v1602 = vsel %vm1538, %v1506, %v1570
        %v1603 = vsel %vm1539, %v1507, %v1571
        %v1604 = vsel %vm1540, %v1508, %v1572
        %v1605 = vsel %vm1541, %v1509, %v1573
        %v1606 = vsel %vm1542, %v1510, %v1574
        %v1607 = vsel %vm1543, %v1511, %v1575
        %v1608 = vsel %vm1544, %v1512, %v1576
        %v1609 = vsel %vm1545, %v1513, %v1577
        %v1610 = vsel %vm1546, %v1514, %v1578
        %v1611 = vsel %vm1547, %v1515, %v1579
        %v1612 = vsel %vm1548, %v1516, %v1580
        %v1613 = vsel %vm1549, %v1517, %v1581
        %v1614 = vsel %vm1550, %v1518, %v1582
        %v1615 = vsel %vm1551, %v1519, %v1583
        %v1616 = vsel %vm1552, %v1520, %v1584
        %v1617 = vsel %vm1553, %v1521, %v1585
        %v1618 = vsel %vm1554, %v1522, %v1586
        %v1619 = vsel %vm1555, %v1523, %v1587
        %v1620 = vsel %vm1556, %v1524, %v1588
        %v1621 = vsel %vm1557, %v1525, %v1589
        %v1622 = vsel %vm1558, %v1526, %v1590
        %v1623 = vsel %vm1559, %v1527, %v1591
        %v1624 = vsel %vm1560, %v1528, %v1592
        %v1625 = vsel %vm1561, %v1529, %v1593
        %v1626 = vsel %vm1562, %v1530, %v1594
        %v1627 = vsel %vm1563, %v1531, %v1595
        %v1628 = vsel %vm1564, %v1532, %v1596
        %v1629 = vsel %vm1565, %v1533, %v1597
        %v1630 = vsel %vm1566, %v1534, %v1598
        %v1631 = vsel %vm1567, %v1535, %v1599
        %v1632 = vsel %vm1568, %v1536, %v1600
        %v1633 = vld [vmem:[%s409] sm:$0xff]
        %v1634 = vld [vmem:[%s409 + $0x8] sm:$0xff]
        %v1635 = vld [vmem:[%s409 + $0x10] sm:$0xff]
        %v1636 = vld [vmem:[%s409 + $0x18] sm:$0xff]
        %v1637 = vld [vmem:[%s409 + $0x20] sm:$0xff]
        %v1638 = vld [vmem:[%s409 + $0x28] sm:$0xff]
        %v1639 = vld [vmem:[%s409 + $0x30] sm:$0xff]
        %v1640 = vld [vmem:[%s409 + $0x38] sm:$0xff]
        %v1641 = vld [vmem:[%s409 + $0x40] sm:$0xff]
        %v1642 = vld [vmem:[%s409 + $0x48] sm:$0xff]
        %v1643 = vld [vmem:[%s409 + $0x50] sm:$0xff]
        %v1644 = vld [vmem:[%s409 + $0x58] sm:$0xff]
        %v1645 = vld [vmem:[%s409 + $0x60] sm:$0xff]
        %v1646 = vld [vmem:[%s409 + $0x68] sm:$0xff]
        %v1647 = vld [vmem:[%s409 + $0x70] sm:$0xff]
        %v1648 = vld [vmem:[%s409 + $0x78] sm:$0xff]
        %v1649 = vunpack.c.l.bf16 %v1633
        %v1650 = vunpack.c.h.bf16 %v1633
        %v1651 = vunpack.c.l.bf16 %v1634
        %v1652 = vunpack.c.h.bf16 %v1634
        %v1653 = vunpack.c.l.bf16 %v1635
        %v1654 = vunpack.c.h.bf16 %v1635
        %v1655 = vunpack.c.l.bf16 %v1636
        %v1656 = vunpack.c.h.bf16 %v1636
        %v1657 = vunpack.c.l.bf16 %v1637
        %v1658 = vunpack.c.h.bf16 %v1637
        %v1659 = vunpack.c.l.bf16 %v1638
        %v1660 = vunpack.c.h.bf16 %v1638
        %v1661 = vunpack.c.l.bf16 %v1639
        %v1662 = vunpack.c.h.bf16 %v1639
        %v1663 = vunpack.c.l.bf16 %v1640
        %v1664 = vunpack.c.h.bf16 %v1640
        %v1665 = vunpack.c.l.bf16 %v1641
        %v1666 = vunpack.c.h.bf16 %v1641
        %v1667 = vunpack.c.l.bf16 %v1642
        %v1668 = vunpack.c.h.bf16 %v1642
        %v1669 = vunpack.c.l.bf16 %v1643
        %v1670 = vunpack.c.h.bf16 %v1643
        %v1671 = vunpack.c.l.bf16 %v1644
        %v1672 = vunpack.c.h.bf16 %v1644
        %v1673 = vunpack.c.l.bf16 %v1645
        %v1674 = vunpack.c.h.bf16 %v1645
        %v1675 = vunpack.c.l.bf16 %v1646
        %v1676 = vunpack.c.h.bf16 %v1646
        %v1677 = vunpack.c.l.bf16 %v1647
        %v1678 = vunpack.c.h.bf16 %v1647
        %v1679 = vunpack.c.l.bf16 %v1648
        %v1680 = vunpack.c.h.bf16 %v1648
        %v1681 = vadd.f32 %v1601, %v1649
        %v1682 = vadd.f32 %v1602, %v1650
        %v1683 = vadd.f32 %v1603, %v1651
        %v1684 = vadd.f32 %v1604, %v1652
        %v1685 = vadd.f32 %v1605, %v1653
        %v1686 = vadd.f32 %v1606, %v1654
        %v1687 = vadd.f32 %v1607, %v1655
        %v1688 = vadd.f32 %v1608, %v1656
        %v1689 = vadd.f32 %v1609, %v1657
        %v1690 = vadd.f32 %v1610, %v1658
        %v1691 = vadd.f32 %v1611, %v1659
        %v1692 = vadd.f32 %v1612, %v1660
        %v1693 = vadd.f32 %v1613, %v1661
        %v1694 = vadd.f32 %v1614, %v1662
        %v1695 = vadd.f32 %v1615, %v1663
        %v1696 = vadd.f32 %v1616, %v1664
        %v1697 = vadd.f32 %v1617, %v1665
        %v1698 = vadd.f32 %v1618, %v1666
        %v1699 = vadd.f32 %v1619, %v1667
        %v1700 = vadd.f32 %v1620, %v1668
        %v1701 = vadd.f32 %v1621, %v1669
        %v1702 = vadd.f32 %v1622, %v1670
        %v1703 = vadd.f32 %v1623, %v1671
        %v1704 = vadd.f32 %v1624, %v1672
        %v1705 = vadd.f32 %v1625, %v1673
        %v1706 = vadd.f32 %v1626, %v1674
        %v1707 = vadd.f32 %v1627, %v1675
        %v1708 = vadd.f32 %v1628, %v1676
        %v1709 = vadd.f32 %v1629, %v1677
        %v1710 = vadd.f32 %v1630, %v1678
        %v1711 = vadd.f32 %v1631, %v1679
        %v1712 = vadd.f32 %v1632, %v1680
        %v1713 = vmax.f32 %v1681, %v1682
        %1714 = vmax.xlane.f32.xlu0 %v1713
        %v1715 = vpop.xlane.xlu0 %1714
        %v1716 = vmax.f32 %v1683, %v1684
        %1717 = vmax.xlane.f32.xlu0 %v1716
        %v1718 = vpop.xlane.xlu0 %1717
        %v1719 = vmax.f32 %v1685, %v1686
        %1720 = vmax.xlane.f32.xlu0 %v1719
        %v1721 = vpop.xlane.xlu0 %1720
        %v1722 = vmax.f32 %v1687, %v1688
        %1723 = vmax.xlane.f32.xlu0 %v1722
        %v1724 = vpop.xlane.xlu0 %1723
        %v1725 = vmax.f32 %v1689, %v1690
        %1726 = vmax.xlane.f32.xlu0 %v1725
        %v1727 = vpop.xlane.xlu0 %1726
        %v1728 = vmax.f32 %v1691, %v1692
        %1729 = vmax.xlane.f32.xlu0 %v1728
        %v1730 = vpop.xlane.xlu0 %1729
        %v1731 = vmax.f32 %v1693, %v1694
        %1732 = vmax.xlane.f32.xlu0 %v1731
        %v1733 = vpop.xlane.xlu0 %1732
        %v1734 = vmax.f32 %v1695, %v1696
        %1735 = vmax.xlane.f32.xlu0 %v1734
        %v1736 = vpop.xlane.xlu0 %1735
        %v1737 = vmax.f32 %v1697, %v1698
        %1738 = vmax.xlane.f32.xlu0 %v1737
        %v1739 = vpop.xlane.xlu0 %1738
        %v1740 = vmax.f32 %v1699, %v1700
        %1741 = vmax.xlane.f32.xlu0 %v1740
        %v1742 = vpop.xlane.xlu0 %1741
        %v1743 = vmax.f32 %v1701, %v1702
        %1744 = vmax.xlane.f32.xlu0 %v1743
        %v1745 = vpop.xlane.xlu0 %1744
        %v1746 = vmax.f32 %v1703, %v1704
        %1747 = vmax.xlane.f32.xlu0 %v1746
        %v1748 = vpop.xlane.xlu0 %1747
        %v1749 = vmax.f32 %v1705, %v1706
        %1750 = vmax.xlane.f32.xlu0 %v1749
        %v1751 = vpop.xlane.xlu0 %1750
        %v1752 = vmax.f32 %v1707, %v1708
        %1753 = vmax.xlane.f32.xlu0 %v1752
        %v1754 = vpop.xlane.xlu0 %1753
        %v1755 = vmax.f32 %v1709, %v1710
        %1756 = vmax.xlane.f32.xlu0 %v1755
        %v1757 = vpop.xlane.xlu0 %1756
        %v1758 = vmax.f32 %v1711, %v1712
        %1759 = vmax.xlane.f32.xlu0 %v1758
        %v1760 = vpop.xlane.xlu0 %1759
        %v1761 = vsub.f32 %v1681, %v1715
        %v1762 = vsub.f32 %v1682, %v1715
        %v1763 = vsub.f32 %v1683, %v1718
        %v1764 = vsub.f32 %v1684, %v1718
        %v1765 = vsub.f32 %v1685, %v1721
        %v1766 = vsub.f32 %v1686, %v1721
        %v1767 = vsub.f32 %v1687, %v1724
        %v1768 = vsub.f32 %v1688, %v1724
        %v1769 = vsub.f32 %v1689, %v1727
        %v1770 = vsub.f32 %v1690, %v1727
        %v1771 = vsub.f32 %v1691, %v1730
        %v1772 = vsub.f32 %v1692, %v1730
        %v1773 = vsub.f32 %v1693, %v1733
        %v1774 = vsub.f32 %v1694, %v1733
        %v1775 = vsub.f32 %v1695, %v1736
        %v1776 = vsub.f32 %v1696, %v1736
        %v1777 = vsub.f32 %v1697, %v1739
        %v1778 = vsub.f32 %v1698, %v1739
        %v1779 = vsub.f32 %v1699, %v1742
        %v1780 = vsub.f32 %v1700, %v1742
        %v1781 = vsub.f32 %v1701, %v1745
        %v1782 = vsub.f32 %v1702, %v1745
        %v1783 = vsub.f32 %v1703, %v1748
        %v1784 = vsub.f32 %v1704, %v1748
        %v1785 = vsub.f32 %v1705, %v1751
        %v1786 = vsub.f32 %v1706, %v1751
        %v1787 = vsub.f32 %v1707, %v1754
        %v1788 = vsub.f32 %v1708, %v1754
        %v1789 = vsub.f32 %v1709, %v1757
        %v1790 = vsub.f32 %v1710, %v1757
        %v1791 = vsub.f32 %v1711, %v1760
        %v1792 = vsub.f32 %v1712, %v1760
        %v1793 = vmul.f32 %v1761, 1.442695
        %v1794 = vpow.pop %v1793
        %v1795 = vmul.f32 %v1762, 1.442695
        %v1796 = vpow.pop %v1795
        %v1797 = vmul.f32 %v1763, 1.442695
        %v1798 = vpow.pop %v1797
        %v1799 = vmul.f32 %v1764, 1.442695
        %v1800 = vpow.pop %v1799
        %v1801 = vmul.f32 %v1765, 1.442695
        %v1802 = vpow.pop %v1801
        %v1803 = vmul.f32 %v1766, 1.442695
        %v1804 = vpow.pop %v1803
        %v1805 = vmul.f32 %v1767, 1.442695
        %v1806 = vpow.pop %v1805
        %v1807 = vmul.f32 %v1768, 1.442695
        %v1808 = vpow.pop %v1807
        %v1809 = vmul.f32 %v1769, 1.442695
        %v1810 = vpow.pop %v1809
        %v1811 = vmul.f32 %v1770, 1.442695
        %v1812 = vpow.pop %v1811
        %v1813 = vmul.f32 %v1771, 1.442695
        %v1814 = vpow.pop %v1813
        %v1815 = vmul.f32 %v1772, 1.442695
        %v1816 = vpow.pop %v1815
        %v1817 = vmul.f32 %v1773, 1.442695
        %v1818 = vpow.pop %v1817
        %v1819 = vmul.f32 %v1774, 1.442695
        %v1820 = vpow.pop %v1819
        %v1821 = vmul.f32 %v1775, 1.442695
        %v1822 = vpow.pop %v1821
        %v1823 = vmul.f32 %v1776, 1.442695
        %v1824 = vpow.pop %v1823
        %v1825 = vmul.f32 %v1777, 1.442695
        %v1826 = vpow.pop %v1825
        %v1827 = vmul.f32 %v1778, 1.442695
        %v1828 = vpow.pop %v1827
        %v1829 = vmul.f32 %v1779, 1.442695
        %v1830 = vpow.pop %v1829
        %v1831 = vmul.f32 %v1780, 1.442695
        %v1832 = vpow.pop %v1831
        %v1833 = vmul.f32 %v1781, 1.442695
        %v1834 = vpow.pop %v1833
        %v1835 = vmul.f32 %v1782, 1.442695
        %v1836 = vpow.pop %v1835
        %v1837 = vmul.f32 %v1783, 1.442695
        %v1838 = vpow.pop %v1837
        %v1839 = vmul.f32 %v1784, 1.442695
        %v1840 = vpow.pop %v1839
        %v1841 = vmul.f32 %v1785, 1.442695
        %v1842 = vpow.pop %v1841
        %v1843 = vmul.f32 %v1786, 1.442695
        %v1844 = vpow.pop %v1843
        %v1845 = vmul.f32 %v1787, 1.442695
        %v1846 = vpow.pop %v1845
        %v1847 = vmul.f32 %v1788, 1.442695
        %v1848 = vpow.pop %v1847
        %v1849 = vmul.f32 %v1789, 1.442695
        %v1850 = vpow.pop %v1849
        %v1851 = vmul.f32 %v1790, 1.442695
        %v1852 = vpow.pop %v1851
        %v1853 = vmul.f32 %v1791, 1.442695
        %v1854 = vpow.pop %v1853
        %v1855 = vmul.f32 %v1792, 1.442695
        %v1856 = vpow.pop %v1855
        %v1857 = vadd.f32 %v1794, %v1796
        %1858 = vadd.xlane.f32.xlu0 %v1857
        %v1859 = vpop.xlane.xlu0 %1858
        %v1860 = vadd.f32 %v1798, %v1800
        %1861 = vadd.xlane.f32.xlu0 %v1860
        %v1862 = vpop.xlane.xlu0 %1861
        %v1863 = vadd.f32 %v1802, %v1804
        %1864 = vadd.xlane.f32.xlu0 %v1863
        %v1865 = vpop.xlane.xlu0 %1864
        %v1866 = vadd.f32 %v1806, %v1808
        %1867 = vadd.xlane.f32.xlu0 %v1866
        %v1868 = vpop.xlane.xlu0 %1867
        %v1869 = vadd.f32 %v1810, %v1812
        %1870 = vadd.xlane.f32.xlu0 %v1869
        %v1871 = vpop.xlane.xlu0 %1870
        %v1872 = vadd.f32 %v1814, %v1816
        %1873 = vadd.xlane.f32.xlu0 %v1872
        %v1874 = vpop.xlane.xlu0 %1873
        %v1875 = vadd.f32 %v1818, %v1820
        %1876 = vadd.xlane.f32.xlu0 %v1875
        %v1877 = vpop.xlane.xlu0 %1876
        %v1878 = vadd.f32 %v1822, %v1824
        %1879 = vadd.xlane.f32.xlu0 %v1878
        %v1880 = vpop.xlane.xlu0 %1879
        %v1881 = vadd.f32 %v1826, %v1828
        %1882 = vadd.xlane.f32.xlu0 %v1881
        %v1883 = vpop.xlane.xlu0 %1882
        %v1884 = vadd.f32 %v1830, %v1832
        %1885 = vadd.xlane.f32.xlu0 %v1884
        %v1886 = vpop.xlane.xlu0 %1885
        %v1887 = vadd.f32 %v1834, %v1836
        %1888 = vadd.xlane.f32.xlu0 %v1887
        %v1889 = vpop.xlane.xlu0 %1888
        %v1890 = vadd.f32 %v1838, %v1840
        %1891 = vadd.xlane.f32.xlu0 %v1890
        %v1892 = vpop.xlane.xlu0 %1891
        %v1893 = vadd.f32 %v1842, %v1844
        %1894 = vadd.xlane.f32.xlu0 %v1893
        %v1895 = vpop.xlane.xlu0 %1894
        %v1896 = vadd.f32 %v1846, %v1848
        %1897 = vadd.xlane.f32.xlu0 %v1896
        %v1898 = vpop.xlane.xlu0 %1897
        %v1899 = vadd.f32 %v1850, %v1852
        %1900 = vadd.xlane.f32.xlu0 %v1899
        %v1901 = vpop.xlane.xlu0 %1900
        %v1902 = vadd.f32 %v1854, %v1856
        %1903 = vadd.xlane.f32.xlu0 %v1902
        %v1904 = vpop.xlane.xlu0 %1903
        %v1905 = vrcp.pop %v1859
        %v1906 = vrcp.pop %v1862
        %v1907 = vrcp.pop %v1865
        %v1908 = vrcp.pop %v1868
        %v1909 = vrcp.pop %v1871
        %v1910 = vrcp.pop %v1874
        %v1911 = vrcp.pop %v1877
        %v1912 = vrcp.pop %v1880
        %v1913 = vrcp.pop %v1883
        %v1914 = vrcp.pop %v1886
        %v1915 = vrcp.pop %v1889
        %v1916 = vrcp.pop %v1892
        %v1917 = vrcp.pop %v1895
        %v1918 = vrcp.pop %v1898
        %v1919 = vrcp.pop %v1901
        %v1920 = vrcp.pop %v1904
        %v1921 = vmul.f32 %v1794, %v1905
        %v1922 = vmul.f32 %v1796, %v1905
        %v1923 = vmul.f32 %v1798, %v1906
        %v1924 = vmul.f32 %v1800, %v1906
        %v1925 = vmul.f32 %v1802, %v1907
        %v1926 = vmul.f32 %v1804, %v1907
        %v1927 = vmul.f32 %v1806, %v1908
        %v1928 = vmul.f32 %v1808, %v1908
        %v1929 = vmul.f32 %v1810, %v1909
        %v1930 = vmul.f32 %v1812, %v1909
        %v1931 = vmul.f32 %v1814, %v1910
        %v1932 = vmul.f32 %v1816, %v1910
        %v1933 = vmul.f32 %v1818, %v1911
        %v1934 = vmul.f32 %v1820, %v1911
        %v1935 = vmul.f32 %v1822, %v1912
        %v1936 = vmul.f32 %v1824, %v1912
        %v1937 = vmul.f32 %v1826, %v1913
        %v1938 = vmul.f32 %v1828, %v1913
        %v1939 = vmul.f32 %v1830, %v1914
        %v1940 = vmul.f32 %v1832, %v1914
        %v1941 = vmul.f32 %v1834, %v1915
        %v1942 = vmul.f32 %v1836, %v1915
        %v1943 = vmul.f32 %v1838, %v1916
        %v1944 = vmul.f32 %v1840, %v1916
        %v1945 = vmul.f32 %v1842, %v1917
        %v1946 = vmul.f32 %v1844, %v1917
        %v1947 = vmul.f32 %v1846, %v1918
        %v1948 = vmul.f32 %v1848, %v1918
        %v1949 = vmul.f32 %v1850, %v1919
        %v1950 = vmul.f32 %v1852, %v1919
        %v1951 = vmul.f32 %v1854, %v1920
        %v1952 = vmul.f32 %v1856, %v1920
        %v1953 = vpack.c.bf16 %v1923, %v1921
        %v1954 = vpack.c.bf16 %v1924, %v1922
        %v1955 = vpack.c.bf16 %v1927, %v1925
        %v1956 = vpack.c.bf16 %v1928, %v1926
        %v1957 = vpack.c.bf16 %v1931, %v1929
        %v1958 = vpack.c.bf16 %v1932, %v1930
        %v1959 = vpack.c.bf16 %v1935, %v1933
        %v1960 = vpack.c.bf16 %v1936, %v1934
        %v1961 = vpack.c.bf16 %v1939, %v1937
        %v1962 = vpack.c.bf16 %v1940, %v1938
        %v1963 = vpack.c.bf16 %v1943, %v1941
        %v1964 = vpack.c.bf16 %v1944, %v1942
        %v1965 = vpack.c.bf16 %v1947, %v1945
        %v1966 = vpack.c.bf16 %v1948, %v1946
        %v1967 = vpack.c.bf16 %v1951, %v1949
        %v1968 = vpack.c.bf16 %v1952, %v1950
        %s1969 = scalar_lea.vmem %s5, %s31
        %v1970 = vld [vmem:[%s1969] sm:$0x1]
        %v1972 = vlaneseq
        %v1973 = vshrl.u32 %v1972, 7
        %v1974 = vsub.s32 0, %v1973
        %v1975 = vrot.slane %v1970, %v1974
        %v2009 = vunpack.c.l.b16 %v1368
        %v2010 = vunpack.c.l.b16 %v1369
        %v2011 = vunpack.c.l.b16 %v1370
        %v2012 = vunpack.c.l.b16 %v1371
        %v2013 = vunpack.c.l.b16 %v1372
        %v2014 = vunpack.c.l.b16 %v1373
        %v2015 = vunpack.c.l.b16 %v1374
        %v2016 = vunpack.c.l.b16 %v1375
        %v2017 = vunpack.c.l.b16 %v1376
        %v2018 = vunpack.c.l.b16 %v1377
        %v2019 = vunpack.c.l.b16 %v1378
        %v2020 = vunpack.c.l.b16 %v1379
        %v2021 = vunpack.c.l.b16 %v1380
        %v2022 = vunpack.c.l.b16 %v1381
        %v2023 = vunpack.c.l.b16 %v1382
        %v2024 = vunpack.c.l.b16 %v1383
        %v2025 = vunpack.c.l.b16 %v1384
        %v2026 = vunpack.c.l.b16 %v1385
        %v2027 = vunpack.c.l.b16 %v1386
        %v2028 = vunpack.c.l.b16 %v1387
        %v2029 = vunpack.c.l.b16 %v1388
        %v2030 = vunpack.c.l.b16 %v1389
        %v2031 = vunpack.c.l.b16 %v1390
        %v2032 = vunpack.c.l.b16 %v1391
        %v2033 = vunpack.c.l.b16 %v1392
        %v2034 = vunpack.c.l.b16 %v1393
        %v2035 = vunpack.c.l.b16 %v1394
        %v2036 = vunpack.c.l.b16 %v1395
        %v2037 = vunpack.c.l.b16 %v1396
        %v2038 = vunpack.c.l.b16 %v1397
        %v2039 = vunpack.c.l.b16 %v1398
        %v2040 = vunpack.c.l.b16 %v1399
        %v2041 = vpack.c.b16 %v2010, %v2009
        %v2042 = vpack.c.b16 %v2012, %v2011
        %v2043 = vpack.c.b16 %v2014, %v2013
        %v2044 = vpack.c.b16 %v2016, %v2015
        %v2045 = vpack.c.b16 %v2018, %v2017
        %v2046 = vpack.c.b16 %v2020, %v2019
        %v2047 = vpack.c.b16 %v2022, %v2021
        %v2048 = vpack.c.b16 %v2024, %v2023
        %v2049 = vpack.c.b16 %v2026, %v2025
        %v2050 = vpack.c.b16 %v2028, %v2027
        %v2051 = vpack.c.b16 %v2030, %v2029
        %v2052 = vpack.c.b16 %v2032, %v2031
        %v2053 = vpack.c.b16 %v2034, %v2033
        %v2054 = vpack.c.b16 %v2036, %v2035
        %v2055 = vpack.c.b16 %v2038, %v2037
        %v2056 = vpack.c.b16 %v2040, %v2039
        %2073 = vmatprep.subr.bf16.mxu0 0
        %2074 = vmatpush1.bf16.msra.mxu0 %v2048
        %2075 = vmatprep.subr.bf16.mxu0 0
        %2076 = vmatpush1.bf16.msra.mxu0 %v2047
        %2077 = vmatprep.subr.bf16.mxu0 0
        %2078 = vmatpush1.bf16.msra.mxu0 %v2046
        %2079 = vmatprep.subr.bf16.mxu0 0
        %2080 = vmatpush1.bf16.msra.mxu0 %v2045
        %2081 = vmatprep.subr.bf16.mxu0 0
        %2082 = vmatpush1.bf16.msra.mxu0 %v2044
        %2083 = vmatprep.subr.bf16.mxu0 0
        %2084 = vmatpush1.bf16.msra.mxu0 %v2043
        %2085 = vmatprep.subr.bf16.mxu0 0
        %2086 = vmatpush1.bf16.msra.mxu0 %v2042
        %2087 = vmatprep.subr.bf16.mxu0 0
        %2088 = vmatpush1.bf16.msra.mxu0 %v2041
        %2089 = vmatprep.subr.bf16.mxu0 0
        %2090 = vmatpush2.bf16.msra.mxu0 %v2056
        %2091 = vmatprep.subr.bf16.mxu0 0
        %2092 = vmatpush2.bf16.msra.mxu0 %v2055
        %2093 = vmatprep.subr.bf16.mxu0 0
        %2094 = vmatpush2.bf16.msra.mxu0 %v2054
        %2095 = vmatprep.subr.bf16.mxu0 0
        %2096 = vmatpush2.bf16.msra.mxu0 %v2053
        %2097 = vmatprep.subr.bf16.mxu0 0
        %2098 = vmatpush2.bf16.msra.mxu0 %v2052
        %2099 = vmatprep.subr.bf16.mxu0 0
        %2100 = vmatpush2.bf16.msra.mxu0 %v2051
        %2101 = vmatprep.subr.bf16.mxu0 0
        %2102 = vmatpush2.bf16.msra.mxu0 %v2050
        %2103 = vmatprep.subr.bf16.mxu0 0
        %2104 = vmatpush2.bf16.msra.mxu0 %v2049
        %2105 = vmatprep.mubr.bf16.mxu0 %v1954
        %2106 = vmatmul.mubr.bf16.gmra.mxu0 %v1953
        %v2107 = vpop.f32.mrf.mxu0
        %v2108 = vadd.f32 %v1975, %v2107
        %v2109 = vpop.f32.mrf.mxu0
        %v2110 = vpop.f32.mrf.mxu0
        %v2111 = vadd.f32 %v1975, %v2110
        %v2112 = vpop.f32.mrf.mxu0
        %2113 = vmatprep.mubr.bf16.mxu0 %v1956
        %2114 = vmatmul.mubr.bf16.gmra.mxu0 %v1955
        %v2115 = vpop.f32.mrf.mxu0
        %v2116 = vadd.f32 %v1975, %v2115
        %v2117 = vpop.f32.mrf.mxu0
        %v2118 = vpop.f32.mrf.mxu0
        %v2119 = vadd.f32 %v1975, %v2118
        %v2120 = vpop.f32.mrf.mxu0
        %2121 = vmatprep.mubr.bf16.mxu0 %v1958
        %2122 = vmatmul.mubr.bf16.gmra.mxu0 %v1957
        %v2123 = vpop.f32.mrf.mxu0
        %v2124 = vadd.f32 %v1975, %v2123
        %v2125 = vpop.f32.mrf.mxu0
        %v2126 = vpop.f32.mrf.mxu0
        %v2127 = vadd.f32 %v1975, %v2126
        %v2128 = vpop.f32.mrf.mxu0
        %2129 = vmatprep.mubr.bf16.mxu0 %v1960
        %2130 = vmatmul.mubr.bf16.gmra.mxu0 %v1959
        %v2131 = vpop.f32.mrf.mxu0
        %v2132 = vadd.f32 %v1975, %v2131
        %v2133 = vpop.f32.mrf.mxu0
        %v2134 = vpop.f32.mrf.mxu0
        %v2135 = vadd.f32 %v1975, %v2134
        %v2136 = vpop.f32.mrf.mxu0
        %2137 = vmatprep.mubr.bf16.mxu0 %v1962
        %2138 = vmatmul.mubr.bf16.gmra.mxu0 %v1961
        %v2139 = vpop.f32.mrf.mxu0
        %v2140 = vadd.f32 %v1975, %v2139
        %v2141 = vpop.f32.mrf.mxu0
        %v2142 = vpop.f32.mrf.mxu0
        %v2143 = vadd.f32 %v1975, %v2142
        %v2144 = vpop.f32.mrf.mxu0
        %2145 = vmatprep.mubr.bf16.mxu0 %v1964
        %2146 = vmatmul.mubr.bf16.gmra.mxu0 %v1963
        %v2147 = vpop.f32.mrf.mxu0
        %v2148 = vadd.f32 %v1975, %v2147
        %v2149 = vpop.f32.mrf.mxu0
        %v2150 = vpop.f32.mrf.mxu0
        %v2151 = vadd.f32 %v1975, %v2150
        %v2152 = vpop.f32.mrf.mxu0
        %2153 = vmatprep.mubr.bf16.mxu0 %v1966
        %2154 = vmatmul.mubr.bf16.gmra.mxu0 %v1965
        %v2155 = vpop.f32.mrf.mxu0
        %v2156 = vadd.f32 %v1975, %v2155
        %v2157 = vpop.f32.mrf.mxu0
        %v2158 = vpop.f32.mrf.mxu0
        %v2159 = vadd.f32 %v1975, %v2158
        %v2160 = vpop.f32.mrf.mxu0
        %2161 = vmatprep.mubr.bf16.mxu0 %v1968
        %2162 = vmatmul.mubr.bf16.gmra.mxu0 %v1967
        %v2163 = vpop.f32.mrf.mxu0
        %v2164 = vadd.f32 %v1975, %v2163
        %v2165 = vpop.f32.mrf.mxu0
        %v2166 = vpop.f32.mrf.mxu0
        %v2167 = vadd.f32 %v1975, %v2166
        %v2168 = vpop.f32.mrf.mxu0
        %2169 = vdwg.mxu0
        %vm2170 = vcmp.gt.f32.partialorder %v2108, 0.0
        %vm2171 = vcmp.gt.f32.partialorder %v2111, 0.0
        %vm2172 = vcmp.gt.f32.partialorder %v2116, 0.0
        %vm2173 = vcmp.gt.f32.partialorder %v2119, 0.0
        %vm2174 = vcmp.gt.f32.partialorder %v2124, 0.0
        %vm2175 = vcmp.gt.f32.partialorder %v2127, 0.0
        %vm2176 = vcmp.gt.f32.partialorder %v2132, 0.0
        %vm2177 = vcmp.gt.f32.partialorder %v2135, 0.0
        %vm2178 = vcmp.gt.f32.partialorder %v2140, 0.0
        %vm2179 = vcmp.gt.f32.partialorder %v2143, 0.0
        %vm2180 = vcmp.gt.f32.partialorder %v2148, 0.0
        %vm2181 = vcmp.gt.f32.partialorder %v2151, 0.0
        %vm2182 = vcmp.gt.f32.partialorder %v2156, 0.0
        %vm2183 = vcmp.gt.f32.partialorder %v2159, 0.0
        %vm2184 = vcmp.gt.f32.partialorder %v2164, 0.0
        %vm2185 = vcmp.gt.f32.partialorder %v2167, 0.0
        %v2186 = vmin.f32 %v2108, 0.0
        %v2187 = vmin.f32 %v2111, 0.0
        %v2188 = vmin.f32 %v2116, 0.0
        %v2189 = vmin.f32 %v2119, 0.0
        %v2190 = vmin.f32 %v2124, 0.0
        %v2191 = vmin.f32 %v2127, 0.0
        %v2192 = vmin.f32 %v2132, 0.0
        %v2193 = vmin.f32 %v2135, 0.0
        %v2194 = vmin.f32 %v2140, 0.0
        %v2195 = vmin.f32 %v2143, 0.0
        %v2196 = vmin.f32 %v2148, 0.0
        %v2197 = vmin.f32 %v2151, 0.0
        %v2198 = vmin.f32 %v2156, 0.0
        %v2199 = vmin.f32 %v2159, 0.0
        %v2200 = vmin.f32 %v2164, 0.0
        %v2201 = vmin.f32 %v2167, 0.0
        %v2202 = vmul.f32 %v2186, 1.442695
        %v2203 = vpow.pop %v2202
        %v2204 = vmul.f32 %v2187, 1.442695
        %v2205 = vpow.pop %v2204
        %v2206 = vmul.f32 %v2188, 1.442695
        %v2207 = vpow.pop %v2206
        %v2208 = vmul.f32 %v2189, 1.442695
        %v2209 = vpow.pop %v2208
        %v2210 = vmul.f32 %v2190, 1.442695
        %v2211 = vpow.pop %v2210
        %v2212 = vmul.f32 %v2191, 1.442695
        %v2213 = vpow.pop %v2212
        %v2214 = vmul.f32 %v2192, 1.442695
        %v2215 = vpow.pop %v2214
        %v2216 = vmul.f32 %v2193, 1.442695
        %v2217 = vpow.pop %v2216
        %v2218 = vmul.f32 %v2194, 1.442695
        %v2219 = vpow.pop %v2218
        %v2220 = vmul.f32 %v2195, 1.442695
        %v2221 = vpow.pop %v2220
        %v2222 = vmul.f32 %v2196, 1.442695
        %v2223 = vpow.pop %v2222
        %v2224 = vmul.f32 %v2197, 1.442695
        %v2225 = vpow.pop %v2224
        %v2226 = vmul.f32 %v2198, 1.442695
        %v2227 = vpow.pop %v2226
        %v2228 = vmul.f32 %v2199, 1.442695
        %v2229 = vpow.pop %v2228
        %v2230 = vmul.f32 %v2200, 1.442695
        %v2231 = vpow.pop %v2230
        %v2232 = vmul.f32 %v2201, 1.442695
        %v2233 = vpow.pop %v2232
        %v2234 = vsub.f32 %v2203, 1.0
        %v2235 = vsub.f32 %v2205, 1.0
        %v2236 = vsub.f32 %v2207, 1.0
        %v2237 = vsub.f32 %v2209, 1.0
        %v2238 = vsub.f32 %v2211, 1.0
        %v2239 = vsub.f32 %v2213, 1.0
        %v2240 = vsub.f32 %v2215, 1.0
        %v2241 = vsub.f32 %v2217, 1.0
        %v2242 = vsub.f32 %v2219, 1.0
        %v2243 = vsub.f32 %v2221, 1.0
        %v2244 = vsub.f32 %v2223, 1.0
        %v2245 = vsub.f32 %v2225, 1.0
        %v2246 = vsub.f32 %v2227, 1.0
        %v2247 = vsub.f32 %v2229, 1.0
        %v2248 = vsub.f32 %v2231, 1.0
        %v2249 = vsub.f32 %v2233, 1.0
        %v2250 = vsel %vm2170, %v2108, %v2234
        %v2251 = vsel %vm2171, %v2111, %v2235
        %v2252 = vsel %vm2172, %v2116, %v2236
        %v2253 = vsel %vm2173, %v2119, %v2237
        %v2254 = vsel %vm2174, %v2124, %v2238
        %v2255 = vsel %vm2175, %v2127, %v2239
        %v2256 = vsel %vm2176, %v2132, %v2240
        %v2257 = vsel %vm2177, %v2135, %v2241
        %v2258 = vsel %vm2178, %v2140, %v2242
        %v2259 = vsel %vm2179, %v2143, %v2243
        %v2260 = vsel %vm2180, %v2148, %v2244
        %v2261 = vsel %vm2181, %v2151, %v2245
        %v2262 = vsel %vm2182, %v2156, %v2246
        %v2263 = vsel %vm2183, %v2159, %v2247
        %v2264 = vsel %vm2184, %v2164, %v2248
        %v2265 = vsel %vm2185, %v2167, %v2249
        %p2266 = scmp.lt.s32.totalorder %s31, 1
        // Predicated region
        $region93: #{tpu_custom_call.1} parent=59 // pred_check
          %p2267 = pneg %p2266
        $region94: #{tpu_custom_call.1} parent=59 // pred_check_branch
          %2269 = sbr.rel (%p2267) target = $region96
        $region95: #{tpu_custom_call.1} parent=59 // pred_region
          %v2270 = vpack.c.bf16 %v2251, %v2250
          %v2271 = vpack.c.bf16 %v2253, %v2252
          %v2272 = vpack.c.bf16 %v2255, %v2254
          %v2273 = vpack.c.bf16 %v2257, %v2256
          %v2274 = vpack.c.bf16 %v2259, %v2258
          %v2275 = vpack.c.bf16 %v2261, %v2260
          %v2276 = vpack.c.bf16 %v2263, %v2262
          %v2277 = vpack.c.bf16 %v2265, %v2264
          %s2278 = smul.u32 %s485, 16
          %s2279 = smul.addr %s2278, 4
          %s2280 = scalar_lea.vmem [#allocation11], %s2279
          %v2281 = vld [vmem:[%s2280] sm:$0xf]
          %v2282 = vld [vmem:[%s2280 + $0x4] sm:$0xf]
          %v2283 = vld [vmem:[%s2280 + $0x8] sm:$0xf]
          %v2284 = vld [vmem:[%s2280 + $0xc] sm:$0xf]
          %v2285 = vld [vmem:[%s2280 + $0x10] sm:$0xf]
          %v2286 = vld [vmem:[%s2280 + $0x14] sm:$0xf]
          %v2287 = vld [vmem:[%s2280 + $0x18] sm:$0xf]
          %v2288 = vld [vmem:[%s2280 + $0x1c] sm:$0xf]
          %v2289 = vld [vmem:[%s2280 + $0x20] sm:$0xf]
          %v2290 = vld [vmem:[%s2280 + $0x24] sm:$0xf]
          %v2291 = vld [vmem:[%s2280 + $0x28] sm:$0xf]
          %v2292 = vld [vmem:[%s2280 + $0x2c] sm:$0xf]
          %v2293 = vld [vmem:[%s2280 + $0x30] sm:$0xf]
          %v2294 = vld [vmem:[%s2280 + $0x34] sm:$0xf]
          %v2295 = vld [vmem:[%s2280 + $0x38] sm:$0xf]
          %v2296 = vld [vmem:[%s2280 + $0x3c] sm:$0xf]
          %v2313 = vunpack.c.l.b16 %v2281
          %v2314 = vunpack.c.l.b16 %v2282
          %v2315 = vunpack.c.l.b16 %v2283
          %v2316 = vunpack.c.l.b16 %v2284
          %v2317 = vunpack.c.l.b16 %v2285
          %v2318 = vunpack.c.l.b16 %v2286
          %v2319 = vunpack.c.l.b16 %v2287
          %v2320 = vunpack.c.l.b16 %v2288
          %v2321 = vunpack.c.l.b16 %v2289
          %v2322 = vunpack.c.l.b16 %v2290
          %v2323 = vunpack.c.l.b16 %v2291
          %v2324 = vunpack.c.l.b16 %v2292
          %v2325 = vunpack.c.l.b16 %v2293
          %v2326 = vunpack.c.l.b16 %v2294
          %v2327 = vunpack.c.l.b16 %v2295
          %v2328 = vunpack.c.l.b16 %v2296
          %v2329 = vpack.c.b16 %v2314, %v2313
          %v2330 = vpack.c.b16 %v2316, %v2315
          %v2331 = vpack.c.b16 %v2318, %v2317
          %v2332 = vpack.c.b16 %v2320, %v2319
          %v2333 = vpack.c.b16 %v2322, %v2321
          %v2334 = vpack.c.b16 %v2324, %v2323
          %v2335 = vpack.c.b16 %v2326, %v2325
          %v2336 = vpack.c.b16 %v2328, %v2327
          %2345 = vmatprep.subr.bf16.mxu0 0
          %2346 = vmatpush1.bf16.msra.mxu0 %v2336
          %2347 = vmatprep.subr.bf16.mxu0 0
          %2348 = vmatpush1.bf16.msra.mxu0 %v2335
          %2349 = vmatprep.subr.bf16.mxu0 0
          %2350 = vmatpush1.bf16.msra.mxu0 %v2334
          %2351 = vmatprep.subr.bf16.mxu0 0
          %2352 = vmatpush1.bf16.msra.mxu0 %v2333
          %2353 = vmatprep.subr.bf16.mxu0 0
          %2354 = vmatpush1.bf16.msra.mxu0 %v2332
          %2355 = vmatprep.subr.bf16.mxu0 0
          %2356 = vmatpush1.bf16.msra.mxu0 %v2331
          %2357 = vmatprep.subr.bf16.mxu0 0
          %2358 = vmatpush1.bf16.msra.mxu0 %v2330
          %2359 = vmatprep.subr.bf16.mxu0 0
          %2360 = vmatpush1.bf16.msra.mxu0 %v2329
          %2361 = vmatprep.subr.bf16.mxu0 0
          %2362 = vmatpush2.bf16.msra.mxu0 0
          %2363 = vmatprep.subr.bf16.mxu0 0
          %2364 = vmatpush2.bf16.msra.mxu0 0
          %2365 = vmatprep.subr.bf16.mxu0 0
          %2366 = vmatpush2.bf16.msra.mxu0 0
          %2367 = vmatprep.subr.bf16.mxu0 0
          %2368 = vmatpush2.bf16.msra.mxu0 0
          %2369 = vmatprep.subr.bf16.mxu0 0
          %2370 = vmatpush2.bf16.msra.mxu0 0
          %2371 = vmatprep.subr.bf16.mxu0 0
          %2372 = vmatpush2.bf16.msra.mxu0 0
          %2373 = vmatprep.subr.bf16.mxu0 0
          %2374 = vmatpush2.bf16.msra.mxu0 0
          %2375 = vmatprep.subr.bf16.mxu0 0
          %2376 = vmatpush2.bf16.msra.mxu0 0
          %2377 = vmatprep.mubr.bf16.mxu0 0
          %2378 = vmatmul.mubr.bf16.gmra.mxu0 %v2270
          %v2379 = vpop.f32.mrf.mxu0
          %v2380 = vadd.f32 0.0, %v2379
          %v2381 = vpop.f32.mrf.mxu0
          %v2382 = vpop.f32.mrf.mxu0
          %v2383 = vadd.f32 0.0, %v2382
          %v2384 = vpop.f32.mrf.mxu0
          %2385 = vmatprep.mubr.bf16.mxu0 0
          %2386 = vmatmul.mubr.bf16.gmra.mxu0 %v2271
          %v2387 = vpop.f32.mrf.mxu0
          %v2388 = vadd.f32 0.0, %v2387
          %v2389 = vpop.f32.mrf.mxu0
          %v2390 = vpop.f32.mrf.mxu0
          %v2391 = vadd.f32 0.0, %v2390
          %v2392 = vpop.f32.mrf.mxu0
          %2393 = vmatprep.mubr.bf16.mxu0 0
          %2394 = vmatmul.mubr.bf16.gmra.mxu0 %v2272
          %v2395 = vpop.f32.mrf.mxu0
          %v2396 = vadd.f32 0.0, %v2395
          %v2397 = vpop.f32.mrf.mxu0
          %v2398 = vpop.f32.mrf.mxu0
          %v2399 = vadd.f32 0.0, %v2398
          %v2400 = vpop.f32.mrf.mxu0
          %2401 = vmatprep.mubr.bf16.mxu0 0
          %2402 = vmatmul.mubr.bf16.gmra.mxu0 %v2273
          %v2403 = vpop.f32.mrf.mxu0
          %v2404 = vadd.f32 0.0, %v2403
          %v2405 = vpop.f32.mrf.mxu0
          %v2406 = vpop.f32.mrf.mxu0
          %v2407 = vadd.f32 0.0, %v2406
          %v2408 = vpop.f32.mrf.mxu0
          %2409 = vmatprep.mubr.bf16.mxu0 0
          %2410 = vmatmul.mubr.bf16.gmra.mxu0 %v2274
          %v2411 = vpop.f32.mrf.mxu0
          %v2412 = vadd.f32 0.0, %v2411
          %v2413 = vpop.f32.mrf.mxu0
          %v2414 = vpop.f32.mrf.mxu0
          %v2415 = vadd.f32 0.0, %v2414
          %v2416 = vpop.f32.mrf.mxu0
          %2417 = vmatprep.mubr.bf16.mxu0 0
          %2418 = vmatmul.mubr.bf16.gmra.mxu0 %v2275
          %v2419 = vpop.f32.mrf.mxu0
          %v2420 = vadd.f32 0.0, %v2419
          %v2421 = vpop.f32.mrf.mxu0
          %v2422 = vpop.f32.mrf.mxu0
          %v2423 = vadd.f32 0.0, %v2422
          %v2424 = vpop.f32.mrf.mxu0
          %2425 = vmatprep.mubr.bf16.mxu0 0
          %2426 = vmatmul.mubr.bf16.gmra.mxu0 %v2276
          %v2427 = vpop.f32.mrf.mxu0
          %v2428 = vadd.f32 0.0, %v2427
          %v2429 = vpop.f32.mrf.mxu0
          %v2430 = vpop.f32.mrf.mxu0
          %v2431 = vadd.f32 0.0, %v2430
          %v2432 = vpop.f32.mrf.mxu0
          %2433 = vmatprep.mubr.bf16.mxu0 0
          %2434 = vmatmul.mubr.bf16.gmra.mxu0 %v2277
          %v2435 = vpop.f32.mrf.mxu0
          %v2436 = vadd.f32 0.0, %v2435
          %v2437 = vpop.f32.mrf.mxu0
          %v2438 = vpop.f32.mrf.mxu0
          %v2439 = vadd.f32 0.0, %v2438
          %v2440 = vpop.f32.mrf.mxu0
          %2441 = vdwg.mxu0
          %v2442 = vpack.c.bf16 %v2383, %v2380
          %v2443 = vpack.c.bf16 %v2391, %v2388
          %v2444 = vpack.c.bf16 %v2399, %v2396
          %v2445 = vpack.c.bf16 %v2407, %v2404
          %v2446 = vpack.c.bf16 %v2415, %v2412
          %v2447 = vpack.c.bf16 %v2423, %v2420
          %v2448 = vpack.c.bf16 %v2431, %v2428
          %v2449 = vpack.c.bf16 %v2439, %v2436
          %v2458 = vunpack.c.l.b16 %v2442
          %v2459 = vunpack.c.h.b16 %v2442
          %v2460 = vunpack.c.l.b16 %v2443
          %v2461 = vunpack.c.h.b16 %v2443
          %v2462 = vunpack.c.l.b16 %v2444
          %v2463 = vunpack.c.h.b16 %v2444
          %v2464 = vunpack.c.l.b16 %v2445
          %v2465 = vunpack.c.h.b16 %v2445
          %v2466 = vunpack.c.l.b16 %v2446
          %v2467 = vunpack.c.h.b16 %v2446
          %v2468 = vunpack.c.l.b16 %v2447
          %v2469 = vunpack.c.h.b16 %v2447
          %v2470 = vunpack.c.l.b16 %v2448
          %v2471 = vunpack.c.h.b16 %v2448
          %v2472 = vunpack.c.l.b16 %v2449
          %v2473 = vunpack.c.h.b16 %v2449
          %v2474 = vpack.c.b16 %v2458, %v2458
          %v2475 = vpack.c.b16 %v2459, %v2459
          %v2476 = vpack.c.b16 %v2460, %v2460
          %v2477 = vpack.c.b16 %v2461, %v2461
          %v2478 = vpack.c.b16 %v2462, %v2462
          %v2479 = vpack.c.b16 %v2463, %v2463
          %v2480 = vpack.c.b16 %v2464, %v2464
          %v2481 = vpack.c.b16 %v2465, %v2465
          %v2482 = vpack.c.b16 %v2466, %v2466
          %v2483 = vpack.c.b16 %v2467, %v2467
          %v2484 = vpack.c.b16 %v2468, %v2468
          %v2485 = vpack.c.b16 %v2469, %v2469
          %v2486 = vpack.c.b16 %v2470, %v2470
          %v2487 = vpack.c.b16 %v2471, %v2471
          %v2488 = vpack.c.b16 %v2472, %v2472
          %v2489 = vpack.c.b16 %v2473, %v2473
          %s2506 = smul.u32 %s497, 32
          %s2507 = sadd.s32 %s1400, %s2506
          %s2508 = smul.addr %s2507, 4
          %s2509 = scalar_lea.vmem [#allocation2], %s2508
          %2510 = vst [vmem:[%s2509] sm:$0xf] %v2474
          %2511 = vst [vmem:[%s2509 + $0x4] sm:$0xf] %v2475
          %2512 = vst [vmem:[%s2509 + $0x8] sm:$0xf] %v2476
          %2513 = vst [vmem:[%s2509 + $0xc] sm:$0xf] %v2477
          %2514 = vst [vmem:[%s2509 + $0x10] sm:$0xf] %v2478
          %2515 = vst [vmem:[%s2509 + $0x14] sm:$0xf] %v2479
          %2516 = vst [vmem:[%s2509 + $0x18] sm:$0xf] %v2480
          %2517 = vst [vmem:[%s2509 + $0x1c] sm:$0xf] %v2481
          %2518 = vst [vmem:[%s2509 + $0x20] sm:$0xf] %v2482
          %2519 = vst [vmem:[%s2509 + $0x24] sm:$0xf] %v2483
          %2520 = vst [vmem:[%s2509 + $0x28] sm:$0xf] %v2484
          %2521 = vst [vmem:[%s2509 + $0x2c] sm:$0xf] %v2485
          %2522 = vst [vmem:[%s2509 + $0x30] sm:$0xf] %v2486
          %2523 = vst [vmem:[%s2509 + $0x34] sm:$0xf] %v2487
          %2524 = vst [vmem:[%s2509 + $0x38] sm:$0xf] %v2488
          %2525 = vst [vmem:[%s2509 + $0x3c] sm:$0xf] %v2489
          %v2526 = vunpack.c.l.bf16 %v2442
          %v2527 = vunpack.c.h.bf16 %v2442
          %v2528 = vunpack.c.l.bf16 %v2443
          %v2529 = vunpack.c.h.bf16 %v2443
          %v2530 = vunpack.c.l.bf16 %v2444
          %v2531 = vunpack.c.h.bf16 %v2444
          %v2532 = vunpack.c.l.bf16 %v2445
          %v2533 = vunpack.c.h.bf16 %v2445
          %v2534 = vunpack.c.l.bf16 %v2446
          %v2535 = vunpack.c.h.bf16 %v2446
          %v2536 = vunpack.c.l.bf16 %v2447
          %v2537 = vunpack.c.h.bf16 %v2447
          %v2538 = vunpack.c.l.bf16 %v2448
          %v2539 = vunpack.c.h.bf16 %v2448
          %v2540 = vunpack.c.l.bf16 %v2449
          %v2541 = vunpack.c.h.bf16 %v2449
          %s2542 = scalar_lea.vmem %s3, %s485
          %v2543 = vld [vmem:[%s2542] sm:$0x1]
          %v2545 = vlaneseq
          %v2546 = vshrl.u32 %v2545, 7
          %v2547 = vsub.s32 0, %v2546
          %v2548 = vrot.slane %v2543, %v2547
          %v2550 = vmul.f32 %v2526, %v2548
          %v2551 = vmul.f32 %v2527, %v2548
          %v2552 = vmul.f32 %v2528, %v2548
          %v2553 = vmul.f32 %v2529, %v2548
          %v2554 = vmul.f32 %v2530, %v2548
          %v2555 = vmul.f32 %v2531, %v2548
          %v2556 = vmul.f32 %v2532, %v2548
          %v2557 = vmul.f32 %v2533, %v2548
          %v2558 = vmul.f32 %v2534, %v2548
          %v2559 = vmul.f32 %v2535, %v2548
          %v2560 = vmul.f32 %v2536, %v2548
          %v2561 = vmul.f32 %v2537, %v2548
          %v2562 = vmul.f32 %v2538, %v2548
          %v2563 = vmul.f32 %v2539, %v2548
          %v2564 = vmul.f32 %v2540, %v2548
          %v2565 = vmul.f32 %v2541, %v2548
          %2566 = vadd.xlane.f32.xlu0 %v2550
          %v2567 = vpop.xlane.xlu0 %2566
          %2568 = vadd.xlane.f32.xlu0 %v2551
          %v2569 = vpop.xlane.xlu0 %2568
          %2570 = vadd.xlane.f32.xlu0 %v2552
          %v2571 = vpop.xlane.xlu0 %2570
          %2572 = vadd.xlane.f32.xlu0 %v2553
          %v2573 = vpop.xlane.xlu0 %2572
          %2574 = vadd.xlane.f32.xlu0 %v2554
          %v2575 = vpop.xlane.xlu0 %2574
          %2576 = vadd.xlane.f32.xlu0 %v2555
          %v2577 = vpop.xlane.xlu0 %2576
          %2578 = vadd.xlane.f32.xlu0 %v2556
          %v2579 = vpop.xlane.xlu0 %2578
          %2580 = vadd.xlane.f32.xlu0 %v2557
          %v2581 = vpop.xlane.xlu0 %2580
          %2582 = vadd.xlane.f32.xlu0 %v2558
          %v2583 = vpop.xlane.xlu0 %2582
          %2584 = vadd.xlane.f32.xlu0 %v2559
          %v2585 = vpop.xlane.xlu0 %2584
          %2586 = vadd.xlane.f32.xlu0 %v2560
          %v2587 = vpop.xlane.xlu0 %2586
          %2588 = vadd.xlane.f32.xlu0 %v2561
          %v2589 = vpop.xlane.xlu0 %2588
          %2590 = vadd.xlane.f32.xlu0 %v2562
          %v2591 = vpop.xlane.xlu0 %2590
          %2592 = vadd.xlane.f32.xlu0 %v2563
          %v2593 = vpop.xlane.xlu0 %2592
          %2594 = vadd.xlane.f32.xlu0 %v2564
          %v2595 = vpop.xlane.xlu0 %2594
          %2596 = vadd.xlane.f32.xlu0 %v2565
          %v2597 = vpop.xlane.xlu0 %2596
          %s2598 = scalar_lea.vmem [#allocation3], %s1364
          %vm2599 = vcmask 7168
          %2600 = vst.msk [vmem:[%s2598] sm:$0xff] %vm2599, %v2567
          %2601 = vst.msk [vmem:[%s2598 + $0x8] sm:$0xff] %vm2599, %v2569
          %2602 = vst.msk [vmem:[%s2598 + $0x10] sm:$0xff] %vm2599, %v2571
          %2603 = vst.msk [vmem:[%s2598 + $0x18] sm:$0xff] %vm2599, %v2573
          %2604 = vst.msk [vmem:[%s2598 + $0x20] sm:$0xff] %vm2599, %v2575
          %2605 = vst.msk [vmem:[%s2598 + $0x28] sm:$0xff] %vm2599, %v2577
          %2606 = vst.msk [vmem:[%s2598 + $0x30] sm:$0xff] %vm2599, %v2579
          %2607 = vst.msk [vmem:[%s2598 + $0x38] sm:$0xff] %vm2599, %v2581
          %2608 = vst.msk [vmem:[%s2598 + $0x40] sm:$0xff] %vm2599, %v2583
          %2609 = vst.msk [vmem:[%s2598 + $0x48] sm:$0xff] %vm2599, %v2585
          %2610 = vst.msk [vmem:[%s2598 + $0x50] sm:$0xff] %vm2599, %v2587
          %2611 = vst.msk [vmem:[%s2598 + $0x58] sm:$0xff] %vm2599, %v2589
          %2612 = vst.msk [vmem:[%s2598 + $0x60] sm:$0xff] %vm2599, %v2591
          %2613 = vst.msk [vmem:[%s2598 + $0x68] sm:$0xff] %vm2599, %v2593
          %2614 = vst.msk [vmem:[%s2598 + $0x70] sm:$0xff] %vm2599, %v2595
          %2615 = vst.msk [vmem:[%s2598 + $0x78] sm:$0xff] %vm2599, %v2597
        $region96: #{tpu_custom_call.1} parent=59 // pred_fallthru
          _
        %p2616 = scmp.eq.s32.totalorder %s31, 1
        // Predicated region
        $region97: #{tpu_custom_call.1} parent=59 // pred_check
          %p2617 = pneg %p2616
        $region98: #{tpu_custom_call.1} parent=59 // pred_check_branch
          %2619 = sbr.rel (%p2617) target = $region100
        $region99: #{tpu_custom_call.1} parent=59 // pred_region
          %v2620 = vld [vmem:[#allocation5] sm:$0xff]
          %v2621 = vld [vmem:[%s430] sm:$0xff]
          %2622 = vmatprep.subr.mxu0 0.0
          %2623 = vmatpush1.msra.mxu0 %v2265
          %2624 = vmatprep.subr.mxu0 0.0
          %2625 = vmatpush1.msra.mxu0 %v2264
          %2626 = vmatprep.subr.mxu0 0.0
          %2627 = vmatpush1.msra.mxu0 %v2263
          %2628 = vmatprep.subr.mxu0 0.0
          %2629 = vmatpush1.msra.mxu0 %v2262
          %2630 = vmatprep.subr.mxu0 0.0
          %2631 = vmatpush1.msra.mxu0 %v2261
          %2632 = vmatprep.subr.mxu0 0.0
          %2633 = vmatpush1.msra.mxu0 %v2260
          %2634 = vmatprep.subr.mxu0 0.0
          %2635 = vmatpush1.msra.mxu0 %v2259
          %2636 = vmatprep.subr.mxu0 0.0
          %2637 = vmatpush1.msra.mxu0 %v2258
          %2638 = vmatprep.subr.mxu0 0.0
          %2639 = vmatpush1.msra.mxu0 %v2257
          %2640 = vmatprep.subr.mxu0 0.0
          %2641 = vmatpush1.msra.mxu0 %v2256
          %2642 = vmatprep.subr.mxu0 0.0
          %2643 = vmatpush1.msra.mxu0 %v2255
          %2644 = vmatprep.subr.mxu0 0.0
          %2645 = vmatpush1.msra.mxu0 %v2254
          %2646 = vmatprep.subr.mxu0 0.0
          %2647 = vmatpush1.msra.mxu0 %v2253
          %2648 = vmatprep.subr.mxu0 0.0
          %2649 = vmatpush1.msra.mxu0 %v2252
          %2650 = vmatprep.subr.mxu0 0.0
          %2651 = vmatpush1.msra.mxu0 %v2251
          %2652 = vmatprep.subr.mxu0 0.0
          %2653 = vmatpush1.msra.mxu0 %v2250
          %2654 = vmatprep.subr.mxu0 0.0
          %2655 = vmatpush2.msra.mxu0 0.0
          %2656 = vmatprep.subr.mxu0 0.0
          %2657 = vmatpush2.msra.mxu0 0.0
          %2658 = vmatprep.subr.mxu0 0.0
          %2659 = vmatpush2.msra.mxu0 0.0
          %2660 = vmatprep.subr.mxu0 0.0
          %2661 = vmatpush2.msra.mxu0 0.0
          %2662 = vmatprep.subr.mxu0 0.0
          %2663 = vmatpush2.msra.mxu0 0.0
          %2664 = vmatprep.subr.mxu0 0.0
          %2665 = vmatpush2.msra.mxu0 0.0
          %2666 = vmatprep.subr.mxu0 0.0
          %2667 = vmatpush2.msra.mxu0 0.0
          %2668 = vmatprep.subr.mxu0 0.0
          %2669 = vmatpush2.msra.mxu0 0.0
          %2670 = vmatprep.subr.mxu0 0.0
          %2671 = vmatpush2.msra.mxu0 0.0
          %2672 = vmatprep.subr.mxu0 0.0
          %2673 = vmatpush2.msra.mxu0 0.0
          %2674 = vmatprep.subr.mxu0 0.0
          %2675 = vmatpush2.msra.mxu0 0.0
          %2676 = vmatprep.subr.mxu0 0.0
          %2677 = vmatpush2.msra.mxu0 0.0
          %2678 = vmatprep.subr.mxu0 0.0
          %2679 = vmatpush2.msra.mxu0 0.0
          %2680 = vmatprep.subr.mxu0 0.0
          %2681 = vmatpush2.msra.mxu0 0.0
          %2682 = vmatprep.subr.mxu0 0.0
          %2683 = vmatpush2.msra.mxu0 0.0
          %2684 = vmatprep.subr.mxu0 0.0
          %2685 = vmatpush2.msra.mxu0 0.0
          %2686 = vmatprep.mubr.f32.mxu0 0.0
          %2687 = vmatmul.mubr.f32.gmra.mxu0 %v2621
          %v2688 = vpop.f32.mrf.mxu0
          %v2689 = vadd.f32 0.0, %v2688
          %v2690 = vpop.f32.mrf.mxu0
          %2691 = vdwg.mxu0
          %v2692 = vadd.f32 %v2620, %v2689
          %2693 = vst [vmem:[#allocation5] sm:$0xff] %v2692
        $region100: #{tpu_custom_call.1} parent=59 // pred_fallthru
          _
        %p2694 = scmp.eq.s32.totalorder %s32, 1
        %p2695 = pnand %p2616, %p2694
        %p2696 = pneg %p2695
        // Predicated region
        $region101: #{tpu_custom_call.1} parent=59 // pred_check
          _
        $region102: #{tpu_custom_call.1} parent=59 // pred_check_branch
          %2698 = sbr.rel (%p2695) target = $region104
        $region103: #{tpu_custom_call.1} parent=59 // pred_region
          %v2699 = vld [vmem:[%s7] sm:$0xf]
          %v2700 = vadd.f32 %v2699, 1e-05
          %v2701 = vrsqrt.pop %v2700
          %v2702 = vld [vmem:[#allocation5] sm:$0xff]
          %v2703 = vlaneseq
          %v2704 = vshrl.u32 %v2703, 7
          %v2705 = vsub.s32 2, %v2704
          %v2706 = vrot.slane %v2699, %v2705
          %v2707 = vsub.f32 %v2702, %v2706
          %v2708 = vlaneseq
          %v2709 = vshrl.u32 %v2708, 7
          %v2710 = vsub.s32 3, %v2709
          %v2711 = vrot.slane %v2701, %v2710
          %v2712 = vmul.f32 %v2707, %v2711
          %v2713 = vlaneseq
          %v2714 = vshrl.u32 %v2713, 7
          %v2715 = vsub.s32 0, %v2714
          %v2716 = vrot.slane %v2699, %v2715
          %v2717 = vmul.f32 %v2712, %v2716
          %v2718 = vlaneseq
          %v2719 = vshrl.u32 %v2718, 7
          %v2720 = vsub.s32 1, %v2719
          %v2721 = vrot.slane %v2699, %v2720
          %v2722 = vadd.f32 %v2717, %v2721
          %v2723 = vld [vmem:[#allocation15] sm:$0xff]
          %v2724 = vld [vmem:[#allocation15 + $0x8] sm:$0xff]
          %v2725 = vld [vmem:[#allocation15 + $0x10] sm:$0xff]
          %v2726 = vld [vmem:[#allocation15 + $0x18] sm:$0xff]
          %v2727 = vld [vmem:[#allocation15 + $0x20] sm:$0xff]
          %v2728 = vld [vmem:[#allocation15 + $0x28] sm:$0xff]
          %v2729 = vld [vmem:[#allocation15 + $0x30] sm:$0xff]
          %v2730 = vld [vmem:[#allocation15 + $0x38] sm:$0xff]
          %v2731 = vld [vmem:[#allocation15 + $0x40] sm:$0xff]
          %v2732 = vld [vmem:[#allocation15 + $0x48] sm:$0xff]
          %v2733 = vld [vmem:[#allocation15 + $0x50] sm:$0xff]
          %v2734 = vld [vmem:[#allocation15 + $0x58] sm:$0xff]
          %v2735 = vld [vmem:[#allocation15 + $0x60] sm:$0xff]
          %v2736 = vld [vmem:[#allocation15 + $0x68] sm:$0xff]
          %v2737 = vld [vmem:[#allocation15 + $0x70] sm:$0xff]
          %v2738 = vld [vmem:[#allocation15 + $0x78] sm:$0xff]
          %v2739 = vld [vmem:[%s9] sm:$0x1]
          %v2741 = vlaneseq
          %v2742 = vshrl.u32 %v2741, 7
          %v2743 = vsub.s32 0, %v2742
          %v2744 = vrot.slane %v2739, %v2743
          %2746 = vmatprep.subr.mxu0 0.0
          %2747 = vmatpush1.msra.mxu0 %v2738
          %2748 = vmatprep.subr.mxu0 0.0
          %2749 = vmatpush1.msra.mxu0 %v2737
          %2750 = vmatprep.subr.mxu0 0.0
          %2751 = vmatpush1.msra.mxu0 %v2736
          %2752 = vmatprep.subr.mxu0 0.0
          %2753 = vmatpush1.msra.mxu0 %v2735
          %2754 = vmatprep.subr.mxu0 0.0
          %2755 = vmatpush1.msra.mxu0 %v2734
          %2756 = vmatprep.subr.mxu0 0.0
          %2757 = vmatpush1.msra.mxu0 %v2733
          %2758 = vmatprep.subr.mxu0 0.0
          %2759 = vmatpush1.msra.mxu0 %v2732
          %2760 = vmatprep.subr.mxu0 0.0
          %2761 = vmatpush1.msra.mxu0 %v2731
          %2762 = vmatprep.subr.mxu0 0.0
          %2763 = vmatpush1.msra.mxu0 %v2730
          %2764 = vmatprep.subr.mxu0 0.0
          %2765 = vmatpush1.msra.mxu0 %v2729
          %2766 = vmatprep.subr.mxu0 0.0
          %2767 = vmatpush1.msra.mxu0 %v2728
          %2768 = vmatprep.subr.mxu0 0.0
          %2769 = vmatpush1.msra.mxu0 %v2727
          %2770 = vmatprep.subr.mxu0 0.0
          %2771 = vmatpush1.msra.mxu0 %v2726
          %2772 = vmatprep.subr.mxu0 0.0
          %2773 = vmatpush1.msra.mxu0 %v2725
          %2774 = vmatprep.subr.mxu0 0.0
          %2775 = vmatpush1.msra.mxu0 %v2724
          %2776 = vmatprep.subr.mxu0 0.0
          %2777 = vmatpush1.msra.mxu0 %v2723
          %2778 = vmatprep.subr.mxu0 0.0
          %2779 = vmatpush2.msra.mxu0 0.0
          %2780 = vmatprep.subr.mxu0 0.0
          %2781 = vmatpush2.msra.mxu0 0.0
          %2782 = vmatprep.subr.mxu0 0.0
          %2783 = vmatpush2.msra.mxu0 0.0
          %2784 = vmatprep.subr.mxu0 0.0
          %2785 = vmatpush2.msra.mxu0 0.0
          %2786 = vmatprep.subr.mxu0 0.0
          %2787 = vmatpush2.msra.mxu0 0.0
          %2788 = vmatprep.subr.mxu0 0.0
          %2789 = vmatpush2.msra.mxu0 0.0
          %2790 = vmatprep.subr.mxu0 0.0
          %2791 = vmatpush2.msra.mxu0 0.0
          %2792 = vmatprep.subr.mxu0 0.0
          %2793 = vmatpush2.msra.mxu0 0.0
          %2794 = vmatprep.subr.mxu0 0.0
          %2795 = vmatpush2.msra.mxu0 0.0
          %2796 = vmatprep.subr.mxu0 0.0
          %2797 = vmatpush2.msra.mxu0 0.0
          %2798 = vmatprep.subr.mxu0 0.0
          %2799 = vmatpush2.msra.mxu0 0.0
          %2800 = vmatprep.subr.mxu0 0.0
          %2801 = vmatpush2.msra.mxu0 0.0
          %2802 = vmatprep.subr.mxu0 0.0
          %2803 = vmatpush2.msra.mxu0 0.0
          %2804 = vmatprep.subr.mxu0 0.0
          %2805 = vmatpush2.msra.mxu0 0.0
          %2806 = vmatprep.subr.mxu0 0.0
          %2807 = vmatpush2.msra.mxu0 0.0
          %2808 = vmatprep.subr.mxu0 0.0
          %2809 = vmatpush2.msra.mxu0 0.0
          %2810 = vmatprep.mubr.f32.mxu0 0.0
          %2811 = vmatmul.mubr.f32.gmra.mxu0 %v2722
          %v2812 = vpop.f32.mrf.mxu0
          %v2813 = vadd.f32 %v2744, %v2812
          %v2814 = vpop.f32.mrf.mxu0
          %2815 = vdwg.mxu0
          %2816 = vst [vmem:[#allocation16] sm:$0xff] %v2813
        $region104: #{tpu_custom_call.1} parent=59 // pred_fallthru
          _
        // Predicated region
        $region105: #{tpu_custom_call.1} parent=59 // pred_check
          %p2817 = pneg %p272
        $region106: #{tpu_custom_call.1} parent=59 // pred_check_branch
          %2819 = sbr.rel (%p2817) target = $region108
        $region107: #{tpu_custom_call.1} parent=59 // pred_region
          %s2821 = ssub.s32 128, 128
          %2822 = vsyncadd [#allocation8], %s2821
          %s2824 = sshll.u32 [#allocation16], 4
          %s2825 = int_to_ptr.vmem [resolvable:$true] %s2824
          %2827 = dma.vmem_to_hbm [thread:$0]  %s2825, 128, %s10, [#allocation8]
        $region108: #{tpu_custom_call.1} parent=59 // pred_fallthru
          _
        // Predicated region
        $region109: #{tpu_custom_call.1} parent=59 // pred_check
          %p2828 = pneg %p272
        $region110: #{tpu_custom_call.1} parent=59 // pred_check_branch
          %2830 = sbr.rel (%p2828) target = $region112
        $region111: #{tpu_custom_call.1} parent=59 // pred_region
          %2831 = dma.done [#allocation8], 128
        $region112: #{tpu_custom_call.1} parent=59 // pred_fallthru
          _
      $region60: #{tpu_custom_call.1} parent=5 // pred_fallthru
        _
      %p2832 = scmp.le.s32.totalorder 2, %s22
      // Predicated region
      $region113: #{tpu_custom_call.1} parent=5 // pred_check
        %p2833 = pneg %p2832
      $region114: #{tpu_custom_call.1} parent=5 // pred_check_branch
        %2835 = sbr.rel (%p2833) target = $region116
      $region115: #{tpu_custom_call.1} parent=5 // pred_region
        %s2836 = ssub.s32 %s22, 2
      $region116: #{tpu_custom_call.1} parent=5 // pred_fallthru
        _
    $region6: #{tpu_custom_call.1} parent=1 // loop_footer
      %s26 = sadd.s32 1, %s22
    $region7: #{tpu_custom_call.1} parent=1 // loop_footer_branch
      %21 = sbr.rel target = $region3
    $region8: #{tpu_custom_call.1} parent=1 // loop_exit
      _
    %2837 = vsyncpa [#allocation7], 1
    %s2838 = scalar_lea.sflag [#allocation7], 1
    %2839 = vsyncpa %s2838, 1
    %2840 = vsyncpa [#allocation10], 1
    %2841 = vsyncpa [#allocation13], 1
    %2842 = vsyncpa [#allocation8], 1
    %s2843 = scalar_lea.sflag [#allocation8], 1
    %2844 = vsyncpa %s2843, 1

</llo_original>
